<compile_context>
chip_gen: v7x
topology: tpu7x:2x2x1
jax: 0.10.0
libtpu: 0.0.40
codegen_flags: <defaults>
</compile_context>

<pallas_src>
import functools

import numpy as np
import jax
import jax.numpy as jnp
from jax import lax
from jax.experimental import pallas as pl
from jax.experimental.pallas import tpu as pltpu  # noqa: F401

EPS = 1e-5
MXU_DTYPE = jnp.float32  # switch to jnp.bfloat16 on v6e/v7x at scale


# ------------------------- fused RNN + head kernel ---------------------------
def _fused_kernel(x_ref, h0_ref, wx_ref, wh_ref, bias_ref,
                  g1_ref, be1_ref, w1_ref, b1_ref,
                  g2_ref, be2_ref, w2_ref, b2_ref,
                  out_ref, *, num_layers, seq_len):
    # x_ref    : (T, B, 2H)   layer-0 inputs, zero padded to 2H features
    # h0_ref   : (L, B, 2H)   initial hidden states, [fwd | bwd] per layer
    # wx_ref   : (L, 2H, 2H)  packed input weights  [Wih_f.T | Wih_b.T]
    # wh_ref   : (L, 2H, 2H)  packed hidden weights blockdiag(Whh_f.T, Whh_b.T)
    # bias_ref : (L, 1, 2H)   packed [b_ih_f+b_hh_f | b_ih_b+b_hh_b]
    # out_ref  : (B, out_dim) final sigmoid output

    # Hoist loop-invariant weight / bias loads out of the timestep loop.
    wx = [wx_ref[l].astype(MXU_DTYPE) for l in range(num_layers)]
    wh = [wh_ref[l].astype(MXU_DTYPE) for l in range(num_layers)]
    biases = [bias_ref[l] for l in range(num_layers)]

    def step(t, hs):
        inp = x_ref[t]                                        # (B, 2H)
        new_hs = []
        for l in range(num_layers):
            # Two small dots: the hidden-state dot does not depend on the
            # previous layer's output, shortening the serial chain.
            z = (jnp.dot(inp.astype(MXU_DTYPE), wx[l],
                         preferred_element_type=jnp.float32)
                 + jnp.dot(hs[l].astype(MXU_DTYPE), wh[l],
                           preferred_element_type=jnp.float32)
                 + biases[l])
            h_new = jnp.maximum(z, 0.0)                       # (B, 2H)=[fwd|bwd]
            new_hs.append(h_new)
            inp = h_new                                       # next layer input
        return tuple(new_hs)

    h0 = tuple(h0_ref[l] for l in range(num_layers))
    hs = lax.fori_loop(0, seq_len, step, h0, unroll=True)
    feat = hs[num_layers - 1]                                 # (B, 2H) top layer

    # ---- BN(2H, batch stats) + ReLU
    m = jnp.mean(feat, axis=0, keepdims=True)
    v = jnp.mean((feat - m) ** 2, axis=0, keepdims=True)
    x = (feat - m) * lax.rsqrt(v + EPS) * g1_ref[...] + be1_ref[...]
    x = jnp.maximum(x, 0.0)
    # ---- Linear(2H -> 4H)
    y = jnp.dot(x.astype(MXU_DTYPE), w1_ref[...].astype(MXU_DTYPE),
                preferred_element_type=jnp.float32) + b1_ref[...]
    # ---- BN(4H, batch stats) + ReLU
    m2 = jnp.mean(y, axis=0, keepdims=True)
    v2 = jnp.mean((y - m2) ** 2, axis=0, keepdims=True)
    y = (y - m2) * lax.rsqrt(v2 + EPS) * g2_ref[...] + be2_ref[...]
    y = jnp.maximum(y, 0.0)
    # ---- Linear(4H -> out) + Sigmoid (EUP exp + EUP approx reciprocal)
    z = jnp.dot(y.astype(MXU_DTYPE), w2_ref[...].astype(MXU_DTYPE),
                preferred_element_type=jnp.float32) + b2_ref[...]
    out_ref[...] = pl.reciprocal(1.0 + jnp.exp(-z), approx=True)


# --------------------------------- wrapper ------------------------------------
def _full_spec(a):
    return pl.BlockSpec(a.shape, lambda: (0,) * a.ndim)


def encoder_rnn_pallas(x, h0p, wx, wh, bias_cat,
                       g1, be1, w1, b1, g2, be2, w2, b2):
    """x: (B, T, D_in) batch-first, as in the PyTorch module."""
    num_layers = wx.shape[0]
    batch, seq_len, d_in = x.shape
    two_h = wx.shape[-1]
    out_dim = w2.shape[-1]

    # time-major + zero-pad features to 2H so every layer's GEMM is uniform.
    x_tm = jnp.transpose(x, (1, 0, 2))
    x_tm = jnp.pad(x_tm, ((0, 0), (0, 0), (0, two_h - d_in)))

    kernel = functools.partial(_fused_kernel, num_layers=num_layers,
                               seq_len=seq_len)
    args = (x_tm, h0p, wx, wh, bias_cat, g1, be1, w1, b1, g2, be2, w2, b2)
    return pl.pallas_call(
        kernel,
        out_shape=jax.ShapeDtypeStruct((batch, out_dim), jnp.float32),
        in_specs=[_full_spec(a) for a in args],
        out_specs=pl.BlockSpec((batch, out_dim), lambda: (0, 0)),
    )(*args)


# ------------------------- pure-JAX reference --------------------------------
def _rnn_ref(x_tm, h0, wih, whh, bias, num_layers):
    h = [h0[i] for i in range(2 * num_layers)]
    for t in range(x_tm.shape[0]):
        inp = x_tm[t]
        for l in range(num_layers):
            fi, bi = 2 * l, 2 * l + 1
            nf = jax.nn.relu(inp @ wih[fi] + h[fi] @ whh[fi] + bias[fi])
            nb = jax.nn.relu(inp @ wih[bi] + h[bi] @ whh[bi] + bias[bi])
            h[fi], h[bi] = nf, nb
            inp = jnp.concatenate([nf, nb], axis=-1)
    return jnp.concatenate([h[2 * num_layers - 2], h[2 * num_layers - 1]], -1)


def _head_ref(x, g1, be1, w1, b1, g2, be2, w2, b2):
    m = x.mean(0, keepdims=True)
    v = ((x - m) ** 2).mean(0, keepdims=True)
    x = jax.nn.relu((x - m) / jnp.sqrt(v + EPS) * g1 + be1)
    y = x @ w1 + b1
    m2 = y.mean(0, keepdims=True)
    v2 = ((y - m2) ** 2).mean(0, keepdims=True)
    y = jax.nn.relu((y - m2) / jnp.sqrt(v2 + EPS) * g2 + be2)
    return jax.nn.sigmoid(y @ w2 + b2)


# ----------------------------------- main --------------------------------------
if __name__ == "__main__":
    B, T, D_IN, H, L, D_OUT = 2, 8, 16, 32, 2, 8

    key = jax.random.PRNGKey(0)
    keys = iter(jax.random.split(key, 64))
    s = 1.0 / np.sqrt(H)

    def unif(shape, scale):
        return jax.random.uniform(next(keys), shape, jnp.float32, -scale, scale)

    # ---- RNN parameters (PyTorch nn.RNN layout), both unpacked (reference)
    #      and packed (kernel) forms built from the same draws.
    wih_u, whh_u, bias_u = [], [], []          # unpacked, per (layer*2 + dir)
    wx_list, wh_list, biascat_list = [], [], []  # packed, per layer
    for l in range(L):
        in_l = D_IN if l == 0 else 2 * H
        per_dir = []
        for d in range(2):                     # 0 = fwd, 1 = bwd
            w_ih = unif((H, in_l), s)          # (H, in_l)
            w_hh = unif((H, H), s)
            b_ih = unif((H,), s)
            b_hh = unif((H,), s)
            w_ih_padT = jnp.zeros((2 * H, H), jnp.float32).at[:in_l, :].set(w_ih.T)
            wih_u.append(w_ih_padT)            # (2H, H)
            whh_u.append(w_hh.T)               # (H, H)
            bias_u.append((b_ih + b_hh)[None, :])
            per_dir.append((w_ih_padT, w_hh.T, b_ih + b_hh))
        (wf, hf, bf), (wb, hb, bb) = per_dir
        wx_l = jnp.concatenate([wf, wb], axis=1)               # (2H, 2H)
        wh_l = jnp.zeros((2 * H, 2 * H), jnp.float32)
        wh_l = wh_l.at[:H, :H].set(hf).at[H:, H:].set(hb)      # block-diag
        wx_list.append(wx_l)
        wh_list.append(wh_l)
        biascat_list.append(jnp.concatenate([bf, bb])[None, :])  # (1, 2H)
    wih = jnp.stack(wih_u)                     # (2L, 2H, H)
    whh = jnp.stack(whh_u)                     # (2L, H, H)
    bias = jnp.stack(bias_u)                   # (2L, 1, H)
    wx = jnp.stack(wx_list)                    # (L, 2H, 2H)
    wh = jnp.stack(wh_list)                    # (L, 2H, 2H)
    bias_cat = jnp.stack(biascat_list)         # (L, 1, 2H)

    # ---- head parameters
    g1, be1 = jnp.ones((1, 2 * H), jnp.float32), jnp.zeros((1, 2 * H), jnp.float32)
    w1 = unif((4 * H, 2 * H), 1.0 / np.sqrt(2 * H)).T   # (2H, 4H)
    b1 = unif((4 * H,), 1.0 / np.sqrt(2 * H))[None, :]  # (1, 4H)
    g2, be2 = jnp.ones((1, 4 * H), jnp.float32), jnp.zeros((1, 4 * H), jnp.float32)
    w2 = unif((D_OUT, 4 * H), 1.0 / np.sqrt(4 * H)).T   # (4H, out)
    b2 = unif((D_OUT,), 1.0 / np.sqrt(4 * H))[None, :]  # (1, out)

    # ---- inputs
    x = jax.random.normal(next(keys), (B, T, D_IN), jnp.float32)    # (B, T, D_in)
    # TODO(synk): torch.randn h0 per sample is replaced by a deterministic
    # jax.random.normal draw (same shape/semantics, different RNG stream).
    h0 = jax.random.normal(next(keys), (2 * L, B, H), jnp.float32)  # (2L, B, H)
    h0p = jnp.stack([jnp.concatenate([h0[2 * l], h0[2 * l + 1]], -1)
                     for l in range(L)])                            # (L, B, 2H)

    # ---- run fused Pallas kernel
    final = encoder_rnn_pallas(x, h0p, wx, wh, bias_cat,
                               g1, be1, w1, b1, g2, be2, w2, b2)    # (B, out)
    final = jax.block_until_ready(final)

    # ---- verify against pure-JAX reference (unpacked weights)
    x_tm = jnp.transpose(x, (1, 0, 2))
    x_tm = jnp.pad(x_tm, ((0, 0), (0, 0), (0, 2 * H - D_IN)))
    feat_ref = _rnn_ref(x_tm, h0, wih, whh, bias, L)
    final_ref = _head_ref(feat_ref, g1, be1, w1, b1, g2, be2, w2, b2)
    np.testing.assert_allclose(np.asarray(final), np.asarray(final_ref),
                               rtol=5e-2, atol=5e-2)

    print("KERNEL_OK")
</pallas_src>

<mosaic_0001>
module attributes {stable_mosaic.version = 11 : i64} {
  func.func @_fused_kernel(%arg0: memref<8x2x64xf32, #tpu.memory_space<vmem>>, %arg1: memref<2x2x64xf32, #tpu.memory_space<vmem>>, %arg2: memref<2x64x64xf32, #tpu.memory_space<vmem>>, %arg3: memref<2x64x64xf32, #tpu.memory_space<vmem>>, %arg4: memref<2x1x64xf32, #tpu.memory_space<vmem>>, %arg5: memref<1x64xf32, #tpu.memory_space<vmem>>, %arg6: memref<1x64xf32, #tpu.memory_space<vmem>>, %arg7: memref<64x128xf32, #tpu.memory_space<vmem>>, %arg8: memref<1x128xf32, #tpu.memory_space<vmem>>, %arg9: memref<1x128xf32, #tpu.memory_space<vmem>>, %arg10: memref<1x128xf32, #tpu.memory_space<vmem>>, %arg11: memref<128x8xf32, #tpu.memory_space<vmem>>, %arg12: memref<1x8xf32, #tpu.memory_space<vmem>>, %arg13: memref<2x8xf32, #tpu.memory_space<vmem>>) attributes {dimension_semantics = [], scalar_prefetch = 0 : i64, scratch_operands = 0 : i64, tpu.core_type = #tpu.core_type<tc>} {
    %c0 = arith.constant 0 : index
    %c0_0 = arith.constant 0 : index
    %c0_1 = arith.constant 0 : index
    %0 = vector.load %arg2[%c0, %c0_0, %c0_1] : memref<2x64x64xf32, #tpu.memory_space<vmem>>, vector<1x64x64xf32>
    %1 = vector.shape_cast %0 : vector<1x64x64xf32> to vector<64x64xf32>
    %c1 = arith.constant 1 : index
    %c0_2 = arith.constant 0 : index
    %c0_3 = arith.constant 0 : index
    %2 = vector.load %arg2[%c1, %c0_2, %c0_3] : memref<2x64x64xf32, #tpu.memory_space<vmem>>, vector<1x64x64xf32>
    %3 = vector.shape_cast %2 : vector<1x64x64xf32> to vector<64x64xf32>
    %c0_4 = arith.constant 0 : index
    %c0_5 = arith.constant 0 : index
    %c0_6 = arith.constant 0 : index
    %4 = vector.load %arg3[%c0_4, %c0_5, %c0_6] : memref<2x64x64xf32, #tpu.memory_space<vmem>>, vector<1x64x64xf32>
    %5 = vector.shape_cast %4 : vector<1x64x64xf32> to vector<64x64xf32>
    %c1_7 = arith.constant 1 : index
    %c0_8 = arith.constant 0 : index
    %c0_9 = arith.constant 0 : index
    %6 = vector.load %arg3[%c1_7, %c0_8, %c0_9] : memref<2x64x64xf32, #tpu.memory_space<vmem>>, vector<1x64x64xf32>
    %7 = vector.shape_cast %6 : vector<1x64x64xf32> to vector<64x64xf32>
    %c0_10 = arith.constant 0 : index
    %c0_11 = arith.constant 0 : index
    %c0_12 = arith.constant 0 : index
    %8 = vector.load %arg4[%c0_10, %c0_11, %c0_12] : memref<2x1x64xf32, #tpu.memory_space<vmem>>, vector<1x1x64xf32>
    %9 = vector.shape_cast %8 : vector<1x1x64xf32> to vector<1x64xf32>
    %c1_13 = arith.constant 1 : index
    %c0_14 = arith.constant 0 : index
    %c0_15 = arith.constant 0 : index
    %10 = vector.load %arg4[%c1_13, %c0_14, %c0_15] : memref<2x1x64xf32, #tpu.memory_space<vmem>>, vector<1x1x64xf32>
    %11 = vector.shape_cast %10 : vector<1x1x64xf32> to vector<1x64xf32>
    %c0_16 = arith.constant 0 : index
    %c0_17 = arith.constant 0 : index
    %c0_18 = arith.constant 0 : index
    %12 = vector.load %arg1[%c0_16, %c0_17, %c0_18] : memref<2x2x64xf32, #tpu.memory_space<vmem>>, vector<1x2x64xf32>
    %13 = vector.shape_cast %12 : vector<1x2x64xf32> to vector<2x64xf32>
    %c1_19 = arith.constant 1 : index
    %c0_20 = arith.constant 0 : index
    %c0_21 = arith.constant 0 : index
    %14 = vector.load %arg1[%c1_19, %c0_20, %c0_21] : memref<2x2x64xf32, #tpu.memory_space<vmem>>, vector<1x2x64xf32>
    %15 = vector.shape_cast %14 : vector<1x2x64xf32> to vector<2x64xf32>
    %c0_i32 = arith.constant 0 : i32
    %16 = arith.index_cast %c0_i32 : i32 to index
    %c0_22 = arith.constant 0 : index
    %c0_23 = arith.constant 0 : index
    %17 = vector.load %arg0[%16, %c0_22, %c0_23] : memref<8x2x64xf32, #tpu.memory_space<vmem>>, vector<1x2x64xf32>
    %18 = vector.shape_cast %17 : vector<1x2x64xf32> to vector<2x64xf32>
    %cst = arith.constant dense<0.000000e+00> : vector<2x64xf32>
    %19 = tpu.matmul %18, %1, %cst {dimension_numbers = #tpu.dot_dimension_numbers<[1], [0], [0], [1], [0, 0, 1, 1], [], []>} : vector<2x64xf32>, vector<64x64xf32>, vector<2x64xf32> -> vector<2x64xf32>
    %cst_24 = arith.constant dense<0.000000e+00> : vector<2x64xf32>
    %20 = tpu.matmul %13, %5, %cst_24 {dimension_numbers = #tpu.dot_dimension_numbers<[1], [0], [0], [1], [0, 0, 1, 1], [], []>} : vector<2x64xf32>, vector<64x64xf32>, vector<2x64xf32> -> vector<2x64xf32>
    %21 = arith.addf %19, %20 : vector<2x64xf32>
    %22 = vector.broadcast %9 : vector<1x64xf32> to vector<2x64xf32>
    %23 = arith.addf %21, %22 : vector<2x64xf32>
    %cst_25 = arith.constant 0.000000e+00 : f32
    %24 = vector.broadcast %cst_25 : f32 to vector<2x64xf32>
    %25 = arith.maximumf %23, %24 : vector<2x64xf32>
    %cst_26 = arith.constant dense<0.000000e+00> : vector<2x64xf32>
    %26 = tpu.matmul %25, %3, %cst_26 {dimension_numbers = #tpu.dot_dimension_numbers<[1], [0], [0], [1], [0, 0, 1, 1], [], []>} : vector<2x64xf32>, vector<64x64xf32>, vector<2x64xf32> -> vector<2x64xf32>
    %cst_27 = arith.constant dense<0.000000e+00> : vector<2x64xf32>
    %27 = tpu.matmul %15, %7, %cst_27 {dimension_numbers = #tpu.dot_dimension_numbers<[1], [0], [0], [1], [0, 0, 1, 1], [], []>} : vector<2x64xf32>, vector<64x64xf32>, vector<2x64xf32> -> vector<2x64xf32>
    %28 = arith.addf %26, %27 : vector<2x64xf32>
    %29 = vector.broadcast %11 : vector<1x64xf32> to vector<2x64xf32>
    %30 = arith.addf %28, %29 : vector<2x64xf32>
    %cst_28 = arith.constant 0.000000e+00 : f32
    %31 = vector.broadcast %cst_28 : f32 to vector<2x64xf32>
    %32 = arith.maximumf %30, %31 : vector<2x64xf32>
    %c1_i32 = arith.constant 1 : i32
    %33 = arith.index_cast %c1_i32 : i32 to index
    %c0_29 = arith.constant 0 : index
    %c0_30 = arith.constant 0 : index
    %34 = vector.load %arg0[%33, %c0_29, %c0_30] : memref<8x2x64xf32, #tpu.memory_space<vmem>>, vector<1x2x64xf32>
    %35 = vector.shape_cast %34 : vector<1x2x64xf32> to vector<2x64xf32>
    %cst_31 = arith.constant dense<0.000000e+00> : vector<2x64xf32>
    %36 = tpu.matmul %35, %1, %cst_31 {dimension_numbers = #tpu.dot_dimension_numbers<[1], [0], [0], [1], [0, 0, 1, 1], [], []>} : vector<2x64xf32>, vector<64x64xf32>, vector<2x64xf32> -> vector<2x64xf32>
    %cst_32 = arith.constant dense<0.000000e+00> : vector<2x64xf32>
    %37 = tpu.matmul %25, %5, %cst_32 {dimension_numbers = #tpu.dot_dimension_numbers<[1], [0], [0], [1], [0, 0, 1, 1], [], []>} : vector<2x64xf32>, vector<64x64xf32>, vector<2x64xf32> -> vector<2x64xf32>
    %38 = arith.addf %36, %37 : vector<2x64xf32>
    %39 = vector.broadcast %9 : vector<1x64xf32> to vector<2x64xf32>
    %40 = arith.addf %38, %39 : vector<2x64xf32>
    %cst_33 = arith.constant 0.000000e+00 : f32
    %41 = vector.broadcast %cst_33 : f32 to vector<2x64xf32>
    %42 = arith.maximumf %40, %41 : vector<2x64xf32>
    %cst_34 = arith.constant dense<0.000000e+00> : vector<2x64xf32>
    %43 = tpu.matmul %42, %3, %cst_34 {dimension_numbers = #tpu.dot_dimension_numbers<[1], [0], [0], [1], [0, 0, 1, 1], [], []>} : vector<2x64xf32>, vector<64x64xf32>, vector<2x64xf32> -> vector<2x64xf32>
    %cst_35 = arith.constant dense<0.000000e+00> : vector<2x64xf32>
    %44 = tpu.matmul %32, %7, %cst_35 {dimension_numbers = #tpu.dot_dimension_numbers<[1], [0], [0], [1], [0, 0, 1, 1], [], []>} : vector<2x64xf32>, vector<64x64xf32>, vector<2x64xf32> -> vector<2x64xf32>
    %45 = arith.addf %43, %44 : vector<2x64xf32>
    %46 = vector.broadcast %11 : vector<1x64xf32> to vector<2x64xf32>
    %47 = arith.addf %45, %46 : vector<2x64xf32>
    %cst_36 = arith.constant 0.000000e+00 : f32
    %48 = vector.broadcast %cst_36 : f32 to vector<2x64xf32>
    %49 = arith.maximumf %47, %48 : vector<2x64xf32>
    %c2_i32 = arith.constant 2 : i32
    %50 = arith.index_cast %c2_i32 : i32 to index
    %c0_37 = arith.constant 0 : index
    %c0_38 = arith.constant 0 : index
    %51 = vector.load %arg0[%50, %c0_37, %c0_38] : memref<8x2x64xf32, #tpu.memory_space<vmem>>, vector<1x2x64xf32>
    %52 = vector.shape_cast %51 : vector<1x2x64xf32> to vector<2x64xf32>
    %cst_39 = arith.constant dense<0.000000e+00> : vector<2x64xf32>
    %53 = tpu.matmul %52, %1, %cst_39 {dimension_numbers = #tpu.dot_dimension_numbers<[1], [0], [0], [1], [0, 0, 1, 1], [], []>} : vector<2x64xf32>, vector<64x64xf32>, vector<2x64xf32> -> vector<2x64xf32>
    %cst_40 = arith.constant dense<0.000000e+00> : vector<2x64xf32>
    %54 = tpu.matmul %42, %5, %cst_40 {dimension_numbers = #tpu.dot_dimension_numbers<[1], [0], [0], [1], [0, 0, 1, 1], [], []>} : vector<2x64xf32>, vector<64x64xf32>, vector<2x64xf32> -> vector<2x64xf32>
    %55 = arith.addf %53, %54 : vector<2x64xf32>
    %56 = vector.broadcast %9 : vector<1x64xf32> to vector<2x64xf32>
    %57 = arith.addf %55, %56 : vector<2x64xf32>
    %cst_41 = arith.constant 0.000000e+00 : f32
    %58 = vector.broadcast %cst_41 : f32 to vector<2x64xf32>
    %59 = arith.maximumf %57, %58 : vector<2x64xf32>
    %cst_42 = arith.constant dense<0.000000e+00> : vector<2x64xf32>
    %60 = tpu.matmul %59, %3, %cst_42 {dimension_numbers = #tpu.dot_dimension_numbers<[1], [0], [0], [1], [0, 0, 1, 1], [], []>} : vector<2x64xf32>, vector<64x64xf32>, vector<2x64xf32> -> vector<2x64xf32>
    %cst_43 = arith.constant dense<0.000000e+00> : vector<2x64xf32>
    %61 = tpu.matmul %49, %7, %cst_43 {dimension_numbers = #tpu.dot_dimension_numbers<[1], [0], [0], [1], [0, 0, 1, 1], [], []>} : vector<2x64xf32>, vector<64x64xf32>, vector<2x64xf32> -> vector<2x64xf32>
    %62 = arith.addf %60, %61 : vector<2x64xf32>
    %63 = vector.broadcast %11 : vector<1x64xf32> to vector<2x64xf32>
    %64 = arith.addf %62, %63 : vector<2x64xf32>
    %cst_44 = arith.constant 0.000000e+00 : f32
    %65 = vector.broadcast %cst_44 : f32 to vector<2x64xf32>
    %66 = arith.maximumf %64, %65 : vector<2x64xf32>
    %c3_i32 = arith.constant 3 : i32
    %67 = arith.index_cast %c3_i32 : i32 to index
    %c0_45 = arith.constant 0 : index
    %c0_46 = arith.constant 0 : index
    %68 = vector.load %arg0[%67, %c0_45, %c0_46] : memref<8x2x64xf32, #tpu.memory_space<vmem>>, vector<1x2x64xf32>
    %69 = vector.shape_cast %68 : vector<1x2x64xf32> to vector<2x64xf32>
    %cst_47 = arith.constant dense<0.000000e+00> : vector<2x64xf32>
    %70 = tpu.matmul %69, %1, %cst_47 {dimension_numbers = #tpu.dot_dimension_numbers<[1], [0], [0], [1], [0, 0, 1, 1], [], []>} : vector<2x64xf32>, vector<64x64xf32>, vector<2x64xf32> -> vector<2x64xf32>
    %cst_48 = arith.constant dense<0.000000e+00> : vector<2x64xf32>
    %71 = tpu.matmul %59, %5, %cst_48 {dimension_numbers = #tpu.dot_dimension_numbers<[1], [0], [0], [1], [0, 0, 1, 1], [], []>} : vector<2x64xf32>, vector<64x64xf32>, vector<2x64xf32> -> vector<2x64xf32>
    %72 = arith.addf %70, %71 : vector<2x64xf32>
    %73 = vector.broadcast %9 : vector<1x64xf32> to vector<2x64xf32>
    %74 = arith.addf %72, %73 : vector<2x64xf32>
    %cst_49 = arith.constant 0.000000e+00 : f32
    %75 = vector.broadcast %cst_49 : f32 to vector<2x64xf32>
    %76 = arith.maximumf %74, %75 : vector<2x64xf32>
    %cst_50 = arith.constant dense<0.000000e+00> : vector<2x64xf32>
    %77 = tpu.matmul %76, %3, %cst_50 {dimension_numbers = #tpu.dot_dimension_numbers<[1], [0], [0], [1], [0, 0, 1, 1], [], []>} : vector<2x64xf32>, vector<64x64xf32>, vector<2x64xf32> -> vector<2x64xf32>
    %cst_51 = arith.constant dense<0.000000e+00> : vector<2x64xf32>
    %78 = tpu.matmul %66, %7, %cst_51 {dimension_numbers = #tpu.dot_dimension_numbers<[1], [0], [0], [1], [0, 0, 1, 1], [], []>} : vector<2x64xf32>, vector<64x64xf32>, vector<2x64xf32> -> vector<2x64xf32>
    %79 = arith.addf %77, %78 : vector<2x64xf32>
    %80 = vector.broadcast %11 : vector<1x64xf32> to vector<2x64xf32>
    %81 = arith.addf %79, %80 : vector<2x64xf32>
    %cst_52 = arith.constant 0.000000e+00 : f32
    %82 = vector.broadcast %cst_52 : f32 to vector<2x64xf32>
    %83 = arith.maximumf %81, %82 : vector<2x64xf32>
    %c4_i32 = arith.constant 4 : i32
    %84 = arith.index_cast %c4_i32 : i32 to index
    %c0_53 = arith.constant 0 : index
    %c0_54 = arith.constant 0 : index
    %85 = vector.load %arg0[%84, %c0_53, %c0_54] : memref<8x2x64xf32, #tpu.memory_space<vmem>>, vector<1x2x64xf32>
    %86 = vector.shape_cast %85 : vector<1x2x64xf32> to vector<2x64xf32>
    %cst_55 = arith.constant dense<0.000000e+00> : vector<2x64xf32>
    %87 = tpu.matmul %86, %1, %cst_55 {dimension_numbers = #tpu.dot_dimension_numbers<[1], [0], [0], [1], [0, 0, 1, 1], [], []>} : vector<2x64xf32>, vector<64x64xf32>, vector<2x64xf32> -> vector<2x64xf32>
    %cst_56 = arith.constant dense<0.000000e+00> : vector<2x64xf32>
    %88 = tpu.matmul %76, %5, %cst_56 {dimension_numbers = #tpu.dot_dimension_numbers<[1], [0], [0], [1], [0, 0, 1, 1], [], []>} : vector<2x64xf32>, vector<64x64xf32>, vector<2x64xf32> -> vector<2x64xf32>
    %89 = arith.addf %87, %88 : vector<2x64xf32>
    %90 = vector.broadcast %9 : vector<1x64xf32> to vector<2x64xf32>
    %91 = arith.addf %89, %90 : vector<2x64xf32>
    %cst_57 = arith.constant 0.000000e+00 : f32
    %92 = vector.broadcast %cst_57 : f32 to vector<2x64xf32>
    %93 = arith.maximumf %91, %92 : vector<2x64xf32>
    %cst_58 = arith.constant dense<0.000000e+00> : vector<2x64xf32>
    %94 = tpu.matmul %93, %3, %cst_58 {dimension_numbers = #tpu.dot_dimension_numbers<[1], [0], [0], [1], [0, 0, 1, 1], [], []>} : vector<2x64xf32>, vector<64x64xf32>, vector<2x64xf32> -> vector<2x64xf32>
    %cst_59 = arith.constant dense<0.000000e+00> : vector<2x64xf32>
    %95 = tpu.matmul %83, %7, %cst_59 {dimension_numbers = #tpu.dot_dimension_numbers<[1], [0], [0], [1], [0, 0, 1, 1], [], []>} : vector<2x64xf32>, vector<64x64xf32>, vector<2x64xf32> -> vector<2x64xf32>
    %96 = arith.addf %94, %95 : vector<2x64xf32>
    %97 = vector.broadcast %11 : vector<1x64xf32> to vector<2x64xf32>
    %98 = arith.addf %96, %97 : vector<2x64xf32>
    %cst_60 = arith.constant 0.000000e+00 : f32
    %99 = vector.broadcast %cst_60 : f32 to vector<2x64xf32>
    %100 = arith.maximumf %98, %99 : vector<2x64xf32>
    %c5_i32 = arith.constant 5 : i32
    %101 = arith.index_cast %c5_i32 : i32 to index
    %c0_61 = arith.constant 0 : index
    %c0_62 = arith.constant 0 : index
    %102 = vector.load %arg0[%101, %c0_61, %c0_62] : memref<8x2x64xf32, #tpu.memory_space<vmem>>, vector<1x2x64xf32>
    %103 = vector.shape_cast %102 : vector<1x2x64xf32> to vector<2x64xf32>
    %cst_63 = arith.constant dense<0.000000e+00> : vector<2x64xf32>
    %104 = tpu.matmul %103, %1, %cst_63 {dimension_numbers = #tpu.dot_dimension_numbers<[1], [0], [0], [1], [0, 0, 1, 1], [], []>} : vector<2x64xf32>, vector<64x64xf32>, vector<2x64xf32> -> vector<2x64xf32>
    %cst_64 = arith.constant dense<0.000000e+00> : vector<2x64xf32>
    %105 = tpu.matmul %93, %5, %cst_64 {dimension_numbers = #tpu.dot_dimension_numbers<[1], [0], [0], [1], [0, 0, 1, 1], [], []>} : vector<2x64xf32>, vector<64x64xf32>, vector<2x64xf32> -> vector<2x64xf32>
    %106 = arith.addf %104, %105 : vector<2x64xf32>
    %107 = vector.broadcast %9 : vector<1x64xf32> to vector<2x64xf32>
    %108 = arith.addf %106, %107 : vector<2x64xf32>
    %cst_65 = arith.constant 0.000000e+00 : f32
    %109 = vector.broadcast %cst_65 : f32 to vector<2x64xf32>
    %110 = arith.maximumf %108, %109 : vector<2x64xf32>
    %cst_66 = arith.constant dense<0.000000e+00> : vector<2x64xf32>
    %111 = tpu.matmul %110, %3, %cst_66 {dimension_numbers = #tpu.dot_dimension_numbers<[1], [0], [0], [1], [0, 0, 1, 1], [], []>} : vector<2x64xf32>, vector<64x64xf32>, vector<2x64xf32> -> vector<2x64xf32>
    %cst_67 = arith.constant dense<0.000000e+00> : vector<2x64xf32>
    %112 = tpu.matmul %100, %7, %cst_67 {dimension_numbers = #tpu.dot_dimension_numbers<[1], [0], [0], [1], [0, 0, 1, 1], [], []>} : vector<2x64xf32>, vector<64x64xf32>, vector<2x64xf32> -> vector<2x64xf32>
    %113 = arith.addf %111, %112 : vector<2x64xf32>
    %114 = vector.broadcast %11 : vector<1x64xf32> to vector<2x64xf32>
    %115 = arith.addf %113, %114 : vector<2x64xf32>
    %cst_68 = arith.constant 0.000000e+00 : f32
    %116 = vector.broadcast %cst_68 : f32 to vector<2x64xf32>
    %117 = arith.maximumf %115, %116 : vector<2x64xf32>
    %c6_i32 = arith.constant 6 : i32
    %118 = arith.index_cast %c6_i32 : i32 to index
    %c0_69 = arith.constant 0 : index
    %c0_70 = arith.constant 0 : index
    %119 = vector.load %arg0[%118, %c0_69, %c0_70] : memref<8x2x64xf32, #tpu.memory_space<vmem>>, vector<1x2x64xf32>
    %120 = vector.shape_cast %119 : vector<1x2x64xf32> to vector<2x64xf32>
    %cst_71 = arith.constant dense<0.000000e+00> : vector<2x64xf32>
    %121 = tpu.matmul %120, %1, %cst_71 {dimension_numbers = #tpu.dot_dimension_numbers<[1], [0], [0], [1], [0, 0, 1, 1], [], []>} : vector<2x64xf32>, vector<64x64xf32>, vector<2x64xf32> -> vector<2x64xf32>
    %cst_72 = arith.constant dense<0.000000e+00> : vector<2x64xf32>
    %122 = tpu.matmul %110, %5, %cst_72 {dimension_numbers = #tpu.dot_dimension_numbers<[1], [0], [0], [1], [0, 0, 1, 1], [], []>} : vector<2x64xf32>, vector<64x64xf32>, vector<2x64xf32> -> vector<2x64xf32>
    %123 = arith.addf %121, %122 : vector<2x64xf32>
    %124 = vector.broadcast %9 : vector<1x64xf32> to vector<2x64xf32>
    %125 = arith.addf %123, %124 : vector<2x64xf32>
    %cst_73 = arith.constant 0.000000e+00 : f32
    %126 = vector.broadcast %cst_73 : f32 to vector<2x64xf32>
    %127 = arith.maximumf %125, %126 : vector<2x64xf32>
    %cst_74 = arith.constant dense<0.000000e+00> : vector<2x64xf32>
    %128 = tpu.matmul %127, %3, %cst_74 {dimension_numbers = #tpu.dot_dimension_numbers<[1], [0], [0], [1], [0, 0, 1, 1], [], []>} : vector<2x64xf32>, vector<64x64xf32>, vector<2x64xf32> -> vector<2x64xf32>
    %cst_75 = arith.constant dense<0.000000e+00> : vector<2x64xf32>
    %129 = tpu.matmul %117, %7, %cst_75 {dimension_numbers = #tpu.dot_dimension_numbers<[1], [0], [0], [1], [0, 0, 1, 1], [], []>} : vector<2x64xf32>, vector<64x64xf32>, vector<2x64xf32> -> vector<2x64xf32>
    %130 = arith.addf %128, %129 : vector<2x64xf32>
    %131 = vector.broadcast %11 : vector<1x64xf32> to vector<2x64xf32>
    %132 = arith.addf %130, %131 : vector<2x64xf32>
    %cst_76 = arith.constant 0.000000e+00 : f32
    %133 = vector.broadcast %cst_76 : f32 to vector<2x64xf32>
    %134 = arith.maximumf %132, %133 : vector<2x64xf32>
    %c7_i32 = arith.constant 7 : i32
    %135 = arith.index_cast %c7_i32 : i32 to index
    %c0_77 = arith.constant 0 : index
    %c0_78 = arith.constant 0 : index
    %136 = vector.load %arg0[%135, %c0_77, %c0_78] : memref<8x2x64xf32, #tpu.memory_space<vmem>>, vector<1x2x64xf32>
    %137 = vector.shape_cast %136 : vector<1x2x64xf32> to vector<2x64xf32>
    %cst_79 = arith.constant dense<0.000000e+00> : vector<2x64xf32>
    %138 = tpu.matmul %137, %1, %cst_79 {dimension_numbers = #tpu.dot_dimension_numbers<[1], [0], [0], [1], [0, 0, 1, 1], [], []>} : vector<2x64xf32>, vector<64x64xf32>, vector<2x64xf32> -> vector<2x64xf32>
    %cst_80 = arith.constant dense<0.000000e+00> : vector<2x64xf32>
    %139 = tpu.matmul %127, %5, %cst_80 {dimension_numbers = #tpu.dot_dimension_numbers<[1], [0], [0], [1], [0, 0, 1, 1], [], []>} : vector<2x64xf32>, vector<64x64xf32>, vector<2x64xf32> -> vector<2x64xf32>
    %140 = arith.addf %138, %139 : vector<2x64xf32>
    %141 = vector.broadcast %9 : vector<1x64xf32> to vector<2x64xf32>
    %142 = arith.addf %140, %141 : vector<2x64xf32>
    %cst_81 = arith.constant 0.000000e+00 : f32
    %143 = vector.broadcast %cst_81 : f32 to vector<2x64xf32>
    %144 = arith.maximumf %142, %143 : vector<2x64xf32>
    %cst_82 = arith.constant dense<0.000000e+00> : vector<2x64xf32>
    %145 = tpu.matmul %144, %3, %cst_82 {dimension_numbers = #tpu.dot_dimension_numbers<[1], [0], [0], [1], [0, 0, 1, 1], [], []>} : vector<2x64xf32>, vector<64x64xf32>, vector<2x64xf32> -> vector<2x64xf32>
    %cst_83 = arith.constant dense<0.000000e+00> : vector<2x64xf32>
    %146 = tpu.matmul %134, %7, %cst_83 {dimension_numbers = #tpu.dot_dimension_numbers<[1], [0], [0], [1], [0, 0, 1, 1], [], []>} : vector<2x64xf32>, vector<64x64xf32>, vector<2x64xf32> -> vector<2x64xf32>
    %147 = arith.addf %145, %146 : vector<2x64xf32>
    %148 = vector.broadcast %11 : vector<1x64xf32> to vector<2x64xf32>
    %149 = arith.addf %147, %148 : vector<2x64xf32>
    %cst_84 = arith.constant 0.000000e+00 : f32
    %150 = vector.broadcast %cst_84 : f32 to vector<2x64xf32>
    %151 = arith.maximumf %149, %150 : vector<2x64xf32>
    %c8_i32 = arith.constant 8 : i32
    %cst_85 = arith.constant dense<0.000000e+00> : vector<64xf32>
    %152 = vector.multi_reduction <add>, %151, %cst_85 [0] : vector<2x64xf32> to vector<64xf32>
    %153 = vector.shape_cast %152 : vector<64xf32> to vector<1x64xf32>
    %cst_86 = arith.constant 2.000000e+00 : f32
    %154 = vector.broadcast %cst_86 : f32 to vector<1x64xf32>
    %155 = arith.divf %153, %154 : vector<1x64xf32>
    %156 = vector.broadcast %155 : vector<1x64xf32> to vector<2x64xf32>
    %157 = arith.subf %151, %156 : vector<2x64xf32>
    %158 = arith.mulf %157, %157 : vector<2x64xf32>
    %cst_87 = arith.constant dense<0.000000e+00> : vector<64xf32>
    %159 = vector.multi_reduction <add>, %158, %cst_87 [0] : vector<2x64xf32> to vector<64xf32>
    %160 = vector.shape_cast %159 : vector<64xf32> to vector<1x64xf32>
    %cst_88 = arith.constant 2.000000e+00 : f32
    %161 = vector.broadcast %cst_88 : f32 to vector<1x64xf32>
    %162 = arith.divf %160, %161 : vector<1x64xf32>
    %163 = vector.broadcast %155 : vector<1x64xf32> to vector<2x64xf32>
    %164 = arith.subf %151, %163 : vector<2x64xf32>
    %cst_89 = arith.constant 9.99999974E-6 : f32
    %165 = vector.broadcast %cst_89 : f32 to vector<1x64xf32>
    %166 = arith.addf %162, %165 : vector<1x64xf32>
    %167 = math.rsqrt %166 : vector<1x64xf32>
    %168 = vector.broadcast %167 : vector<1x64xf32> to vector<2x64xf32>
    %169 = arith.mulf %164, %168 : vector<2x64xf32>
    %c0_90 = arith.constant 0 : index
    %c0_91 = arith.constant 0 : index
    %170 = vector.load %arg5[%c0_90, %c0_91] : memref<1x64xf32, #tpu.memory_space<vmem>>, vector<1x64xf32>
    %171 = vector.broadcast %170 : vector<1x64xf32> to vector<2x64xf32>
    %172 = arith.mulf %169, %171 : vector<2x64xf32>
    %c0_92 = arith.constant 0 : index
    %c0_93 = arith.constant 0 : index
    %173 = vector.load %arg6[%c0_92, %c0_93] : memref<1x64xf32, #tpu.memory_space<vmem>>, vector<1x64xf32>
    %174 = vector.broadcast %173 : vector<1x64xf32> to vector<2x64xf32>
    %175 = arith.addf %172, %174 : vector<2x64xf32>
    %cst_94 = arith.constant 0.000000e+00 : f32
    %176 = vector.broadcast %cst_94 : f32 to vector<2x64xf32>
    %177 = arith.maximumf %175, %176 : vector<2x64xf32>
    %c0_95 = arith.constant 0 : index
    %c0_96 = arith.constant 0 : index
    %178 = vector.load %arg7[%c0_95, %c0_96] : memref<64x128xf32, #tpu.memory_space<vmem>>, vector<64x128xf32>
    %cst_97 = arith.constant dense<0.000000e+00> : vector<2x128xf32>
    %179 = tpu.matmul %177, %178, %cst_97 {dimension_numbers = #tpu.dot_dimension_numbers<[1], [0], [0], [1], [0, 0, 1, 1], [], []>} : vector<2x64xf32>, vector<64x128xf32>, vector<2x128xf32> -> vector<2x128xf32>
    %c0_98 = arith.constant 0 : index
    %c0_99 = arith.constant 0 : index
    %180 = vector.load %arg8[%c0_98, %c0_99] : memref<1x128xf32, #tpu.memory_space<vmem>>, vector<1x128xf32>
    %181 = vector.broadcast %180 : vector<1x128xf32> to vector<2x128xf32>
    %182 = arith.addf %179, %181 : vector<2x128xf32>
    %cst_100 = arith.constant dense<0.000000e+00> : vector<128xf32>
    %183 = vector.multi_reduction <add>, %182, %cst_100 [0] : vector<2x128xf32> to vector<128xf32>
    %184 = vector.shape_cast %183 : vector<128xf32> to vector<1x128xf32>
    %cst_101 = arith.constant 2.000000e+00 : f32
    %185 = vector.broadcast %cst_101 : f32 to vector<1x128xf32>
    %186 = arith.divf %184, %185 : vector<1x128xf32>
    %187 = vector.broadcast %186 : vector<1x128xf32> to vector<2x128xf32>
    %188 = arith.subf %182, %187 : vector<2x128xf32>
    %189 = arith.mulf %188, %188 : vector<2x128xf32>
    %cst_102 = arith.constant dense<0.000000e+00> : vector<128xf32>
    %190 = vector.multi_reduction <add>, %189, %cst_102 [0] : vector<2x128xf32> to vector<128xf32>
    %191 = vector.shape_cast %190 : vector<128xf32> to vector<1x128xf32>
    %cst_103 = arith.constant 2.000000e+00 : f32
    %192 = vector.broadcast %cst_103 : f32 to vector<1x128xf32>
    %193 = arith.divf %191, %192 : vector<1x128xf32>
    %194 = vector.broadcast %186 : vector<1x128xf32> to vector<2x128xf32>
    %195 = arith.subf %182, %194 : vector<2x128xf32>
    %cst_104 = arith.constant 9.99999974E-6 : f32
    %196 = vector.broadcast %cst_104 : f32 to vector<1x128xf32>
    %197 = arith.addf %193, %196 : vector<1x128xf32>
    %198 = math.rsqrt %197 : vector<1x128xf32>
    %199 = vector.broadcast %198 : vector<1x128xf32> to vector<2x128xf32>
    %200 = arith.mulf %195, %199 : vector<2x128xf32>
    %c0_105 = arith.constant 0 : index
    %c0_106 = arith.constant 0 : index
    %201 = vector.load %arg9[%c0_105, %c0_106] : memref<1x128xf32, #tpu.memory_space<vmem>>, vector<1x128xf32>
    %202 = vector.broadcast %201 : vector<1x128xf32> to vector<2x128xf32>
    %203 = arith.mulf %200, %202 : vector<2x128xf32>
    %c0_107 = arith.constant 0 : index
    %c0_108 = arith.constant 0 : index
    %204 = vector.load %arg10[%c0_107, %c0_108] : memref<1x128xf32, #tpu.memory_space<vmem>>, vector<1x128xf32>
    %205 = vector.broadcast %204 : vector<1x128xf32> to vector<2x128xf32>
    %206 = arith.addf %203, %205 : vector<2x128xf32>
    %cst_109 = arith.constant 0.000000e+00 : f32
    %207 = vector.broadcast %cst_109 : f32 to vector<2x128xf32>
    %208 = arith.maximumf %206, %207 : vector<2x128xf32>
    %c0_110 = arith.constant 0 : index
    %c0_111 = arith.constant 0 : index
    %209 = vector.load %arg11[%c0_110, %c0_111] : memref<128x8xf32, #tpu.memory_space<vmem>>, vector<128x8xf32>
    %cst_112 = arith.constant dense<0.000000e+00> : vector<2x8xf32>
    %210 = tpu.matmul %208, %209, %cst_112 {dimension_numbers = #tpu.dot_dimension_numbers<[1], [0], [0], [1], [0, 0, 1, 1], [], []>} : vector<2x128xf32>, vector<128x8xf32>, vector<2x8xf32> -> vector<2x8xf32>
    %c0_113 = arith.constant 0 : index
    %c0_114 = arith.constant 0 : index
    %211 = vector.load %arg12[%c0_113, %c0_114] : memref<1x8xf32, #tpu.memory_space<vmem>>, vector<1x8xf32>
    %212 = vector.broadcast %211 : vector<1x8xf32> to vector<2x8xf32>
    %213 = arith.addf %210, %212 : vector<2x8xf32>
    %cst_115 = arith.constant 0.000000e+00 : f32
    %214 = vector.broadcast %cst_115 : f32 to vector<2x8xf32>
    %215 = arith.subf %214, %213 : vector<2x8xf32>
    %216 = math.exp %215 : vector<2x8xf32>
    %cst_116 = arith.constant 1.000000e+00 : f32
    %217 = vector.broadcast %cst_116 : f32 to vector<2x8xf32>
    %218 = arith.addf %217, %216 : vector<2x8xf32>
    %219 = tpu.reciprocal %218 {approx = true} : vector<2x8xf32> -> vector<2x8xf32>
    %c0_117 = arith.constant 0 : index
    %c0_118 = arith.constant 0 : index
    %220 = vector.load %arg13[%c0_117, %c0_118] : memref<2x8xf32, #tpu.memory_space<vmem>>, vector<2x8xf32>
    tpu.vector_store %arg13[%c0_117, %c0_118], %219 {strides = array<i32>} : memref<2x8xf32, #tpu.memory_space<vmem>>, vector<2x8xf32>,
    return
  }
}

</mosaic_0001>

<llo_original>
// kernel: tpu_custom_call.1
$region0: #{tpu_custom_call.1}
  #allocation0 [shape = 'u32[]', space=smem, size = 0x4, offset = 0x4, fixed_abs, tag = 'smem constant byte address 0x4 - core index']
  #allocation1 [shape = 'u32[144,128]{1,0:T(1,128)}', space=vmem, size = 0x12000, scoped, tag = 'internal scratch']
  %s0 = inlined_call_operand.hbm [shape: f32[8,2,64], index: 0, kind: input, shape index: {}]
  %s1 = inlined_call_operand.vmem [shape: f32[2,2,64], index: 1, kind: input, shape index: {}]
  %s2 = inlined_call_operand.vmem [shape: f32[2,64,64], index: 2, kind: input, shape index: {}]
  %s3 = inlined_call_operand.hbm [shape: f32[2,64,64], index: 3, kind: input, shape index: {}]
  %s4 = inlined_call_operand.vmem [shape: f32[2,1,64], index: 4, kind: input, shape index: {}]
  %s5 = inlined_call_operand.vmem [shape: f32[1,64], index: 5, kind: input, shape index: {}]
  %s6 = inlined_call_operand.vmem [shape: f32[1,64], index: 6, kind: input, shape index: {}]
  %s7 = inlined_call_operand.hbm [shape: f32[64,128], index: 7, kind: input, shape index: {}]
  %s8 = inlined_call_operand.vmem [shape: f32[1,128], index: 8, kind: input, shape index: {}]
  %s9 = inlined_call_operand.vmem [shape: f32[1,128], index: 9, kind: input, shape index: {}]
  %s10 = inlined_call_operand.vmem [shape: f32[1,128], index: 10, kind: input, shape index: {}]
  %s11 = inlined_call_operand.vmem [shape: f32[128,8], index: 11, kind: input, shape index: {}]
  %s12 = inlined_call_operand.vmem [shape: f32[1,8], index: 12, kind: input, shape index: {}]
  %s13 = inlined_call_operand.hbm [shape: f32[2,8], index: 13, kind: output, shape index: {}]
  %s14 = sld [smem:[#allocation0]]
  $region74: #{tpu_custom_call.1} parent=0
    _
  %s16 = ssub.s32 1, %s14
  %s17 = scalar_select 0, %s16, %s14
  $region1: #{tpu_custom_call.1} parent=0
    #allocation2 [shape = 'u8[8192]{0}', space=vmem, size = 0x2000, scoped, tag = 'input window, operand 0, single buffered']
    #allocation3 [shape = 's32[1]{0}', space=sflag, size = 0x4, scoped, tag = 'scoped memory for tpu_custom_call.1']
    #allocation4 [shape = 's32[1]{0}', space=sflag, size = 0x4, scoped, tag = 'scoped memory for tpu_custom_call.1']
    #allocation5 [shape = 'u8[65536]{0}', space=vmem, size = 0x10000, scoped, tag = 'input window, operand 3, single buffered']
    #allocation6 [shape = 's32[1]{0}', space=sflag, size = 0x4, scoped, tag = 'scoped memory for tpu_custom_call.1']
    #allocation7 [shape = 'u8[32768]{0}', space=vmem, size = 0x8000, scoped, tag = 'input window, operand 7, single buffered']
    #allocation8 [shape = 'u8[1024]{0}', space=vmem, size = 0x400, scoped, tag = 'output window, operand 0, single buffered']
    %18 = vsyncpa [#allocation3], 0
    %19 = vsyncpa [#allocation6], 0
    %20 = vsyncpa [#allocation4], 0
    // Predicated region
    $region2: #{tpu_custom_call.1} parent=1 // pred_check
      _
    $region3: #{tpu_custom_call.1} parent=1 // pred_check_branch
      %22 = sbr.rel (0) target = $region5
    $region4: #{tpu_custom_call.1} parent=1 // pred_region
      %s24 = ssub.s32 256, 256
      %25 = vsyncadd [#allocation3], %s24
      %s26 = sshll.u32 [#allocation2], 4
      %s27 = int_to_ptr.vmem [resolvable:$true] %s26
      %32 = dma.hbm_to_vmem [thread:$0]  %s0, 256, %s27, [#allocation3], 32, 32, 2
    $region5: #{tpu_custom_call.1} parent=1 // pred_fallthru
      _
    // Predicated region
    $region6: #{tpu_custom_call.1} parent=1 // pred_check
      _
    $region7: #{tpu_custom_call.1} parent=1 // pred_check_branch
      %34 = sbr.rel (0) target = $region9
    $region8: #{tpu_custom_call.1} parent=1 // pred_region
      _
    $region9: #{tpu_custom_call.1} parent=1 // pred_fallthru
      _
    // Predicated region
    $region10: #{tpu_custom_call.1} parent=1 // pred_check
      _
    $region11: #{tpu_custom_call.1} parent=1 // pred_check_branch
      %36 = sbr.rel (0) target = $region13
    $region12: #{tpu_custom_call.1} parent=1 // pred_region
      _
    $region13: #{tpu_custom_call.1} parent=1 // pred_fallthru
      _
    // Predicated region
    $region14: #{tpu_custom_call.1} parent=1 // pred_check
      _
    $region15: #{tpu_custom_call.1} parent=1 // pred_check_branch
      %38 = sbr.rel (0) target = $region17
    $region16: #{tpu_custom_call.1} parent=1 // pred_region
      %s40 = ssub.s32 2048, 2048
      %41 = vsyncadd [#allocation6], %s40
      %s42 = sshll.u32 [#allocation5], 4
      %s43 = int_to_ptr.vmem [resolvable:$true] %s42
      %48 = dma.hbm_to_vmem [thread:$0]  %s3, 2048, %s43, [#allocation6], 128, 128, 8
    $region17: #{tpu_custom_call.1} parent=1 // pred_fallthru
      _
    // Predicated region
    $region18: #{tpu_custom_call.1} parent=1 // pred_check
      _
    $region19: #{tpu_custom_call.1} parent=1 // pred_check_branch
      %50 = sbr.rel (0) target = $region21
    $region20: #{tpu_custom_call.1} parent=1 // pred_region
      _
    $region21: #{tpu_custom_call.1} parent=1 // pred_fallthru
      _
    // Predicated region
    $region22: #{tpu_custom_call.1} parent=1 // pred_check
      _
    $region23: #{tpu_custom_call.1} parent=1 // pred_check_branch
      %52 = sbr.rel (0) target = $region25
    $region24: #{tpu_custom_call.1} parent=1 // pred_region
      _
    $region25: #{tpu_custom_call.1} parent=1 // pred_fallthru
      _
    // Predicated region
    $region26: #{tpu_custom_call.1} parent=1 // pred_check
      _
    $region27: #{tpu_custom_call.1} parent=1 // pred_check_branch
      %54 = sbr.rel (0) target = $region29
    $region28: #{tpu_custom_call.1} parent=1 // pred_region
      _
    $region29: #{tpu_custom_call.1} parent=1 // pred_fallthru
      _
    // Predicated region
    $region30: #{tpu_custom_call.1} parent=1 // pred_check
      _
    $region31: #{tpu_custom_call.1} parent=1 // pred_check_branch
      %56 = sbr.rel (0) target = $region33
    $region32: #{tpu_custom_call.1} parent=1 // pred_region
      %s58 = ssub.s32 1024, 1024
      %59 = vsyncadd [#allocation6], %s58
      %s60 = sshll.u32 [#allocation7], 4
      %s61 = int_to_ptr.vmem [resolvable:$true] %s60
      %66 = dma.hbm_to_vmem [thread:$0]  %s7, 1024, %s61, [#allocation6], 128, 128, 8
    $region33: #{tpu_custom_call.1} parent=1 // pred_fallthru
      _
    // Predicated region
    $region34: #{tpu_custom_call.1} parent=1 // pred_check
      _
    $region35: #{tpu_custom_call.1} parent=1 // pred_check_branch
      %68 = sbr.rel (0) target = $region37
    $region36: #{tpu_custom_call.1} parent=1 // pred_region
      _
    $region37: #{tpu_custom_call.1} parent=1 // pred_fallthru
      _
    // Predicated region
    $region38: #{tpu_custom_call.1} parent=1 // pred_check
      _
    $region39: #{tpu_custom_call.1} parent=1 // pred_check_branch
      %70 = sbr.rel (0) target = $region41
    $region40: #{tpu_custom_call.1} parent=1 // pred_region
      _
    $region41: #{tpu_custom_call.1} parent=1 // pred_fallthru
      _
    // Predicated region
    $region42: #{tpu_custom_call.1} parent=1 // pred_check
      _
    $region43: #{tpu_custom_call.1} parent=1 // pred_check_branch
      %72 = sbr.rel (0) target = $region45
    $region44: #{tpu_custom_call.1} parent=1 // pred_region
      _
    $region45: #{tpu_custom_call.1} parent=1 // pred_fallthru
      _
    // Predicated region
    $region46: #{tpu_custom_call.1} parent=1 // pred_check
      _
    $region47: #{tpu_custom_call.1} parent=1 // pred_check_branch
      %74 = sbr.rel (0) target = $region49
    $region48: #{tpu_custom_call.1} parent=1 // pred_region
      _
    $region49: #{tpu_custom_call.1} parent=1 // pred_fallthru
      _
    // Predicated region
    $region50: #{tpu_custom_call.1} parent=1 // pred_check
      _
    $region51: #{tpu_custom_call.1} parent=1 // pred_check_branch
      %76 = sbr.rel (0) target = $region53
    $region52: #{tpu_custom_call.1} parent=1 // pred_region
      _
    $region53: #{tpu_custom_call.1} parent=1 // pred_fallthru
      _
    // Predicated region
    $region54: #{tpu_custom_call.1} parent=1 // pred_check
      _
    $region55: #{tpu_custom_call.1} parent=1 // pred_check_branch
      %78 = sbr.rel (0) target = $region57
    $region56: #{tpu_custom_call.1} parent=1 // pred_region
      %79 = dma.done [#allocation3], 256
    $region57: #{tpu_custom_call.1} parent=1 // pred_fallthru
      _
    // Predicated region
    $region58: #{tpu_custom_call.1} parent=1 // pred_check
      _
    $region59: #{tpu_custom_call.1} parent=1 // pred_check_branch
      %81 = sbr.rel (0) target = $region61
    $region60: #{tpu_custom_call.1} parent=1 // pred_region
      %82 = dma.done [#allocation6], 2048
    $region61: #{tpu_custom_call.1} parent=1 // pred_fallthru
      _
    // Predicated region
    $region62: #{tpu_custom_call.1} parent=1 // pred_check
      _
    $region63: #{tpu_custom_call.1} parent=1 // pred_check_branch
      %84 = sbr.rel (0) target = $region65
    $region64: #{tpu_custom_call.1} parent=1 // pred_region
      %85 = dma.done [#allocation6], 1024
    $region65: #{tpu_custom_call.1} parent=1 // pred_fallthru
      _
    %v86 = vld [vmem:[%s2] sm:$0xff]
    %v87 = vld [vmem:[%s2 + $0x8] sm:$0xff]
    %v88 = vld [vmem:[%s2 + $0x10] sm:$0xff]
    %v89 = vld [vmem:[%s2 + $0x18] sm:$0xff]
    %v90 = vld [vmem:[%s2 + $0x20] sm:$0xff]
    %v91 = vld [vmem:[%s2 + $0x28] sm:$0xff]
    %v92 = vld [vmem:[%s2 + $0x30] sm:$0xff]
    %v93 = vld [vmem:[%s2 + $0x38] sm:$0xff]
    %s94 = scalar_lea.vmem %s2, 64
    %v95 = vld [vmem:[%s94] sm:$0xff]
    %v96 = vld [vmem:[%s94 + $0x8] sm:$0xff]
    %v97 = vld [vmem:[%s94 + $0x10] sm:$0xff]
    %v98 = vld [vmem:[%s94 + $0x18] sm:$0xff]
    %v99 = vld [vmem:[%s94 + $0x20] sm:$0xff]
    %v100 = vld [vmem:[%s94 + $0x28] sm:$0xff]
    %v101 = vld [vmem:[%s94 + $0x30] sm:$0xff]
    %v102 = vld [vmem:[%s94 + $0x38] sm:$0xff]
    %v103 = vld [vmem:[#allocation5] sm:$0xff]
    %v104 = vld [vmem:[#allocation5 + $0x8] sm:$0xff]
    %v105 = vld [vmem:[#allocation5 + $0x10] sm:$0xff]
    %v106 = vld [vmem:[#allocation5 + $0x18] sm:$0xff]
    %v107 = vld [vmem:[#allocation5 + $0x20] sm:$0xff]
    %v108 = vld [vmem:[#allocation5 + $0x28] sm:$0xff]
    %v109 = vld [vmem:[#allocation5 + $0x30] sm:$0xff]
    %v110 = vld [vmem:[#allocation5 + $0x38] sm:$0xff]
    %s111 = scalar_lea.vmem [#allocation5], 64
    %v112 = vld [vmem:[%s111] sm:$0xff]
    %v113 = vld [vmem:[%s111 + $0x8] sm:$0xff]
    %v114 = vld [vmem:[%s111 + $0x10] sm:$0xff]
    %v115 = vld [vmem:[%s111 + $0x18] sm:$0xff]
    %v116 = vld [vmem:[%s111 + $0x20] sm:$0xff]
    %v117 = vld [vmem:[%s111 + $0x28] sm:$0xff]
    %v118 = vld [vmem:[%s111 + $0x30] sm:$0xff]
    %v119 = vld [vmem:[%s111 + $0x38] sm:$0xff]
    %v120 = vld [vmem:[%s4] sm:$0x1]
    %s121 = scalar_lea.vmem %s4, 1
    %v122 = vld [vmem:[%s121] sm:$0x1]
    %v123 = vld [vmem:[%s1] sm:$0x3]
    %s124 = scalar_lea.vmem %s1, 2
    %v125 = vld [vmem:[%s124] sm:$0x3]
    %v126 = vld [vmem:[#allocation2] sm:$0x3]
    %vm127 = vcmask 523264
    %v129 = vsel %vm127, %v123, 0
    %131 = vmatprep.subr.mxu0 0.0
    %132 = vmatpush1.msra.mxu0 %v103
    %133 = vmatprep.subr.mxu0 0.0
    %134 = vmatpush1.msra.mxu0 %v104
    %135 = vmatprep.subr.mxu0 0.0
    %136 = vmatpush1.msra.mxu0 %v105
    %137 = vmatprep.subr.mxu0 0.0
    %138 = vmatpush1.msra.mxu0 %v106
    %139 = vmatprep.subr.mxu0 0.0
    %140 = vmatpush1.msra.mxu0 %v107
    %141 = vmatprep.subr.mxu0 0.0
    %142 = vmatpush1.msra.mxu0 %v108
    %143 = vmatprep.subr.mxu0 0.0
    %144 = vmatpush1.msra.mxu0 %v109
    %145 = vmatprep.subr.mxu0 0.0
    %146 = vmatpush1.msra.mxu0 %v110
    %147 = vmatprep.subr.mxu0 0.0
    %148 = vmatpush1.msra.mxu0 0.0
    %149 = vmatprep.subr.mxu0 0.0
    %150 = vmatpush1.msra.mxu0 0.0
    %151 = vmatprep.subr.mxu0 0.0
    %152 = vmatpush1.msra.mxu0 0.0
    %153 = vmatprep.subr.mxu0 0.0
    %154 = vmatpush1.msra.mxu0 0.0
    %155 = vmatprep.subr.mxu0 0.0
    %156 = vmatpush1.msra.mxu0 0.0
    %157 = vmatprep.subr.mxu0 0.0
    %158 = vmatpush1.msra.mxu0 0.0
    %159 = vmatprep.subr.mxu0 0.0
    %160 = vmatpush1.msra.mxu0 0.0
    %161 = vmatprep.subr.mxu0 0.0
    %162 = vmatpush1.msra.mxu0 0.0
    %163 = vmatprep.subr.mxu0 0.0
    %164 = vmatpush1.msra.mxu0 0.0
    %165 = vmatprep.subr.mxu0 0.0
    %166 = vmatpush1.msra.mxu0 0.0
    %167 = vmatprep.subr.mxu0 0.0
    %168 = vmatpush1.msra.mxu0 0.0
    %169 = vmatprep.subr.mxu0 0.0
    %170 = vmatpush1.msra.mxu0 0.0
    %171 = vmatprep.subr.mxu0 0.0
    %172 = vmatpush1.msra.mxu0 0.0
    %173 = vmatprep.subr.mxu0 0.0
    %174 = vmatpush1.msra.mxu0 0.0
    %175 = vmatprep.subr.mxu0 0.0
    %176 = vmatpush1.msra.mxu0 0.0
    %177 = vmatprep.subr.mxu0 0.0
    %178 = vmatpush1.msra.mxu0 0.0
    %179 = vmatprep.subr.mxu0 0.0
    %180 = vmatpush1.msra.mxu0 0.0
    %181 = vmatprep.subr.mxu0 0.0
    %182 = vmatpush1.msra.mxu0 0.0
    %183 = vmatprep.subr.mxu0 0.0
    %184 = vmatpush1.msra.mxu0 0.0
    %185 = vmatprep.subr.mxu0 0.0
    %186 = vmatpush1.msra.mxu0 0.0
    %187 = vmatprep.subr.mxu0 0.0
    %188 = vmatpush1.msra.mxu0 0.0
    %189 = vmatprep.subr.mxu0 0.0
    %190 = vmatpush1.msra.mxu0 0.0
    %191 = vmatprep.subr.mxu0 0.0
    %192 = vmatpush1.msra.mxu0 0.0
    %193 = vmatprep.subr.mxu0 0.0
    %194 = vmatpush1.msra.mxu0 0.0
    %195 = vmatprep.mubr.f32.mxu0 0.0
    %196 = vmatmul.mubr.f32.gmra.mrb[0].mxu0 %v129
    %v197 = vpop.f32.mrb[0].mxu0
    %v198 = vadd.f32 0.0, %v197
    %v199 = vpop.f32.mrb[0].mxu0
    %200 = vdwg.mxu0
    %v202 = vsel %vm127, %v126, 0
    %204 = vmatprep.subr.mxu0 0.0
    %205 = vmatpush1.msra.mxu0 %v86
    %206 = vmatprep.subr.mxu0 0.0
    %207 = vmatpush1.msra.mxu0 %v87
    %208 = vmatprep.subr.mxu0 0.0
    %209 = vmatpush1.msra.mxu0 %v88
    %210 = vmatprep.subr.mxu0 0.0
    %211 = vmatpush1.msra.mxu0 %v89
    %212 = vmatprep.subr.mxu0 0.0
    %213 = vmatpush1.msra.mxu0 %v90
    %214 = vmatprep.subr.mxu0 0.0
    %215 = vmatpush1.msra.mxu0 %v91
    %216 = vmatprep.subr.mxu0 0.0
    %217 = vmatpush1.msra.mxu0 %v92
    %218 = vmatprep.subr.mxu0 0.0
    %219 = vmatpush1.msra.mxu0 %v93
    %220 = vmatprep.subr.mxu0 0.0
    %221 = vmatpush1.msra.mxu0 0.0
    %222 = vmatprep.subr.mxu0 0.0
    %223 = vmatpush1.msra.mxu0 0.0
    %224 = vmatprep.subr.mxu0 0.0
    %225 = vmatpush1.msra.mxu0 0.0
    %226 = vmatprep.subr.mxu0 0.0
    %227 = vmatpush1.msra.mxu0 0.0
    %228 = vmatprep.subr.mxu0 0.0
    %229 = vmatpush1.msra.mxu0 0.0
    %230 = vmatprep.subr.mxu0 0.0
    %231 = vmatpush1.msra.mxu0 0.0
    %232 = vmatprep.subr.mxu0 0.0
    %233 = vmatpush1.msra.mxu0 0.0
    %234 = vmatprep.subr.mxu0 0.0
    %235 = vmatpush1.msra.mxu0 0.0
    %236 = vmatprep.subr.mxu0 0.0
    %237 = vmatpush1.msra.mxu0 0.0
    %238 = vmatprep.subr.mxu0 0.0
    %239 = vmatpush1.msra.mxu0 0.0
    %240 = vmatprep.subr.mxu0 0.0
    %241 = vmatpush1.msra.mxu0 0.0
    %242 = vmatprep.subr.mxu0 0.0
    %243 = vmatpush1.msra.mxu0 0.0
    %244 = vmatprep.subr.mxu0 0.0
    %245 = vmatpush1.msra.mxu0 0.0
    %246 = vmatprep.subr.mxu0 0.0
    %247 = vmatpush1.msra.mxu0 0.0
    %248 = vmatprep.subr.mxu0 0.0
    %249 = vmatpush1.msra.mxu0 0.0
    %250 = vmatprep.subr.mxu0 0.0
    %251 = vmatpush1.msra.mxu0 0.0
    %252 = vmatprep.subr.mxu0 0.0
    %253 = vmatpush1.msra.mxu0 0.0
    %254 = vmatprep.subr.mxu0 0.0
    %255 = vmatpush1.msra.mxu0 0.0
    %256 = vmatprep.subr.mxu0 0.0
    %257 = vmatpush1.msra.mxu0 0.0
    %258 = vmatprep.subr.mxu0 0.0
    %259 = vmatpush1.msra.mxu0 0.0
    %260 = vmatprep.subr.mxu0 0.0
    %261 = vmatpush1.msra.mxu0 0.0
    %262 = vmatprep.subr.mxu0 0.0
    %263 = vmatpush1.msra.mxu0 0.0
    %264 = vmatprep.subr.mxu0 0.0
    %265 = vmatpush1.msra.mxu0 0.0
    %266 = vmatprep.subr.mxu0 0.0
    %267 = vmatpush1.msra.mxu0 0.0
    %268 = vmatprep.mubr.f32.mxu0 0.0
    %269 = vmatmul.mubr.f32.gmra.mrb[0].mxu0 %v202
    %v270 = vpop.f32.mrb[0].mxu0
    %v271 = vadd.f32 %v198, %v270
    %v272 = vpop.f32.mrb[0].mxu0
    %273 = vdwg.mxu0
    %v275 = vlaneseq
    %v276 = vshrl.u32 %v275, 7
    %v277 = vsub.s32 0, %v276
    %v278 = vrot.slane %v120, %v277
    %v280 = vadd.f32 %v271, %v278
    %v281 = vmax.f32 %v280, 0.0
    %v283 = vsel %vm127, %v125, 0
    %285 = vmatprep.subr.mxu0 0.0
    %286 = vmatpush1.msra.mxu0 %v112
    %287 = vmatprep.subr.mxu0 0.0
    %288 = vmatpush1.msra.mxu0 %v113
    %289 = vmatprep.subr.mxu0 0.0
    %290 = vmatpush1.msra.mxu0 %v114
    %291 = vmatprep.subr.mxu0 0.0
    %292 = vmatpush1.msra.mxu0 %v115
    %293 = vmatprep.subr.mxu0 0.0
    %294 = vmatpush1.msra.mxu0 %v116
    %295 = vmatprep.subr.mxu0 0.0
    %296 = vmatpush1.msra.mxu0 %v117
    %297 = vmatprep.subr.mxu0 0.0
    %298 = vmatpush1.msra.mxu0 %v118
    %299 = vmatprep.subr.mxu0 0.0
    %300 = vmatpush1.msra.mxu0 %v119
    %301 = vmatprep.subr.mxu0 0.0
    %302 = vmatpush1.msra.mxu0 0.0
    %303 = vmatprep.subr.mxu0 0.0
    %304 = vmatpush1.msra.mxu0 0.0
    %305 = vmatprep.subr.mxu0 0.0
    %306 = vmatpush1.msra.mxu0 0.0
    %307 = vmatprep.subr.mxu0 0.0
    %308 = vmatpush1.msra.mxu0 0.0
    %309 = vmatprep.subr.mxu0 0.0
    %310 = vmatpush1.msra.mxu0 0.0
    %311 = vmatprep.subr.mxu0 0.0
    %312 = vmatpush1.msra.mxu0 0.0
    %313 = vmatprep.subr.mxu0 0.0
    %314 = vmatpush1.msra.mxu0 0.0
    %315 = vmatprep.subr.mxu0 0.0
    %316 = vmatpush1.msra.mxu0 0.0
    %317 = vmatprep.subr.mxu0 0.0
    %318 = vmatpush1.msra.mxu0 0.0
    %319 = vmatprep.subr.mxu0 0.0
    %320 = vmatpush1.msra.mxu0 0.0
    %321 = vmatprep.subr.mxu0 0.0
    %322 = vmatpush1.msra.mxu0 0.0
    %323 = vmatprep.subr.mxu0 0.0
    %324 = vmatpush1.msra.mxu0 0.0
    %325 = vmatprep.subr.mxu0 0.0
    %326 = vmatpush1.msra.mxu0 0.0
    %327 = vmatprep.subr.mxu0 0.0
    %328 = vmatpush1.msra.mxu0 0.0
    %329 = vmatprep.subr.mxu0 0.0
    %330 = vmatpush1.msra.mxu0 0.0
    %331 = vmatprep.subr.mxu0 0.0
    %332 = vmatpush1.msra.mxu0 0.0
    %333 = vmatprep.subr.mxu0 0.0
    %334 = vmatpush1.msra.mxu0 0.0
    %335 = vmatprep.subr.mxu0 0.0
    %336 = vmatpush1.msra.mxu0 0.0
    %337 = vmatprep.subr.mxu0 0.0
    %338 = vmatpush1.msra.mxu0 0.0
    %339 = vmatprep.subr.mxu0 0.0
    %340 = vmatpush1.msra.mxu0 0.0
    %341 = vmatprep.subr.mxu0 0.0
    %342 = vmatpush1.msra.mxu0 0.0
    %343 = vmatprep.subr.mxu0 0.0
    %344 = vmatpush1.msra.mxu0 0.0
    %345 = vmatprep.subr.mxu0 0.0
    %346 = vmatpush1.msra.mxu0 0.0
    %347 = vmatprep.subr.mxu0 0.0
    %348 = vmatpush1.msra.mxu0 0.0
    %349 = vmatprep.mubr.f32.mxu0 0.0
    %350 = vmatmul.mubr.f32.gmra.mrb[0].mxu0 %v283
    %v351 = vpop.f32.mrb[0].mxu0
    %v352 = vadd.f32 0.0, %v351
    %v353 = vpop.f32.mrb[0].mxu0
    %354 = vdwg.mxu0
    %v356 = vsel %vm127, %v281, 0
    %358 = vmatprep.subr.mxu0 0.0
    %359 = vmatpush1.msra.mxu0 %v95
    %360 = vmatprep.subr.mxu0 0.0
    %361 = vmatpush1.msra.mxu0 %v96
    %362 = vmatprep.subr.mxu0 0.0
    %363 = vmatpush1.msra.mxu0 %v97
    %364 = vmatprep.subr.mxu0 0.0
    %365 = vmatpush1.msra.mxu0 %v98
    %366 = vmatprep.subr.mxu0 0.0
    %367 = vmatpush1.msra.mxu0 %v99
    %368 = vmatprep.subr.mxu0 0.0
    %369 = vmatpush1.msra.mxu0 %v100
    %370 = vmatprep.subr.mxu0 0.0
    %371 = vmatpush1.msra.mxu0 %v101
    %372 = vmatprep.subr.mxu0 0.0
    %373 = vmatpush1.msra.mxu0 %v102
    %374 = vmatprep.subr.mxu0 0.0
    %375 = vmatpush1.msra.mxu0 0.0
    %376 = vmatprep.subr.mxu0 0.0
    %377 = vmatpush1.msra.mxu0 0.0
    %378 = vmatprep.subr.mxu0 0.0
    %379 = vmatpush1.msra.mxu0 0.0
    %380 = vmatprep.subr.mxu0 0.0
    %381 = vmatpush1.msra.mxu0 0.0
    %382 = vmatprep.subr.mxu0 0.0
    %383 = vmatpush1.msra.mxu0 0.0
    %384 = vmatprep.subr.mxu0 0.0
    %385 = vmatpush1.msra.mxu0 0.0
    %386 = vmatprep.subr.mxu0 0.0
    %387 = vmatpush1.msra.mxu0 0.0
    %388 = vmatprep.subr.mxu0 0.0
    %389 = vmatpush1.msra.mxu0 0.0
    %390 = vmatprep.subr.mxu0 0.0
    %391 = vmatpush1.msra.mxu0 0.0
    %392 = vmatprep.subr.mxu0 0.0
    %393 = vmatpush1.msra.mxu0 0.0
    %394 = vmatprep.subr.mxu0 0.0
    %395 = vmatpush1.msra.mxu0 0.0
    %396 = vmatprep.subr.mxu0 0.0
    %397 = vmatpush1.msra.mxu0 0.0
    %398 = vmatprep.subr.mxu0 0.0
    %399 = vmatpush1.msra.mxu0 0.0
    %400 = vmatprep.subr.mxu0 0.0
    %401 = vmatpush1.msra.mxu0 0.0
    %402 = vmatprep.subr.mxu0 0.0
    %403 = vmatpush1.msra.mxu0 0.0
    %404 = vmatprep.subr.mxu0 0.0
    %405 = vmatpush1.msra.mxu0 0.0
    %406 = vmatprep.subr.mxu0 0.0
    %407 = vmatpush1.msra.mxu0 0.0
    %408 = vmatprep.subr.mxu0 0.0
    %409 = vmatpush1.msra.mxu0 0.0
    %410 = vmatprep.subr.mxu0 0.0
    %411 = vmatpush1.msra.mxu0 0.0
    %412 = vmatprep.subr.mxu0 0.0
    %413 = vmatpush1.msra.mxu0 0.0
    %414 = vmatprep.subr.mxu0 0.0
    %415 = vmatpush1.msra.mxu0 0.0
    %416 = vmatprep.subr.mxu0 0.0
    %417 = vmatpush1.msra.mxu0 0.0
    %418 = vmatprep.subr.mxu0 0.0
    %419 = vmatpush1.msra.mxu0 0.0
    %420 = vmatprep.subr.mxu0 0.0
    %421 = vmatpush1.msra.mxu0 0.0
    %422 = vmatprep.mubr.f32.mxu0 0.0
    %423 = vmatmul.mubr.f32.gmra.mrb[0].mxu0 %v356
    %v424 = vpop.f32.mrb[0].mxu0
    %v425 = vadd.f32 %v352, %v424
    %v426 = vpop.f32.mrb[0].mxu0
    %427 = vdwg.mxu0
    %v429 = vlaneseq
    %v430 = vshrl.u32 %v429, 7
    %v431 = vsub.s32 0, %v430
    %v432 = vrot.slane %v122, %v431
    %v434 = vadd.f32 %v425, %v432
    %v435 = vmax.f32 %v434, 0.0
    %s436 = scalar_lea.vmem [#allocation2], 2
    %v437 = vld [vmem:[%s436] sm:$0x3]
    %438 = vmatprep.subr.mxu0 0.0
    %439 = vmatpush1.msra.mxu0 %v103
    %440 = vmatprep.subr.mxu0 0.0
    %441 = vmatpush1.msra.mxu0 %v104
    %442 = vmatprep.subr.mxu0 0.0
    %443 = vmatpush1.msra.mxu0 %v105
    %444 = vmatprep.subr.mxu0 0.0
    %445 = vmatpush1.msra.mxu0 %v106
    %446 = vmatprep.subr.mxu0 0.0
    %447 = vmatpush1.msra.mxu0 %v107
    %448 = vmatprep.subr.mxu0 0.0
    %449 = vmatpush1.msra.mxu0 %v108
    %450 = vmatprep.subr.mxu0 0.0
    %451 = vmatpush1.msra.mxu0 %v109
    %452 = vmatprep.subr.mxu0 0.0
    %453 = vmatpush1.msra.mxu0 %v110
    %454 = vmatprep.subr.mxu0 0.0
    %455 = vmatpush1.msra.mxu0 0.0
    %456 = vmatprep.subr.mxu0 0.0
    %457 = vmatpush1.msra.mxu0 0.0
    %458 = vmatprep.subr.mxu0 0.0
    %459 = vmatpush1.msra.mxu0 0.0
    %460 = vmatprep.subr.mxu0 0.0
    %461 = vmatpush1.msra.mxu0 0.0
    %462 = vmatprep.subr.mxu0 0.0
    %463 = vmatpush1.msra.mxu0 0.0
    %464 = vmatprep.subr.mxu0 0.0
    %465 = vmatpush1.msra.mxu0 0.0
    %466 = vmatprep.subr.mxu0 0.0
    %467 = vmatpush1.msra.mxu0 0.0
    %468 = vmatprep.subr.mxu0 0.0
    %469 = vmatpush1.msra.mxu0 0.0
    %470 = vmatprep.subr.mxu0 0.0
    %471 = vmatpush1.msra.mxu0 0.0
    %472 = vmatprep.subr.mxu0 0.0
    %473 = vmatpush1.msra.mxu0 0.0
    %474 = vmatprep.subr.mxu0 0.0
    %475 = vmatpush1.msra.mxu0 0.0
    %476 = vmatprep.subr.mxu0 0.0
    %477 = vmatpush1.msra.mxu0 0.0
    %478 = vmatprep.subr.mxu0 0.0
    %479 = vmatpush1.msra.mxu0 0.0
    %480 = vmatprep.subr.mxu0 0.0
    %481 = vmatpush1.msra.mxu0 0.0
    %482 = vmatprep.subr.mxu0 0.0
    %483 = vmatpush1.msra.mxu0 0.0
    %484 = vmatprep.subr.mxu0 0.0
    %485 = vmatpush1.msra.mxu0 0.0
    %486 = vmatprep.subr.mxu0 0.0
    %487 = vmatpush1.msra.mxu0 0.0
    %488 = vmatprep.subr.mxu0 0.0
    %489 = vmatpush1.msra.mxu0 0.0
    %490 = vmatprep.subr.mxu0 0.0
    %491 = vmatpush1.msra.mxu0 0.0
    %492 = vmatprep.subr.mxu0 0.0
    %493 = vmatpush1.msra.mxu0 0.0
    %494 = vmatprep.subr.mxu0 0.0
    %495 = vmatpush1.msra.mxu0 0.0
    %496 = vmatprep.subr.mxu0 0.0
    %497 = vmatpush1.msra.mxu0 0.0
    %498 = vmatprep.subr.mxu0 0.0
    %499 = vmatpush1.msra.mxu0 0.0
    %500 = vmatprep.subr.mxu0 0.0
    %501 = vmatpush1.msra.mxu0 0.0
    %502 = vmatprep.mubr.f32.mxu0 0.0
    %503 = vmatmul.mubr.f32.gmra.mrb[0].mxu0 %v356
    %v504 = vpop.f32.mrb[0].mxu0
    %v505 = vadd.f32 0.0, %v504
    %v506 = vpop.f32.mrb[0].mxu0
    %507 = vdwg.mxu0
    %v509 = vsel %vm127, %v437, 0
    %511 = vmatprep.subr.mxu0 0.0
    %512 = vmatpush1.msra.mxu0 %v86
    %513 = vmatprep.subr.mxu0 0.0
    %514 = vmatpush1.msra.mxu0 %v87
    %515 = vmatprep.subr.mxu0 0.0
    %516 = vmatpush1.msra.mxu0 %v88
    %517 = vmatprep.subr.mxu0 0.0
    %518 = vmatpush1.msra.mxu0 %v89
    %519 = vmatprep.subr.mxu0 0.0
    %520 = vmatpush1.msra.mxu0 %v90
    %521 = vmatprep.subr.mxu0 0.0
    %522 = vmatpush1.msra.mxu0 %v91
    %523 = vmatprep.subr.mxu0 0.0
    %524 = vmatpush1.msra.mxu0 %v92
    %525 = vmatprep.subr.mxu0 0.0
    %526 = vmatpush1.msra.mxu0 %v93
    %527 = vmatprep.subr.mxu0 0.0
    %528 = vmatpush1.msra.mxu0 0.0
    %529 = vmatprep.subr.mxu0 0.0
    %530 = vmatpush1.msra.mxu0 0.0
    %531 = vmatprep.subr.mxu0 0.0
    %532 = vmatpush1.msra.mxu0 0.0
    %533 = vmatprep.subr.mxu0 0.0
    %534 = vmatpush1.msra.mxu0 0.0
    %535 = vmatprep.subr.mxu0 0.0
    %536 = vmatpush1.msra.mxu0 0.0
    %537 = vmatprep.subr.mxu0 0.0
    %538 = vmatpush1.msra.mxu0 0.0
    %539 = vmatprep.subr.mxu0 0.0
    %540 = vmatpush1.msra.mxu0 0.0
    %541 = vmatprep.subr.mxu0 0.0
    %542 = vmatpush1.msra.mxu0 0.0
    %543 = vmatprep.subr.mxu0 0.0
    %544 = vmatpush1.msra.mxu0 0.0
    %545 = vmatprep.subr.mxu0 0.0
    %546 = vmatpush1.msra.mxu0 0.0
    %547 = vmatprep.subr.mxu0 0.0
    %548 = vmatpush1.msra.mxu0 0.0
    %549 = vmatprep.subr.mxu0 0.0
    %550 = vmatpush1.msra.mxu0 0.0
    %551 = vmatprep.subr.mxu0 0.0
    %552 = vmatpush1.msra.mxu0 0.0
    %553 = vmatprep.subr.mxu0 0.0
    %554 = vmatpush1.msra.mxu0 0.0
    %555 = vmatprep.subr.mxu0 0.0
    %556 = vmatpush1.msra.mxu0 0.0
    %557 = vmatprep.subr.mxu0 0.0
    %558 = vmatpush1.msra.mxu0 0.0
    %559 = vmatprep.subr.mxu0 0.0
    %560 = vmatpush1.msra.mxu0 0.0
    %561 = vmatprep.subr.mxu0 0.0
    %562 = vmatpush1.msra.mxu0 0.0
    %563 = vmatprep.subr.mxu0 0.0
    %564 = vmatpush1.msra.mxu0 0.0
    %565 = vmatprep.subr.mxu0 0.0
    %566 = vmatpush1.msra.mxu0 0.0
    %567 = vmatprep.subr.mxu0 0.0
    %568 = vmatpush1.msra.mxu0 0.0
    %569 = vmatprep.subr.mxu0 0.0
    %570 = vmatpush1.msra.mxu0 0.0
    %571 = vmatprep.subr.mxu0 0.0
    %572 = vmatpush1.msra.mxu0 0.0
    %573 = vmatprep.subr.mxu0 0.0
    %574 = vmatpush1.msra.mxu0 0.0
    %575 = vmatprep.mubr.f32.mxu0 0.0
    %576 = vmatmul.mubr.f32.gmra.mrb[0].mxu0 %v509
    %v577 = vpop.f32.mrb[0].mxu0
    %v578 = vadd.f32 %v505, %v577
    %v579 = vpop.f32.mrb[0].mxu0
    %580 = vdwg.mxu0
    %v581 = vadd.f32 %v578, %v278
    %v582 = vmax.f32 %v581, 0.0
    %v584 = vsel %vm127, %v435, 0
    %586 = vmatprep.subr.mxu0 0.0
    %587 = vmatpush1.msra.mxu0 %v112
    %588 = vmatprep.subr.mxu0 0.0
    %589 = vmatpush1.msra.mxu0 %v113
    %590 = vmatprep.subr.mxu0 0.0
    %591 = vmatpush1.msra.mxu0 %v114
    %592 = vmatprep.subr.mxu0 0.0
    %593 = vmatpush1.msra.mxu0 %v115
    %594 = vmatprep.subr.mxu0 0.0
    %595 = vmatpush1.msra.mxu0 %v116
    %596 = vmatprep.subr.mxu0 0.0
    %597 = vmatpush1.msra.mxu0 %v117
    %598 = vmatprep.subr.mxu0 0.0
    %599 = vmatpush1.msra.mxu0 %v118
    %600 = vmatprep.subr.mxu0 0.0
    %601 = vmatpush1.msra.mxu0 %v119
    %602 = vmatprep.subr.mxu0 0.0
    %603 = vmatpush1.msra.mxu0 0.0
    %604 = vmatprep.subr.mxu0 0.0
    %605 = vmatpush1.msra.mxu0 0.0
    %606 = vmatprep.subr.mxu0 0.0
    %607 = vmatpush1.msra.mxu0 0.0
    %608 = vmatprep.subr.mxu0 0.0
    %609 = vmatpush1.msra.mxu0 0.0
    %610 = vmatprep.subr.mxu0 0.0
    %611 = vmatpush1.msra.mxu0 0.0
    %612 = vmatprep.subr.mxu0 0.0
    %613 = vmatpush1.msra.mxu0 0.0
    %614 = vmatprep.subr.mxu0 0.0
    %615 = vmatpush1.msra.mxu0 0.0
    %616 = vmatprep.subr.mxu0 0.0
    %617 = vmatpush1.msra.mxu0 0.0
    %618 = vmatprep.subr.mxu0 0.0
    %619 = vmatpush1.msra.mxu0 0.0
    %620 = vmatprep.subr.mxu0 0.0
    %621 = vmatpush1.msra.mxu0 0.0
    %622 = vmatprep.subr.mxu0 0.0
    %623 = vmatpush1.msra.mxu0 0.0
    %624 = vmatprep.subr.mxu0 0.0
    %625 = vmatpush1.msra.mxu0 0.0
    %626 = vmatprep.subr.mxu0 0.0
    %627 = vmatpush1.msra.mxu0 0.0
    %628 = vmatprep.subr.mxu0 0.0
    %629 = vmatpush1.msra.mxu0 0.0
    %630 = vmatprep.subr.mxu0 0.0
    %631 = vmatpush1.msra.mxu0 0.0
    %632 = vmatprep.subr.mxu0 0.0
    %633 = vmatpush1.msra.mxu0 0.0
    %634 = vmatprep.subr.mxu0 0.0
    %635 = vmatpush1.msra.mxu0 0.0
    %636 = vmatprep.subr.mxu0 0.0
    %637 = vmatpush1.msra.mxu0 0.0
    %638 = vmatprep.subr.mxu0 0.0
    %639 = vmatpush1.msra.mxu0 0.0
    %640 = vmatprep.subr.mxu0 0.0
    %641 = vmatpush1.msra.mxu0 0.0
    %642 = vmatprep.subr.mxu0 0.0
    %643 = vmatpush1.msra.mxu0 0.0
    %644 = vmatprep.subr.mxu0 0.0
    %645 = vmatpush1.msra.mxu0 0.0
    %646 = vmatprep.subr.mxu0 0.0
    %647 = vmatpush1.msra.mxu0 0.0
    %648 = vmatprep.subr.mxu0 0.0
    %649 = vmatpush1.msra.mxu0 0.0
    %650 = vmatprep.mubr.f32.mxu0 0.0
    %651 = vmatmul.mubr.f32.gmra.mrb[0].mxu0 %v584
    %v652 = vpop.f32.mrb[0].mxu0
    %v653 = vadd.f32 0.0, %v652
    %v654 = vpop.f32.mrb[0].mxu0
    %655 = vdwg.mxu0
    %v657 = vsel %vm127, %v582, 0
    %659 = vmatprep.subr.mxu0 0.0
    %660 = vmatpush1.msra.mxu0 %v95
    %661 = vmatprep.subr.mxu0 0.0
    %662 = vmatpush1.msra.mxu0 %v96
    %663 = vmatprep.subr.mxu0 0.0
    %664 = vmatpush1.msra.mxu0 %v97
    %665 = vmatprep.subr.mxu0 0.0
    %666 = vmatpush1.msra.mxu0 %v98
    %667 = vmatprep.subr.mxu0 0.0
    %668 = vmatpush1.msra.mxu0 %v99
    %669 = vmatprep.subr.mxu0 0.0
    %670 = vmatpush1.msra.mxu0 %v100
    %671 = vmatprep.subr.mxu0 0.0
    %672 = vmatpush1.msra.mxu0 %v101
    %673 = vmatprep.subr.mxu0 0.0
    %674 = vmatpush1.msra.mxu0 %v102
    %675 = vmatprep.subr.mxu0 0.0
    %676 = vmatpush1.msra.mxu0 0.0
    %677 = vmatprep.subr.mxu0 0.0
    %678 = vmatpush1.msra.mxu0 0.0
    %679 = vmatprep.subr.mxu0 0.0
    %680 = vmatpush1.msra.mxu0 0.0
    %681 = vmatprep.subr.mxu0 0.0
    %682 = vmatpush1.msra.mxu0 0.0
    %683 = vmatprep.subr.mxu0 0.0
    %684 = vmatpush1.msra.mxu0 0.0
    %685 = vmatprep.subr.mxu0 0.0
    %686 = vmatpush1.msra.mxu0 0.0
    %687 = vmatprep.subr.mxu0 0.0
    %688 = vmatpush1.msra.mxu0 0.0
    %689 = vmatprep.subr.mxu0 0.0
    %690 = vmatpush1.msra.mxu0 0.0
    %691 = vmatprep.subr.mxu0 0.0
    %692 = vmatpush1.msra.mxu0 0.0
    %693 = vmatprep.subr.mxu0 0.0
    %694 = vmatpush1.msra.mxu0 0.0
    %695 = vmatprep.subr.mxu0 0.0
    %696 = vmatpush1.msra.mxu0 0.0
    %697 = vmatprep.subr.mxu0 0.0
    %698 = vmatpush1.msra.mxu0 0.0
    %699 = vmatprep.subr.mxu0 0.0
    %700 = vmatpush1.msra.mxu0 0.0
    %701 = vmatprep.subr.mxu0 0.0
    %702 = vmatpush1.msra.mxu0 0.0
    %703 = vmatprep.subr.mxu0 0.0
    %704 = vmatpush1.msra.mxu0 0.0
    %705 = vmatprep.subr.mxu0 0.0
    %706 = vmatpush1.msra.mxu0 0.0
    %707 = vmatprep.subr.mxu0 0.0
    %708 = vmatpush1.msra.mxu0 0.0
    %709 = vmatprep.subr.mxu0 0.0
    %710 = vmatpush1.msra.mxu0 0.0
    %711 = vmatprep.subr.mxu0 0.0
    %712 = vmatpush1.msra.mxu0 0.0
    %713 = vmatprep.subr.mxu0 0.0
    %714 = vmatpush1.msra.mxu0 0.0
    %715 = vmatprep.subr.mxu0 0.0
    %716 = vmatpush1.msra.mxu0 0.0
    %717 = vmatprep.subr.mxu0 0.0
    %718 = vmatpush1.msra.mxu0 0.0
    %719 = vmatprep.subr.mxu0 0.0
    %720 = vmatpush1.msra.mxu0 0.0
    %721 = vmatprep.subr.mxu0 0.0
    %722 = vmatpush1.msra.mxu0 0.0
    %723 = vmatprep.mubr.f32.mxu0 0.0
    %724 = vmatmul.mubr.f32.gmra.mrb[0].mxu0 %v657
    %v725 = vpop.f32.mrb[0].mxu0
    %v726 = vadd.f32 %v653, %v725
    %v727 = vpop.f32.mrb[0].mxu0
    %728 = vdwg.mxu0
    %v729 = vadd.f32 %v726, %v432
    %v730 = vmax.f32 %v729, 0.0
    %s731 = scalar_lea.vmem [#allocation2], 4
    %v732 = vld [vmem:[%s731] sm:$0x3]
    %733 = vmatprep.subr.mxu0 0.0
    %734 = vmatpush1.msra.mxu0 %v103
    %735 = vmatprep.subr.mxu0 0.0
    %736 = vmatpush1.msra.mxu0 %v104
    %737 = vmatprep.subr.mxu0 0.0
    %738 = vmatpush1.msra.mxu0 %v105
    %739 = vmatprep.subr.mxu0 0.0
    %740 = vmatpush1.msra.mxu0 %v106
    %741 = vmatprep.subr.mxu0 0.0
    %742 = vmatpush1.msra.mxu0 %v107
    %743 = vmatprep.subr.mxu0 0.0
    %744 = vmatpush1.msra.mxu0 %v108
    %745 = vmatprep.subr.mxu0 0.0
    %746 = vmatpush1.msra.mxu0 %v109
    %747 = vmatprep.subr.mxu0 0.0
    %748 = vmatpush1.msra.mxu0 %v110
    %749 = vmatprep.subr.mxu0 0.0
    %750 = vmatpush1.msra.mxu0 0.0
    %751 = vmatprep.subr.mxu0 0.0
    %752 = vmatpush1.msra.mxu0 0.0
    %753 = vmatprep.subr.mxu0 0.0
    %754 = vmatpush1.msra.mxu0 0.0
    %755 = vmatprep.subr.mxu0 0.0
    %756 = vmatpush1.msra.mxu0 0.0
    %757 = vmatprep.subr.mxu0 0.0
    %758 = vmatpush1.msra.mxu0 0.0
    %759 = vmatprep.subr.mxu0 0.0
    %760 = vmatpush1.msra.mxu0 0.0
    %761 = vmatprep.subr.mxu0 0.0
    %762 = vmatpush1.msra.mxu0 0.0
    %763 = vmatprep.subr.mxu0 0.0
    %764 = vmatpush1.msra.mxu0 0.0
    %765 = vmatprep.subr.mxu0 0.0
    %766 = vmatpush1.msra.mxu0 0.0
    %767 = vmatprep.subr.mxu0 0.0
    %768 = vmatpush1.msra.mxu0 0.0
    %769 = vmatprep.subr.mxu0 0.0
    %770 = vmatpush1.msra.mxu0 0.0
    %771 = vmatprep.subr.mxu0 0.0
    %772 = vmatpush1.msra.mxu0 0.0
    %773 = vmatprep.subr.mxu0 0.0
    %774 = vmatpush1.msra.mxu0 0.0
    %775 = vmatprep.subr.mxu0 0.0
    %776 = vmatpush1.msra.mxu0 0.0
    %777 = vmatprep.subr.mxu0 0.0
    %778 = vmatpush1.msra.mxu0 0.0
    %779 = vmatprep.subr.mxu0 0.0
    %780 = vmatpush1.msra.mxu0 0.0
    %781 = vmatprep.subr.mxu0 0.0
    %782 = vmatpush1.msra.mxu0 0.0
    %783 = vmatprep.subr.mxu0 0.0
    %784 = vmatpush1.msra.mxu0 0.0
    %785 = vmatprep.subr.mxu0 0.0
    %786 = vmatpush1.msra.mxu0 0.0
    %787 = vmatprep.subr.mxu0 0.0
    %788 = vmatpush1.msra.mxu0 0.0
    %789 = vmatprep.subr.mxu0 0.0
    %790 = vmatpush1.msra.mxu0 0.0
    %791 = vmatprep.subr.mxu0 0.0
    %792 = vmatpush1.msra.mxu0 0.0
    %793 = vmatprep.subr.mxu0 0.0
    %794 = vmatpush1.msra.mxu0 0.0
    %795 = vmatprep.subr.mxu0 0.0
    %796 = vmatpush1.msra.mxu0 0.0
    %797 = vmatprep.mubr.f32.mxu0 0.0
    %798 = vmatmul.mubr.f32.gmra.mrb[0].mxu0 %v657
    %v799 = vpop.f32.mrb[0].mxu0
    %v800 = vadd.f32 0.0, %v799
    %v801 = vpop.f32.mrb[0].mxu0
    %802 = vdwg.mxu0
    %v804 = vsel %vm127, %v732, 0
    %806 = vmatprep.subr.mxu0 0.0
    %807 = vmatpush1.msra.mxu0 %v86
    %808 = vmatprep.subr.mxu0 0.0
    %809 = vmatpush1.msra.mxu0 %v87
    %810 = vmatprep.subr.mxu0 0.0
    %811 = vmatpush1.msra.mxu0 %v88
    %812 = vmatprep.subr.mxu0 0.0
    %813 = vmatpush1.msra.mxu0 %v89
    %814 = vmatprep.subr.mxu0 0.0
    %815 = vmatpush1.msra.mxu0 %v90
    %816 = vmatprep.subr.mxu0 0.0
    %817 = vmatpush1.msra.mxu0 %v91
    %818 = vmatprep.subr.mxu0 0.0
    %819 = vmatpush1.msra.mxu0 %v92
    %820 = vmatprep.subr.mxu0 0.0
    %821 = vmatpush1.msra.mxu0 %v93
    %822 = vmatprep.subr.mxu0 0.0
    %823 = vmatpush1.msra.mxu0 0.0
    %824 = vmatprep.subr.mxu0 0.0
    %825 = vmatpush1.msra.mxu0 0.0
    %826 = vmatprep.subr.mxu0 0.0
    %827 = vmatpush1.msra.mxu0 0.0
    %828 = vmatprep.subr.mxu0 0.0
    %829 = vmatpush1.msra.mxu0 0.0
    %830 = vmatprep.subr.mxu0 0.0
    %831 = vmatpush1.msra.mxu0 0.0
    %832 = vmatprep.subr.mxu0 0.0
    %833 = vmatpush1.msra.mxu0 0.0
    %834 = vmatprep.subr.mxu0 0.0
    %835 = vmatpush1.msra.mxu0 0.0
    %836 = vmatprep.subr.mxu0 0.0
    %837 = vmatpush1.msra.mxu0 0.0
    %838 = vmatprep.subr.mxu0 0.0
    %839 = vmatpush1.msra.mxu0 0.0
    %840 = vmatprep.subr.mxu0 0.0
    %841 = vmatpush1.msra.mxu0 0.0
    %842 = vmatprep.subr.mxu0 0.0
    %843 = vmatpush1.msra.mxu0 0.0
    %844 = vmatprep.subr.mxu0 0.0
    %845 = vmatpush1.msra.mxu0 0.0
    %846 = vmatprep.subr.mxu0 0.0
    %847 = vmatpush1.msra.mxu0 0.0
    %848 = vmatprep.subr.mxu0 0.0
    %849 = vmatpush1.msra.mxu0 0.0
    %850 = vmatprep.subr.mxu0 0.0
    %851 = vmatpush1.msra.mxu0 0.0
    %852 = vmatprep.subr.mxu0 0.0
    %853 = vmatpush1.msra.mxu0 0.0
    %854 = vmatprep.subr.mxu0 0.0
    %855 = vmatpush1.msra.mxu0 0.0
    %856 = vmatprep.subr.mxu0 0.0
    %857 = vmatpush1.msra.mxu0 0.0
    %858 = vmatprep.subr.mxu0 0.0
    %859 = vmatpush1.msra.mxu0 0.0
    %860 = vmatprep.subr.mxu0 0.0
    %861 = vmatpush1.msra.mxu0 0.0
    %862 = vmatprep.subr.mxu0 0.0
    %863 = vmatpush1.msra.mxu0 0.0
    %864 = vmatprep.subr.mxu0 0.0
    %865 = vmatpush1.msra.mxu0 0.0
    %866 = vmatprep.subr.mxu0 0.0
    %867 = vmatpush1.msra.mxu0 0.0
    %868 = vmatprep.subr.mxu0 0.0
    %869 = vmatpush1.msra.mxu0 0.0
    %870 = vmatprep.mubr.f32.mxu0 0.0
    %871 = vmatmul.mubr.f32.gmra.mrb[0].mxu0 %v804
    %v872 = vpop.f32.mrb[0].mxu0
    %v873 = vadd.f32 %v800, %v872
    %v874 = vpop.f32.mrb[0].mxu0
    %875 = vdwg.mxu0
    %v876 = vadd.f32 %v873, %v278
    %v877 = vmax.f32 %v876, 0.0
    %v879 = vsel %vm127, %v730, 0
    %881 = vmatprep.subr.mxu0 0.0
    %882 = vmatpush1.msra.mxu0 %v112
    %883 = vmatprep.subr.mxu0 0.0
    %884 = vmatpush1.msra.mxu0 %v113
    %885 = vmatprep.subr.mxu0 0.0
    %886 = vmatpush1.msra.mxu0 %v114
    %887 = vmatprep.subr.mxu0 0.0
    %888 = vmatpush1.msra.mxu0 %v115
    %889 = vmatprep.subr.mxu0 0.0
    %890 = vmatpush1.msra.mxu0 %v116
    %891 = vmatprep.subr.mxu0 0.0
    %892 = vmatpush1.msra.mxu0 %v117
    %893 = vmatprep.subr.mxu0 0.0
    %894 = vmatpush1.msra.mxu0 %v118
    %895 = vmatprep.subr.mxu0 0.0
    %896 = vmatpush1.msra.mxu0 %v119
    %897 = vmatprep.subr.mxu0 0.0
    %898 = vmatpush1.msra.mxu0 0.0
    %899 = vmatprep.subr.mxu0 0.0
    %900 = vmatpush1.msra.mxu0 0.0
    %901 = vmatprep.subr.mxu0 0.0
    %902 = vmatpush1.msra.mxu0 0.0
    %903 = vmatprep.subr.mxu0 0.0
    %904 = vmatpush1.msra.mxu0 0.0
    %905 = vmatprep.subr.mxu0 0.0
    %906 = vmatpush1.msra.mxu0 0.0
    %907 = vmatprep.subr.mxu0 0.0
    %908 = vmatpush1.msra.mxu0 0.0
    %909 = vmatprep.subr.mxu0 0.0
    %910 = vmatpush1.msra.mxu0 0.0
    %911 = vmatprep.subr.mxu0 0.0
    %912 = vmatpush1.msra.mxu0 0.0
    %913 = vmatprep.subr.mxu0 0.0
    %914 = vmatpush1.msra.mxu0 0.0
    %915 = vmatprep.subr.mxu0 0.0
    %916 = vmatpush1.msra.mxu0 0.0
    %917 = vmatprep.subr.mxu0 0.0
    %918 = vmatpush1.msra.mxu0 0.0
    %919 = vmatprep.subr.mxu0 0.0
    %920 = vmatpush1.msra.mxu0 0.0
    %921 = vmatprep.subr.mxu0 0.0
    %922 = vmatpush1.msra.mxu0 0.0
    %923 = vmatprep.subr.mxu0 0.0
    %924 = vmatpush1.msra.mxu0 0.0
    %925 = vmatprep.subr.mxu0 0.0
    %926 = vmatpush1.msra.mxu0 0.0
    %927 = vmatprep.subr.mxu0 0.0
    %928 = vmatpush1.msra.mxu0 0.0
    %929 = vmatprep.subr.mxu0 0.0
    %930 = vmatpush1.msra.mxu0 0.0
    %931 = vmatprep.subr.mxu0 0.0
    %932 = vmatpush1.msra.mxu0 0.0
    %933 = vmatprep.subr.mxu0 0.0
    %934 = vmatpush1.msra.mxu0 0.0
    %935 = vmatprep.subr.mxu0 0.0
    %936 = vmatpush1.msra.mxu0 0.0
    %937 = vmatprep.subr.mxu0 0.0
    %938 = vmatpush1.msra.mxu0 0.0
    %939 = vmatprep.subr.mxu0 0.0
    %940 = vmatpush1.msra.mxu0 0.0
    %941 = vmatprep.subr.mxu0 0.0
    %942 = vmatpush1.msra.mxu0 0.0
    %943 = vmatprep.subr.mxu0 0.0
    %944 = vmatpush1.msra.mxu0 0.0
    %945 = vmatprep.mubr.f32.mxu0 0.0
    %946 = vmatmul.mubr.f32.gmra.mrb[0].mxu0 %v879
    %v947 = vpop.f32.mrb[0].mxu0
    %v948 = vadd.f32 0.0, %v947
    %v949 = vpop.f32.mrb[0].mxu0
    %950 = vdwg.mxu0
    %v952 = vsel %vm127, %v877, 0
    %954 = vmatprep.subr.mxu0 0.0
    %955 = vmatpush1.msra.mxu0 %v95
    %956 = vmatprep.subr.mxu0 0.0
    %957 = vmatpush1.msra.mxu0 %v96
    %958 = vmatprep.subr.mxu0 0.0
    %959 = vmatpush1.msra.mxu0 %v97
    %960 = vmatprep.subr.mxu0 0.0
    %961 = vmatpush1.msra.mxu0 %v98
    %962 = vmatprep.subr.mxu0 0.0
    %963 = vmatpush1.msra.mxu0 %v99
    %964 = vmatprep.subr.mxu0 0.0
    %965 = vmatpush1.msra.mxu0 %v100
    %966 = vmatprep.subr.mxu0 0.0
    %967 = vmatpush1.msra.mxu0 %v101
    %968 = vmatprep.subr.mxu0 0.0
    %969 = vmatpush1.msra.mxu0 %v102
    %970 = vmatprep.subr.mxu0 0.0
    %971 = vmatpush1.msra.mxu0 0.0
    %972 = vmatprep.subr.mxu0 0.0
    %973 = vmatpush1.msra.mxu0 0.0
    %974 = vmatprep.subr.mxu0 0.0
    %975 = vmatpush1.msra.mxu0 0.0
    %976 = vmatprep.subr.mxu0 0.0
    %977 = vmatpush1.msra.mxu0 0.0
    %978 = vmatprep.subr.mxu0 0.0
    %979 = vmatpush1.msra.mxu0 0.0
    %980 = vmatprep.subr.mxu0 0.0
    %981 = vmatpush1.msra.mxu0 0.0
    %982 = vmatprep.subr.mxu0 0.0
    %983 = vmatpush1.msra.mxu0 0.0
    %984 = vmatprep.subr.mxu0 0.0
    %985 = vmatpush1.msra.mxu0 0.0
    %986 = vmatprep.subr.mxu0 0.0
    %987 = vmatpush1.msra.mxu0 0.0
    %988 = vmatprep.subr.mxu0 0.0
    %989 = vmatpush1.msra.mxu0 0.0
    %990 = vmatprep.subr.mxu0 0.0
    %991 = vmatpush1.msra.mxu0 0.0
    %992 = vmatprep.subr.mxu0 0.0
    %993 = vmatpush1.msra.mxu0 0.0
    %994 = vmatprep.subr.mxu0 0.0
    %995 = vmatpush1.msra.mxu0 0.0
    %996 = vmatprep.subr.mxu0 0.0
    %997 = vmatpush1.msra.mxu0 0.0
    %998 = vmatprep.subr.mxu0 0.0
    %999 = vmatpush1.msra.mxu0 0.0
    %1000 = vmatprep.subr.mxu0 0.0
    %1001 = vmatpush1.msra.mxu0 0.0
    %1002 = vmatprep.subr.mxu0 0.0
    %1003 = vmatpush1.msra.mxu0 0.0
    %1004 = vmatprep.subr.mxu0 0.0
    %1005 = vmatpush1.msra.mxu0 0.0
    %1006 = vmatprep.subr.mxu0 0.0
    %1007 = vmatpush1.msra.mxu0 0.0
    %1008 = vmatprep.subr.mxu0 0.0
    %1009 = vmatpush1.msra.mxu0 0.0
    %1010 = vmatprep.subr.mxu0 0.0
    %1011 = vmatpush1.msra.mxu0 0.0
    %1012 = vmatprep.subr.mxu0 0.0
    %1013 = vmatpush1.msra.mxu0 0.0
    %1014 = vmatprep.subr.mxu0 0.0
    %1015 = vmatpush1.msra.mxu0 0.0
    %1016 = vmatprep.subr.mxu0 0.0
    %1017 = vmatpush1.msra.mxu0 0.0
    %1018 = vmatprep.mubr.f32.mxu0 0.0
    %1019 = vmatmul.mubr.f32.gmra.mrb[0].mxu0 %v952
    %v1020 = vpop.f32.mrb[0].mxu0
    %v1021 = vadd.f32 %v948, %v1020
    %v1022 = vpop.f32.mrb[0].mxu0
    %1023 = vdwg.mxu0
    %v1024 = vadd.f32 %v1021, %v432
    %v1025 = vmax.f32 %v1024, 0.0
    %s1026 = scalar_lea.vmem [#allocation2], 6
    %v1027 = vld [vmem:[%s1026] sm:$0x3]
    %1028 = vmatprep.subr.mxu0 0.0
    %1029 = vmatpush1.msra.mxu0 %v103
    %1030 = vmatprep.subr.mxu0 0.0
    %1031 = vmatpush1.msra.mxu0 %v104
    %1032 = vmatprep.subr.mxu0 0.0
    %1033 = vmatpush1.msra.mxu0 %v105
    %1034 = vmatprep.subr.mxu0 0.0
    %1035 = vmatpush1.msra.mxu0 %v106
    %1036 = vmatprep.subr.mxu0 0.0
    %1037 = vmatpush1.msra.mxu0 %v107
    %1038 = vmatprep.subr.mxu0 0.0
    %1039 = vmatpush1.msra.mxu0 %v108
    %1040 = vmatprep.subr.mxu0 0.0
    %1041 = vmatpush1.msra.mxu0 %v109
    %1042 = vmatprep.subr.mxu0 0.0
    %1043 = vmatpush1.msra.mxu0 %v110
    %1044 = vmatprep.subr.mxu0 0.0
    %1045 = vmatpush1.msra.mxu0 0.0
    %1046 = vmatprep.subr.mxu0 0.0
    %1047 = vmatpush1.msra.mxu0 0.0
    %1048 = vmatprep.subr.mxu0 0.0
    %1049 = vmatpush1.msra.mxu0 0.0
    %1050 = vmatprep.subr.mxu0 0.0
    %1051 = vmatpush1.msra.mxu0 0.0
    %1052 = vmatprep.subr.mxu0 0.0
    %1053 = vmatpush1.msra.mxu0 0.0
    %1054 = vmatprep.subr.mxu0 0.0
    %1055 = vmatpush1.msra.mxu0 0.0
    %1056 = vmatprep.subr.mxu0 0.0
    %1057 = vmatpush1.msra.mxu0 0.0
    %1058 = vmatprep.subr.mxu0 0.0
    %1059 = vmatpush1.msra.mxu0 0.0
    %1060 = vmatprep.subr.mxu0 0.0
    %1061 = vmatpush1.msra.mxu0 0.0
    %1062 = vmatprep.subr.mxu0 0.0
    %1063 = vmatpush1.msra.mxu0 0.0
    %1064 = vmatprep.subr.mxu0 0.0
    %1065 = vmatpush1.msra.mxu0 0.0
    %1066 = vmatprep.subr.mxu0 0.0
    %1067 = vmatpush1.msra.mxu0 0.0
    %1068 = vmatprep.subr.mxu0 0.0
    %1069 = vmatpush1.msra.mxu0 0.0
    %1070 = vmatprep.subr.mxu0 0.0
    %1071 = vmatpush1.msra.mxu0 0.0
    %1072 = vmatprep.subr.mxu0 0.0
    %1073 = vmatpush1.msra.mxu0 0.0
    %1074 = vmatprep.subr.mxu0 0.0
    %1075 = vmatpush1.msra.mxu0 0.0
    %1076 = vmatprep.subr.mxu0 0.0
    %1077 = vmatpush1.msra.mxu0 0.0
    %1078 = vmatprep.subr.mxu0 0.0
    %1079 = vmatpush1.msra.mxu0 0.0
    %1080 = vmatprep.subr.mxu0 0.0
    %1081 = vmatpush1.msra.mxu0 0.0
    %1082 = vmatprep.subr.mxu0 0.0
    %1083 = vmatpush1.msra.mxu0 0.0
    %1084 = vmatprep.subr.mxu0 0.0
    %1085 = vmatpush1.msra.mxu0 0.0
    %1086 = vmatprep.subr.mxu0 0.0
    %1087 = vmatpush1.msra.mxu0 0.0
    %1088 = vmatprep.subr.mxu0 0.0
    %1089 = vmatpush1.msra.mxu0 0.0
    %1090 = vmatprep.subr.mxu0 0.0
    %1091 = vmatpush1.msra.mxu0 0.0
    %1092 = vmatprep.mubr.f32.mxu0 0.0
    %1093 = vmatmul.mubr.f32.gmra.mrb[0].mxu0 %v952
    %v1094 = vpop.f32.mrb[0].mxu0
    %v1095 = vadd.f32 0.0, %v1094
    %v1096 = vpop.f32.mrb[0].mxu0
    %1097 = vdwg.mxu0
    %v1099 = vsel %vm127, %v1027, 0
    %1101 = vmatprep.subr.mxu0 0.0
    %1102 = vmatpush1.msra.mxu0 %v86
    %1103 = vmatprep.subr.mxu0 0.0
    %1104 = vmatpush1.msra.mxu0 %v87
    %1105 = vmatprep.subr.mxu0 0.0
    %1106 = vmatpush1.msra.mxu0 %v88
    %1107 = vmatprep.subr.mxu0 0.0
    %1108 = vmatpush1.msra.mxu0 %v89
    %1109 = vmatprep.subr.mxu0 0.0
    %1110 = vmatpush1.msra.mxu0 %v90
    %1111 = vmatprep.subr.mxu0 0.0
    %1112 = vmatpush1.msra.mxu0 %v91
    %1113 = vmatprep.subr.mxu0 0.0
    %1114 = vmatpush1.msra.mxu0 %v92
    %1115 = vmatprep.subr.mxu0 0.0
    %1116 = vmatpush1.msra.mxu0 %v93
    %1117 = vmatprep.subr.mxu0 0.0
    %1118 = vmatpush1.msra.mxu0 0.0
    %1119 = vmatprep.subr.mxu0 0.0
    %1120 = vmatpush1.msra.mxu0 0.0
    %1121 = vmatprep.subr.mxu0 0.0
    %1122 = vmatpush1.msra.mxu0 0.0
    %1123 = vmatprep.subr.mxu0 0.0
    %1124 = vmatpush1.msra.mxu0 0.0
    %1125 = vmatprep.subr.mxu0 0.0
    %1126 = vmatpush1.msra.mxu0 0.0
    %1127 = vmatprep.subr.mxu0 0.0
    %1128 = vmatpush1.msra.mxu0 0.0
    %1129 = vmatprep.subr.mxu0 0.0
    %1130 = vmatpush1.msra.mxu0 0.0
    %1131 = vmatprep.subr.mxu0 0.0
    %1132 = vmatpush1.msra.mxu0 0.0
    %1133 = vmatprep.subr.mxu0 0.0
    %1134 = vmatpush1.msra.mxu0 0.0
    %1135 = vmatprep.subr.mxu0 0.0
    %1136 = vmatpush1.msra.mxu0 0.0
    %1137 = vmatprep.subr.mxu0 0.0
    %1138 = vmatpush1.msra.mxu0 0.0
    %1139 = vmatprep.subr.mxu0 0.0
    %1140 = vmatpush1.msra.mxu0 0.0
    %1141 = vmatprep.subr.mxu0 0.0
    %1142 = vmatpush1.msra.mxu0 0.0
    %1143 = vmatprep.subr.mxu0 0.0
    %1144 = vmatpush1.msra.mxu0 0.0
    %1145 = vmatprep.subr.mxu0 0.0
    %1146 = vmatpush1.msra.mxu0 0.0
    %1147 = vmatprep.subr.mxu0 0.0
    %1148 = vmatpush1.msra.mxu0 0.0
    %1149 = vmatprep.subr.mxu0 0.0
    %1150 = vmatpush1.msra.mxu0 0.0
    %1151 = vmatprep.subr.mxu0 0.0
    %1152 = vmatpush1.msra.mxu0 0.0
    %1153 = vmatprep.subr.mxu0 0.0
    %1154 = vmatpush1.msra.mxu0 0.0
    %1155 = vmatprep.subr.mxu0 0.0
    %1156 = vmatpush1.msra.mxu0 0.0
    %1157 = vmatprep.subr.mxu0 0.0
    %1158 = vmatpush1.msra.mxu0 0.0
    %1159 = vmatprep.subr.mxu0 0.0
    %1160 = vmatpush1.msra.mxu0 0.0
    %1161 = vmatprep.subr.mxu0 0.0
    %1162 = vmatpush1.msra.mxu0 0.0
    %1163 = vmatprep.subr.mxu0 0.0
    %1164 = vmatpush1.msra.mxu0 0.0
    %1165 = vmatprep.mubr.f32.mxu0 0.0
    %1166 = vmatmul.mubr.f32.gmra.mrb[0].mxu0 %v1099
    %v1167 = vpop.f32.mrb[0].mxu0
    %v1168 = vadd.f32 %v1095, %v1167
    %v1169 = vpop.f32.mrb[0].mxu0
    %1170 = vdwg.mxu0
    %v1171 = vadd.f32 %v1168, %v278
    %v1172 = vmax.f32 %v1171, 0.0
    %v1174 = vsel %vm127, %v1025, 0
    %1176 = vmatprep.subr.mxu0 0.0
    %1177 = vmatpush1.msra.mxu0 %v112
    %1178 = vmatprep.subr.mxu0 0.0
    %1179 = vmatpush1.msra.mxu0 %v113
    %1180 = vmatprep.subr.mxu0 0.0
    %1181 = vmatpush1.msra.mxu0 %v114
    %1182 = vmatprep.subr.mxu0 0.0
    %1183 = vmatpush1.msra.mxu0 %v115
    %1184 = vmatprep.subr.mxu0 0.0
    %1185 = vmatpush1.msra.mxu0 %v116
    %1186 = vmatprep.subr.mxu0 0.0
    %1187 = vmatpush1.msra.mxu0 %v117
    %1188 = vmatprep.subr.mxu0 0.0
    %1189 = vmatpush1.msra.mxu0 %v118
    %1190 = vmatprep.subr.mxu0 0.0
    %1191 = vmatpush1.msra.mxu0 %v119
    %1192 = vmatprep.subr.mxu0 0.0
    %1193 = vmatpush1.msra.mxu0 0.0
    %1194 = vmatprep.subr.mxu0 0.0
    %1195 = vmatpush1.msra.mxu0 0.0
    %1196 = vmatprep.subr.mxu0 0.0
    %1197 = vmatpush1.msra.mxu0 0.0
    %1198 = vmatprep.subr.mxu0 0.0
    %1199 = vmatpush1.msra.mxu0 0.0
    %1200 = vmatprep.subr.mxu0 0.0
    %1201 = vmatpush1.msra.mxu0 0.0
    %1202 = vmatprep.subr.mxu0 0.0
    %1203 = vmatpush1.msra.mxu0 0.0
    %1204 = vmatprep.subr.mxu0 0.0
    %1205 = vmatpush1.msra.mxu0 0.0
    %1206 = vmatprep.subr.mxu0 0.0
    %1207 = vmatpush1.msra.mxu0 0.0
    %1208 = vmatprep.subr.mxu0 0.0
    %1209 = vmatpush1.msra.mxu0 0.0
    %1210 = vmatprep.subr.mxu0 0.0
    %1211 = vmatpush1.msra.mxu0 0.0
    %1212 = vmatprep.subr.mxu0 0.0
    %1213 = vmatpush1.msra.mxu0 0.0
    %1214 = vmatprep.subr.mxu0 0.0
    %1215 = vmatpush1.msra.mxu0 0.0
    %1216 = vmatprep.subr.mxu0 0.0
    %1217 = vmatpush1.msra.mxu0 0.0
    %1218 = vmatprep.subr.mxu0 0.0
    %1219 = vmatpush1.msra.mxu0 0.0
    %1220 = vmatprep.subr.mxu0 0.0
    %1221 = vmatpush1.msra.mxu0 0.0
    %1222 = vmatprep.subr.mxu0 0.0
    %1223 = vmatpush1.msra.mxu0 0.0
    %1224 = vmatprep.subr.mxu0 0.0
    %1225 = vmatpush1.msra.mxu0 0.0
    %1226 = vmatprep.subr.mxu0 0.0
    %1227 = vmatpush1.msra.mxu0 0.0
    %1228 = vmatprep.subr.mxu0 0.0
    %1229 = vmatpush1.msra.mxu0 0.0
    %1230 = vmatprep.subr.mxu0 0.0
    %1231 = vmatpush1.msra.mxu0 0.0
    %1232 = vmatprep.subr.mxu0 0.0
    %1233 = vmatpush1.msra.mxu0 0.0
    %1234 = vmatprep.subr.mxu0 0.0
    %1235 = vmatpush1.msra.mxu0 0.0
    %1236 = vmatprep.subr.mxu0 0.0
    %1237 = vmatpush1.msra.mxu0 0.0
    %1238 = vmatprep.subr.mxu0 0.0
    %1239 = vmatpush1.msra.mxu0 0.0
    %1240 = vmatprep.mubr.f32.mxu0 0.0
    %1241 = vmatmul.mubr.f32.gmra.mrb[0].mxu0 %v1174
    %v1242 = vpop.f32.mrb[0].mxu0
    %v1243 = vadd.f32 0.0, %v1242
    %v1244 = vpop.f32.mrb[0].mxu0
    %1245 = vdwg.mxu0
    %v1247 = vsel %vm127, %v1172, 0
    %1249 = vmatprep.subr.mxu0 0.0
    %1250 = vmatpush1.msra.mxu0 %v95
    %1251 = vmatprep.subr.mxu0 0.0
    %1252 = vmatpush1.msra.mxu0 %v96
    %1253 = vmatprep.subr.mxu0 0.0
    %1254 = vmatpush1.msra.mxu0 %v97
    %1255 = vmatprep.subr.mxu0 0.0
    %1256 = vmatpush1.msra.mxu0 %v98
    %1257 = vmatprep.subr.mxu0 0.0
    %1258 = vmatpush1.msra.mxu0 %v99
    %1259 = vmatprep.subr.mxu0 0.0
    %1260 = vmatpush1.msra.mxu0 %v100
    %1261 = vmatprep.subr.mxu0 0.0
    %1262 = vmatpush1.msra.mxu0 %v101
    %1263 = vmatprep.subr.mxu0 0.0
    %1264 = vmatpush1.msra.mxu0 %v102
    %1265 = vmatprep.subr.mxu0 0.0
    %1266 = vmatpush1.msra.mxu0 0.0
    %1267 = vmatprep.subr.mxu0 0.0
    %1268 = vmatpush1.msra.mxu0 0.0
    %1269 = vmatprep.subr.mxu0 0.0
    %1270 = vmatpush1.msra.mxu0 0.0
    %1271 = vmatprep.subr.mxu0 0.0
    %1272 = vmatpush1.msra.mxu0 0.0
    %1273 = vmatprep.subr.mxu0 0.0
    %1274 = vmatpush1.msra.mxu0 0.0
    %1275 = vmatprep.subr.mxu0 0.0
    %1276 = vmatpush1.msra.mxu0 0.0
    %1277 = vmatprep.subr.mxu0 0.0
    %1278 = vmatpush1.msra.mxu0 0.0
    %1279 = vmatprep.subr.mxu0 0.0
    %1280 = vmatpush1.msra.mxu0 0.0
    %1281 = vmatprep.subr.mxu0 0.0
    %1282 = vmatpush1.msra.mxu0 0.0
    %1283 = vmatprep.subr.mxu0 0.0
    %1284 = vmatpush1.msra.mxu0 0.0
    %1285 = vmatprep.subr.mxu0 0.0
    %1286 = vmatpush1.msra.mxu0 0.0
    %1287 = vmatprep.subr.mxu0 0.0
    %1288 = vmatpush1.msra.mxu0 0.0
    %1289 = vmatprep.subr.mxu0 0.0
    %1290 = vmatpush1.msra.mxu0 0.0
    %1291 = vmatprep.subr.mxu0 0.0
    %1292 = vmatpush1.msra.mxu0 0.0
    %1293 = vmatprep.subr.mxu0 0.0
    %1294 = vmatpush1.msra.mxu0 0.0
    %1295 = vmatprep.subr.mxu0 0.0
    %1296 = vmatpush1.msra.mxu0 0.0
    %1297 = vmatprep.subr.mxu0 0.0
    %1298 = vmatpush1.msra.mxu0 0.0
    %1299 = vmatprep.subr.mxu0 0.0
    %1300 = vmatpush1.msra.mxu0 0.0
    %1301 = vmatprep.subr.mxu0 0.0
    %1302 = vmatpush1.msra.mxu0 0.0
    %1303 = vmatprep.subr.mxu0 0.0
    %1304 = vmatpush1.msra.mxu0 0.0
    %1305 = vmatprep.subr.mxu0 0.0
    %1306 = vmatpush1.msra.mxu0 0.0
    %1307 = vmatprep.subr.mxu0 0.0
    %1308 = vmatpush1.msra.mxu0 0.0
    %1309 = vmatprep.subr.mxu0 0.0
    %1310 = vmatpush1.msra.mxu0 0.0
    %1311 = vmatprep.subr.mxu0 0.0
    %1312 = vmatpush1.msra.mxu0 0.0
    %1313 = vmatprep.mubr.f32.mxu0 0.0
    %1314 = vmatmul.mubr.f32.gmra.mrb[0].mxu0 %v1247
    %v1315 = vpop.f32.mrb[0].mxu0
    %v1316 = vadd.f32 %v1243, %v1315
    %v1317 = vpop.f32.mrb[0].mxu0
    %1318 = vdwg.mxu0
    %v1319 = vadd.f32 %v1316, %v432
    %v1320 = vmax.f32 %v1319, 0.0
    %s1321 = scalar_lea.vmem [#allocation2], 8
    %v1322 = vld [vmem:[%s1321] sm:$0x3]
    %1323 = vmatprep.subr.mxu0 0.0
    %1324 = vmatpush1.msra.mxu0 %v103
    %1325 = vmatprep.subr.mxu0 0.0
    %1326 = vmatpush1.msra.mxu0 %v104
    %1327 = vmatprep.subr.mxu0 0.0
    %1328 = vmatpush1.msra.mxu0 %v105
    %1329 = vmatprep.subr.mxu0 0.0
    %1330 = vmatpush1.msra.mxu0 %v106
    %1331 = vmatprep.subr.mxu0 0.0
    %1332 = vmatpush1.msra.mxu0 %v107
    %1333 = vmatprep.subr.mxu0 0.0
    %1334 = vmatpush1.msra.mxu0 %v108
    %1335 = vmatprep.subr.mxu0 0.0
    %1336 = vmatpush1.msra.mxu0 %v109
    %1337 = vmatprep.subr.mxu0 0.0
    %1338 = vmatpush1.msra.mxu0 %v110
    %1339 = vmatprep.subr.mxu0 0.0
    %1340 = vmatpush1.msra.mxu0 0.0
    %1341 = vmatprep.subr.mxu0 0.0
    %1342 = vmatpush1.msra.mxu0 0.0
    %1343 = vmatprep.subr.mxu0 0.0
    %1344 = vmatpush1.msra.mxu0 0.0
    %1345 = vmatprep.subr.mxu0 0.0
    %1346 = vmatpush1.msra.mxu0 0.0
    %1347 = vmatprep.subr.mxu0 0.0
    %1348 = vmatpush1.msra.mxu0 0.0
    %1349 = vmatprep.subr.mxu0 0.0
    %1350 = vmatpush1.msra.mxu0 0.0
    %1351 = vmatprep.subr.mxu0 0.0
    %1352 = vmatpush1.msra.mxu0 0.0
    %1353 = vmatprep.subr.mxu0 0.0
    %1354 = vmatpush1.msra.mxu0 0.0
    %1355 = vmatprep.subr.mxu0 0.0
    %1356 = vmatpush1.msra.mxu0 0.0
    %1357 = vmatprep.subr.mxu0 0.0
    %1358 = vmatpush1.msra.mxu0 0.0
    %1359 = vmatprep.subr.mxu0 0.0
    %1360 = vmatpush1.msra.mxu0 0.0
    %1361 = vmatprep.subr.mxu0 0.0
    %1362 = vmatpush1.msra.mxu0 0.0
    %1363 = vmatprep.subr.mxu0 0.0
    %1364 = vmatpush1.msra.mxu0 0.0
    %1365 = vmatprep.subr.mxu0 0.0
    %1366 = vmatpush1.msra.mxu0 0.0
    %1367 = vmatprep.subr.mxu0 0.0
    %1368 = vmatpush1.msra.mxu0 0.0
    %1369 = vmatprep.subr.mxu0 0.0
    %1370 = vmatpush1.msra.mxu0 0.0
    %1371 = vmatprep.subr.mxu0 0.0
    %1372 = vmatpush1.msra.mxu0 0.0
    %1373 = vmatprep.subr.mxu0 0.0
    %1374 = vmatpush1.msra.mxu0 0.0
    %1375 = vmatprep.subr.mxu0 0.0
    %1376 = vmatpush1.msra.mxu0 0.0
    %1377 = vmatprep.subr.mxu0 0.0
    %1378 = vmatpush1.msra.mxu0 0.0
    %1379 = vmatprep.subr.mxu0 0.0
    %1380 = vmatpush1.msra.mxu0 0.0
    %1381 = vmatprep.subr.mxu0 0.0
    %1382 = vmatpush1.msra.mxu0 0.0
    %1383 = vmatprep.subr.mxu0 0.0
    %1384 = vmatpush1.msra.mxu0 0.0
    %1385 = vmatprep.subr.mxu0 0.0
    %1386 = vmatpush1.msra.mxu0 0.0
    %1387 = vmatprep.mubr.f32.mxu0 0.0
    %1388 = vmatmul.mubr.f32.gmra.mrb[0].mxu0 %v1247
    %v1389 = vpop.f32.mrb[0].mxu0
    %v1390 = vadd.f32 0.0, %v1389
    %v1391 = vpop.f32.mrb[0].mxu0
    %1392 = vdwg.mxu0
    %v1394 = vsel %vm127, %v1322, 0
    %1396 = vmatprep.subr.mxu0 0.0
    %1397 = vmatpush1.msra.mxu0 %v86
    %1398 = vmatprep.subr.mxu0 0.0
    %1399 = vmatpush1.msra.mxu0 %v87
    %1400 = vmatprep.subr.mxu0 0.0
    %1401 = vmatpush1.msra.mxu0 %v88
    %1402 = vmatprep.subr.mxu0 0.0
    %1403 = vmatpush1.msra.mxu0 %v89
    %1404 = vmatprep.subr.mxu0 0.0
    %1405 = vmatpush1.msra.mxu0 %v90
    %1406 = vmatprep.subr.mxu0 0.0
    %1407 = vmatpush1.msra.mxu0 %v91
    %1408 = vmatprep.subr.mxu0 0.0
    %1409 = vmatpush1.msra.mxu0 %v92
    %1410 = vmatprep.subr.mxu0 0.0
    %1411 = vmatpush1.msra.mxu0 %v93
    %1412 = vmatprep.subr.mxu0 0.0
    %1413 = vmatpush1.msra.mxu0 0.0
    %1414 = vmatprep.subr.mxu0 0.0
    %1415 = vmatpush1.msra.mxu0 0.0
    %1416 = vmatprep.subr.mxu0 0.0
    %1417 = vmatpush1.msra.mxu0 0.0
    %1418 = vmatprep.subr.mxu0 0.0
    %1419 = vmatpush1.msra.mxu0 0.0
    %1420 = vmatprep.subr.mxu0 0.0
    %1421 = vmatpush1.msra.mxu0 0.0
    %1422 = vmatprep.subr.mxu0 0.0
    %1423 = vmatpush1.msra.mxu0 0.0
    %1424 = vmatprep.subr.mxu0 0.0
    %1425 = vmatpush1.msra.mxu0 0.0
    %1426 = vmatprep.subr.mxu0 0.0
    %1427 = vmatpush1.msra.mxu0 0.0
    %1428 = vmatprep.subr.mxu0 0.0
    %1429 = vmatpush1.msra.mxu0 0.0
    %1430 = vmatprep.subr.mxu0 0.0
    %1431 = vmatpush1.msra.mxu0 0.0
    %1432 = vmatprep.subr.mxu0 0.0
    %1433 = vmatpush1.msra.mxu0 0.0
    %1434 = vmatprep.subr.mxu0 0.0
    %1435 = vmatpush1.msra.mxu0 0.0
    %1436 = vmatprep.subr.mxu0 0.0
    %1437 = vmatpush1.msra.mxu0 0.0
    %1438 = vmatprep.subr.mxu0 0.0
    %1439 = vmatpush1.msra.mxu0 0.0
    %1440 = vmatprep.subr.mxu0 0.0
    %1441 = vmatpush1.msra.mxu0 0.0
    %1442 = vmatprep.subr.mxu0 0.0
    %1443 = vmatpush1.msra.mxu0 0.0
    %1444 = vmatprep.subr.mxu0 0.0
    %1445 = vmatpush1.msra.mxu0 0.0
    %1446 = vmatprep.subr.mxu0 0.0
    %1447 = vmatpush1.msra.mxu0 0.0
    %1448 = vmatprep.subr.mxu0 0.0
    %1449 = vmatpush1.msra.mxu0 0.0
    %1450 = vmatprep.subr.mxu0 0.0
    %1451 = vmatpush1.msra.mxu0 0.0
    %1452 = vmatprep.subr.mxu0 0.0
    %1453 = vmatpush1.msra.mxu0 0.0
    %1454 = vmatprep.subr.mxu0 0.0
    %1455 = vmatpush1.msra.mxu0 0.0
    %1456 = vmatprep.subr.mxu0 0.0
    %1457 = vmatpush1.msra.mxu0 0.0
    %1458 = vmatprep.subr.mxu0 0.0
    %1459 = vmatpush1.msra.mxu0 0.0
    %1460 = vmatprep.mubr.f32.mxu0 0.0
    %1461 = vmatmul.mubr.f32.gmra.mrb[0].mxu0 %v1394
    %v1462 = vpop.f32.mrb[0].mxu0
    %v1463 = vadd.f32 %v1390, %v1462
    %v1464 = vpop.f32.mrb[0].mxu0
    %1465 = vdwg.mxu0
    %v1466 = vadd.f32 %v1463, %v278
    %v1467 = vmax.f32 %v1466, 0.0
    %v1469 = vsel %vm127, %v1320, 0
    %1471 = vmatprep.subr.mxu0 0.0
    %1472 = vmatpush1.msra.mxu0 %v112
    %1473 = vmatprep.subr.mxu0 0.0
    %1474 = vmatpush1.msra.mxu0 %v113
    %1475 = vmatprep.subr.mxu0 0.0
    %1476 = vmatpush1.msra.mxu0 %v114
    %1477 = vmatprep.subr.mxu0 0.0
    %1478 = vmatpush1.msra.mxu0 %v115
    %1479 = vmatprep.subr.mxu0 0.0
    %1480 = vmatpush1.msra.mxu0 %v116
    %1481 = vmatprep.subr.mxu0 0.0
    %1482 = vmatpush1.msra.mxu0 %v117
    %1483 = vmatprep.subr.mxu0 0.0
    %1484 = vmatpush1.msra.mxu0 %v118
    %1485 = vmatprep.subr.mxu0 0.0
    %1486 = vmatpush1.msra.mxu0 %v119
    %1487 = vmatprep.subr.mxu0 0.0
    %1488 = vmatpush1.msra.mxu0 0.0
    %1489 = vmatprep.subr.mxu0 0.0
    %1490 = vmatpush1.msra.mxu0 0.0
    %1491 = vmatprep.subr.mxu0 0.0
    %1492 = vmatpush1.msra.mxu0 0.0
    %1493 = vmatprep.subr.mxu0 0.0
    %1494 = vmatpush1.msra.mxu0 0.0
    %1495 = vmatprep.subr.mxu0 0.0
    %1496 = vmatpush1.msra.mxu0 0.0
    %1497 = vmatprep.subr.mxu0 0.0
    %1498 = vmatpush1.msra.mxu0 0.0
    %1499 = vmatprep.subr.mxu0 0.0
    %1500 = vmatpush1.msra.mxu0 0.0
    %1501 = vmatprep.subr.mxu0 0.0
    %1502 = vmatpush1.msra.mxu0 0.0
    %1503 = vmatprep.subr.mxu0 0.0
    %1504 = vmatpush1.msra.mxu0 0.0
    %1505 = vmatprep.subr.mxu0 0.0
    %1506 = vmatpush1.msra.mxu0 0.0
    %1507 = vmatprep.subr.mxu0 0.0
    %1508 = vmatpush1.msra.mxu0 0.0
    %1509 = vmatprep.subr.mxu0 0.0
    %1510 = vmatpush1.msra.mxu0 0.0
    %1511 = vmatprep.subr.mxu0 0.0
    %1512 = vmatpush1.msra.mxu0 0.0
    %1513 = vmatprep.subr.mxu0 0.0
    %1514 = vmatpush1.msra.mxu0 0.0
    %1515 = vmatprep.subr.mxu0 0.0
    %1516 = vmatpush1.msra.mxu0 0.0
    %1517 = vmatprep.subr.mxu0 0.0
    %1518 = vmatpush1.msra.mxu0 0.0
    %1519 = vmatprep.subr.mxu0 0.0
    %1520 = vmatpush1.msra.mxu0 0.0
    %1521 = vmatprep.subr.mxu0 0.0
    %1522 = vmatpush1.msra.mxu0 0.0
    %1523 = vmatprep.subr.mxu0 0.0
    %1524 = vmatpush1.msra.mxu0 0.0
    %1525 = vmatprep.subr.mxu0 0.0
    %1526 = vmatpush1.msra.mxu0 0.0
    %1527 = vmatprep.subr.mxu0 0.0
    %1528 = vmatpush1.msra.mxu0 0.0
    %1529 = vmatprep.subr.mxu0 0.0
    %1530 = vmatpush1.msra.mxu0 0.0
    %1531 = vmatprep.subr.mxu0 0.0
    %1532 = vmatpush1.msra.mxu0 0.0
    %1533 = vmatprep.subr.mxu0 0.0
    %1534 = vmatpush1.msra.mxu0 0.0
    %1535 = vmatprep.mubr.f32.mxu0 0.0
    %1536 = vmatmul.mubr.f32.gmra.mrb[0].mxu0 %v1469
    %v1537 = vpop.f32.mrb[0].mxu0
    %v1538 = vadd.f32 0.0, %v1537
    %v1539 = vpop.f32.mrb[0].mxu0
    %1540 = vdwg.mxu0
    %v1542 = vsel %vm127, %v1467, 0
    %1544 = vmatprep.subr.mxu0 0.0
    %1545 = vmatpush1.msra.mxu0 %v95
    %1546 = vmatprep.subr.mxu0 0.0
    %1547 = vmatpush1.msra.mxu0 %v96
    %1548 = vmatprep.subr.mxu0 0.0
    %1549 = vmatpush1.msra.mxu0 %v97
    %1550 = vmatprep.subr.mxu0 0.0
    %1551 = vmatpush1.msra.mxu0 %v98
    %1552 = vmatprep.subr.mxu0 0.0
    %1553 = vmatpush1.msra.mxu0 %v99
    %1554 = vmatprep.subr.mxu0 0.0
    %1555 = vmatpush1.msra.mxu0 %v100
    %1556 = vmatprep.subr.mxu0 0.0
    %1557 = vmatpush1.msra.mxu0 %v101
    %1558 = vmatprep.subr.mxu0 0.0
    %1559 = vmatpush1.msra.mxu0 %v102
    %1560 = vmatprep.subr.mxu0 0.0
    %1561 = vmatpush1.msra.mxu0 0.0
    %1562 = vmatprep.subr.mxu0 0.0
    %1563 = vmatpush1.msra.mxu0 0.0
    %1564 = vmatprep.subr.mxu0 0.0
    %1565 = vmatpush1.msra.mxu0 0.0
    %1566 = vmatprep.subr.mxu0 0.0
    %1567 = vmatpush1.msra.mxu0 0.0
    %1568 = vmatprep.subr.mxu0 0.0
    %1569 = vmatpush1.msra.mxu0 0.0
    %1570 = vmatprep.subr.mxu0 0.0
    %1571 = vmatpush1.msra.mxu0 0.0
    %1572 = vmatprep.subr.mxu0 0.0
    %1573 = vmatpush1.msra.mxu0 0.0
    %1574 = vmatprep.subr.mxu0 0.0
    %1575 = vmatpush1.msra.mxu0 0.0
    %1576 = vmatprep.subr.mxu0 0.0
    %1577 = vmatpush1.msra.mxu0 0.0
    %1578 = vmatprep.subr.mxu0 0.0
    %1579 = vmatpush1.msra.mxu0 0.0
    %1580 = vmatprep.subr.mxu0 0.0
    %1581 = vmatpush1.msra.mxu0 0.0
    %1582 = vmatprep.subr.mxu0 0.0
    %1583 = vmatpush1.msra.mxu0 0.0
    %1584 = vmatprep.subr.mxu0 0.0
    %1585 = vmatpush1.msra.mxu0 0.0
    %1586 = vmatprep.subr.mxu0 0.0
    %1587 = vmatpush1.msra.mxu0 0.0
    %1588 = vmatprep.subr.mxu0 0.0
    %1589 = vmatpush1.msra.mxu0 0.0
    %1590 = vmatprep.subr.mxu0 0.0
    %1591 = vmatpush1.msra.mxu0 0.0
    %1592 = vmatprep.subr.mxu0 0.0
    %1593 = vmatpush1.msra.mxu0 0.0
    %1594 = vmatprep.subr.mxu0 0.0
    %1595 = vmatpush1.msra.mxu0 0.0
    %1596 = vmatprep.subr.mxu0 0.0
    %1597 = vmatpush1.msra.mxu0 0.0
    %1598 = vmatprep.subr.mxu0 0.0
    %1599 = vmatpush1.msra.mxu0 0.0
    %1600 = vmatprep.subr.mxu0 0.0
    %1601 = vmatpush1.msra.mxu0 0.0
    %1602 = vmatprep.subr.mxu0 0.0
    %1603 = vmatpush1.msra.mxu0 0.0
    %1604 = vmatprep.subr.mxu0 0.0
    %1605 = vmatpush1.msra.mxu0 0.0
    %1606 = vmatprep.subr.mxu0 0.0
    %1607 = vmatpush1.msra.mxu0 0.0
    %1608 = vmatprep.mubr.f32.mxu0 0.0
    %1609 = vmatmul.mubr.f32.gmra.mrb[0].mxu0 %v1542
    %v1610 = vpop.f32.mrb[0].mxu0
    %v1611 = vadd.f32 %v1538, %v1610
    %v1612 = vpop.f32.mrb[0].mxu0
    %1613 = vdwg.mxu0
    %v1614 = vadd.f32 %v1611, %v432
    %v1615 = vmax.f32 %v1614, 0.0
    %s1616 = scalar_lea.vmem [#allocation2], 10
    %v1617 = vld [vmem:[%s1616] sm:$0x3]
    %1618 = vmatprep.subr.mxu0 0.0
    %1619 = vmatpush1.msra.mxu0 %v103
    %1620 = vmatprep.subr.mxu0 0.0
    %1621 = vmatpush1.msra.mxu0 %v104
    %1622 = vmatprep.subr.mxu0 0.0
    %1623 = vmatpush1.msra.mxu0 %v105
    %1624 = vmatprep.subr.mxu0 0.0
    %1625 = vmatpush1.msra.mxu0 %v106
    %1626 = vmatprep.subr.mxu0 0.0
    %1627 = vmatpush1.msra.mxu0 %v107
    %1628 = vmatprep.subr.mxu0 0.0
    %1629 = vmatpush1.msra.mxu0 %v108
    %1630 = vmatprep.subr.mxu0 0.0
    %1631 = vmatpush1.msra.mxu0 %v109
    %1632 = vmatprep.subr.mxu0 0.0
    %1633 = vmatpush1.msra.mxu0 %v110
    %1634 = vmatprep.subr.mxu0 0.0
    %1635 = vmatpush1.msra.mxu0 0.0
    %1636 = vmatprep.subr.mxu0 0.0
    %1637 = vmatpush1.msra.mxu0 0.0
    %1638 = vmatprep.subr.mxu0 0.0
    %1639 = vmatpush1.msra.mxu0 0.0
    %1640 = vmatprep.subr.mxu0 0.0
    %1641 = vmatpush1.msra.mxu0 0.0
    %1642 = vmatprep.subr.mxu0 0.0
    %1643 = vmatpush1.msra.mxu0 0.0
    %1644 = vmatprep.subr.mxu0 0.0
    %1645 = vmatpush1.msra.mxu0 0.0
    %1646 = vmatprep.subr.mxu0 0.0
    %1647 = vmatpush1.msra.mxu0 0.0
    %1648 = vmatprep.subr.mxu0 0.0
    %1649 = vmatpush1.msra.mxu0 0.0
    %1650 = vmatprep.subr.mxu0 0.0
    %1651 = vmatpush1.msra.mxu0 0.0
    %1652 = vmatprep.subr.mxu0 0.0
    %1653 = vmatpush1.msra.mxu0 0.0
    %1654 = vmatprep.subr.mxu0 0.0
    %1655 = vmatpush1.msra.mxu0 0.0
    %1656 = vmatprep.subr.mxu0 0.0
    %1657 = vmatpush1.msra.mxu0 0.0
    %1658 = vmatprep.subr.mxu0 0.0
    %1659 = vmatpush1.msra.mxu0 0.0
    %1660 = vmatprep.subr.mxu0 0.0
    %1661 = vmatpush1.msra.mxu0 0.0
    %1662 = vmatprep.subr.mxu0 0.0
    %1663 = vmatpush1.msra.mxu0 0.0
    %1664 = vmatprep.subr.mxu0 0.0
    %1665 = vmatpush1.msra.mxu0 0.0
    %1666 = vmatprep.subr.mxu0 0.0
    %1667 = vmatpush1.msra.mxu0 0.0
    %1668 = vmatprep.subr.mxu0 0.0
    %1669 = vmatpush1.msra.mxu0 0.0
    %1670 = vmatprep.subr.mxu0 0.0
    %1671 = vmatpush1.msra.mxu0 0.0
    %1672 = vmatprep.subr.mxu0 0.0
    %1673 = vmatpush1.msra.mxu0 0.0
    %1674 = vmatprep.subr.mxu0 0.0
    %1675 = vmatpush1.msra.mxu0 0.0
    %1676 = vmatprep.subr.mxu0 0.0
    %1677 = vmatpush1.msra.mxu0 0.0
    %1678 = vmatprep.subr.mxu0 0.0
    %1679 = vmatpush1.msra.mxu0 0.0
    %1680 = vmatprep.subr.mxu0 0.0
    %1681 = vmatpush1.msra.mxu0 0.0
    %1682 = vmatprep.mubr.f32.mxu0 0.0
    %1683 = vmatmul.mubr.f32.gmra.mrb[0].mxu0 %v1542
    %v1684 = vpop.f32.mrb[0].mxu0
    %v1685 = vadd.f32 0.0, %v1684
    %v1686 = vpop.f32.mrb[0].mxu0
    %1687 = vdwg.mxu0
    %v1689 = vsel %vm127, %v1617, 0
    %1691 = vmatprep.subr.mxu0 0.0
    %1692 = vmatpush1.msra.mxu0 %v86
    %1693 = vmatprep.subr.mxu0 0.0
    %1694 = vmatpush1.msra.mxu0 %v87
    %1695 = vmatprep.subr.mxu0 0.0
    %1696 = vmatpush1.msra.mxu0 %v88
    %1697 = vmatprep.subr.mxu0 0.0
    %1698 = vmatpush1.msra.mxu0 %v89
    %1699 = vmatprep.subr.mxu0 0.0
    %1700 = vmatpush1.msra.mxu0 %v90
    %1701 = vmatprep.subr.mxu0 0.0
    %1702 = vmatpush1.msra.mxu0 %v91
    %1703 = vmatprep.subr.mxu0 0.0
    %1704 = vmatpush1.msra.mxu0 %v92
    %1705 = vmatprep.subr.mxu0 0.0
    %1706 = vmatpush1.msra.mxu0 %v93
    %1707 = vmatprep.subr.mxu0 0.0
    %1708 = vmatpush1.msra.mxu0 0.0
    %1709 = vmatprep.subr.mxu0 0.0
    %1710 = vmatpush1.msra.mxu0 0.0
    %1711 = vmatprep.subr.mxu0 0.0
    %1712 = vmatpush1.msra.mxu0 0.0
    %1713 = vmatprep.subr.mxu0 0.0
    %1714 = vmatpush1.msra.mxu0 0.0
    %1715 = vmatprep.subr.mxu0 0.0
    %1716 = vmatpush1.msra.mxu0 0.0
    %1717 = vmatprep.subr.mxu0 0.0
    %1718 = vmatpush1.msra.mxu0 0.0
    %1719 = vmatprep.subr.mxu0 0.0
    %1720 = vmatpush1.msra.mxu0 0.0
    %1721 = vmatprep.subr.mxu0 0.0
    %1722 = vmatpush1.msra.mxu0 0.0
    %1723 = vmatprep.subr.mxu0 0.0
    %1724 = vmatpush1.msra.mxu0 0.0
    %1725 = vmatprep.subr.mxu0 0.0
    %1726 = vmatpush1.msra.mxu0 0.0
    %1727 = vmatprep.subr.mxu0 0.0
    %1728 = vmatpush1.msra.mxu0 0.0
    %1729 = vmatprep.subr.mxu0 0.0
    %1730 = vmatpush1.msra.mxu0 0.0
    %1731 = vmatprep.subr.mxu0 0.0
    %1732 = vmatpush1.msra.mxu0 0.0
    %1733 = vmatprep.subr.mxu0 0.0
    %1734 = vmatpush1.msra.mxu0 0.0
    %1735 = vmatprep.subr.mxu0 0.0
    %1736 = vmatpush1.msra.mxu0 0.0
    %1737 = vmatprep.subr.mxu0 0.0
    %1738 = vmatpush1.msra.mxu0 0.0
    %1739 = vmatprep.subr.mxu0 0.0
    %1740 = vmatpush1.msra.mxu0 0.0
    %1741 = vmatprep.subr.mxu0 0.0
    %1742 = vmatpush1.msra.mxu0 0.0
    %1743 = vmatprep.subr.mxu0 0.0
    %1744 = vmatpush1.msra.mxu0 0.0
    %1745 = vmatprep.subr.mxu0 0.0
    %1746 = vmatpush1.msra.mxu0 0.0
    %1747 = vmatprep.subr.mxu0 0.0
    %1748 = vmatpush1.msra.mxu0 0.0
    %1749 = vmatprep.subr.mxu0 0.0
    %1750 = vmatpush1.msra.mxu0 0.0
    %1751 = vmatprep.subr.mxu0 0.0
    %1752 = vmatpush1.msra.mxu0 0.0
    %1753 = vmatprep.subr.mxu0 0.0
    %1754 = vmatpush1.msra.mxu0 0.0
    %1755 = vmatprep.mubr.f32.mxu0 0.0
    %1756 = vmatmul.mubr.f32.gmra.mrb[0].mxu0 %v1689
    %v1757 = vpop.f32.mrb[0].mxu0
    %v1758 = vadd.f32 %v1685, %v1757
    %v1759 = vpop.f32.mrb[0].mxu0
    %1760 = vdwg.mxu0
    %v1761 = vadd.f32 %v1758, %v278
    %v1762 = vmax.f32 %v1761, 0.0
    %v1764 = vsel %vm127, %v1615, 0
    %1766 = vmatprep.subr.mxu0 0.0
    %1767 = vmatpush1.msra.mxu0 %v112
    %1768 = vmatprep.subr.mxu0 0.0
    %1769 = vmatpush1.msra.mxu0 %v113
    %1770 = vmatprep.subr.mxu0 0.0
    %1771 = vmatpush1.msra.mxu0 %v114
    %1772 = vmatprep.subr.mxu0 0.0
    %1773 = vmatpush1.msra.mxu0 %v115
    %1774 = vmatprep.subr.mxu0 0.0
    %1775 = vmatpush1.msra.mxu0 %v116
    %1776 = vmatprep.subr.mxu0 0.0
    %1777 = vmatpush1.msra.mxu0 %v117
    %1778 = vmatprep.subr.mxu0 0.0
    %1779 = vmatpush1.msra.mxu0 %v118
    %1780 = vmatprep.subr.mxu0 0.0
    %1781 = vmatpush1.msra.mxu0 %v119
    %1782 = vmatprep.subr.mxu0 0.0
    %1783 = vmatpush1.msra.mxu0 0.0
    %1784 = vmatprep.subr.mxu0 0.0
    %1785 = vmatpush1.msra.mxu0 0.0
    %1786 = vmatprep.subr.mxu0 0.0
    %1787 = vmatpush1.msra.mxu0 0.0
    %1788 = vmatprep.subr.mxu0 0.0
    %1789 = vmatpush1.msra.mxu0 0.0
    %1790 = vmatprep.subr.mxu0 0.0
    %1791 = vmatpush1.msra.mxu0 0.0
    %1792 = vmatprep.subr.mxu0 0.0
    %1793 = vmatpush1.msra.mxu0 0.0
    %1794 = vmatprep.subr.mxu0 0.0
    %1795 = vmatpush1.msra.mxu0 0.0
    %1796 = vmatprep.subr.mxu0 0.0
    %1797 = vmatpush1.msra.mxu0 0.0
    %1798 = vmatprep.subr.mxu0 0.0
    %1799 = vmatpush1.msra.mxu0 0.0
    %1800 = vmatprep.subr.mxu0 0.0
    %1801 = vmatpush1.msra.mxu0 0.0
    %1802 = vmatprep.subr.mxu0 0.0
    %1803 = vmatpush1.msra.mxu0 0.0
    %1804 = vmatprep.subr.mxu0 0.0
    %1805 = vmatpush1.msra.mxu0 0.0
    %1806 = vmatprep.subr.mxu0 0.0
    %1807 = vmatpush1.msra.mxu0 0.0
    %1808 = vmatprep.subr.mxu0 0.0
    %1809 = vmatpush1.msra.mxu0 0.0
    %1810 = vmatprep.subr.mxu0 0.0
    %1811 = vmatpush1.msra.mxu0 0.0
    %1812 = vmatprep.subr.mxu0 0.0
    %1813 = vmatpush1.msra.mxu0 0.0
    %1814 = vmatprep.subr.mxu0 0.0
    %1815 = vmatpush1.msra.mxu0 0.0
    %1816 = vmatprep.subr.mxu0 0.0
    %1817 = vmatpush1.msra.mxu0 0.0
    %1818 = vmatprep.subr.mxu0 0.0
    %1819 = vmatpush1.msra.mxu0 0.0
    %1820 = vmatprep.subr.mxu0 0.0
    %1821 = vmatpush1.msra.mxu0 0.0
    %1822 = vmatprep.subr.mxu0 0.0
    %1823 = vmatpush1.msra.mxu0 0.0
    %1824 = vmatprep.subr.mxu0 0.0
    %1825 = vmatpush1.msra.mxu0 0.0
    %1826 = vmatprep.subr.mxu0 0.0
    %1827 = vmatpush1.msra.mxu0 0.0
    %1828 = vmatprep.subr.mxu0 0.0
    %1829 = vmatpush1.msra.mxu0 0.0
    %1830 = vmatprep.mubr.f32.mxu0 0.0
    %1831 = vmatmul.mubr.f32.gmra.mrb[0].mxu0 %v1764
    %v1832 = vpop.f32.mrb[0].mxu0
    %v1833 = vadd.f32 0.0, %v1832
    %v1834 = vpop.f32.mrb[0].mxu0
    %1835 = vdwg.mxu0
    %v1837 = vsel %vm127, %v1762, 0
    %1839 = vmatprep.subr.mxu0 0.0
    %1840 = vmatpush1.msra.mxu0 %v95
    %1841 = vmatprep.subr.mxu0 0.0
    %1842 = vmatpush1.msra.mxu0 %v96
    %1843 = vmatprep.subr.mxu0 0.0
    %1844 = vmatpush1.msra.mxu0 %v97
    %1845 = vmatprep.subr.mxu0 0.0
    %1846 = vmatpush1.msra.mxu0 %v98
    %1847 = vmatprep.subr.mxu0 0.0
    %1848 = vmatpush1.msra.mxu0 %v99
    %1849 = vmatprep.subr.mxu0 0.0
    %1850 = vmatpush1.msra.mxu0 %v100
    %1851 = vmatprep.subr.mxu0 0.0
    %1852 = vmatpush1.msra.mxu0 %v101
    %1853 = vmatprep.subr.mxu0 0.0
    %1854 = vmatpush1.msra.mxu0 %v102
    %1855 = vmatprep.subr.mxu0 0.0
    %1856 = vmatpush1.msra.mxu0 0.0
    %1857 = vmatprep.subr.mxu0 0.0
    %1858 = vmatpush1.msra.mxu0 0.0
    %1859 = vmatprep.subr.mxu0 0.0
    %1860 = vmatpush1.msra.mxu0 0.0
    %1861 = vmatprep.subr.mxu0 0.0
    %1862 = vmatpush1.msra.mxu0 0.0
    %1863 = vmatprep.subr.mxu0 0.0
    %1864 = vmatpush1.msra.mxu0 0.0
    %1865 = vmatprep.subr.mxu0 0.0
    %1866 = vmatpush1.msra.mxu0 0.0
    %1867 = vmatprep.subr.mxu0 0.0
    %1868 = vmatpush1.msra.mxu0 0.0
    %1869 = vmatprep.subr.mxu0 0.0
    %1870 = vmatpush1.msra.mxu0 0.0
    %1871 = vmatprep.subr.mxu0 0.0
    %1872 = vmatpush1.msra.mxu0 0.0
    %1873 = vmatprep.subr.mxu0 0.0
    %1874 = vmatpush1.msra.mxu0 0.0
    %1875 = vmatprep.subr.mxu0 0.0
    %1876 = vmatpush1.msra.mxu0 0.0
    %1877 = vmatprep.subr.mxu0 0.0
    %1878 = vmatpush1.msra.mxu0 0.0
    %1879 = vmatprep.subr.mxu0 0.0
    %1880 = vmatpush1.msra.mxu0 0.0
    %1881 = vmatprep.subr.mxu0 0.0
    %1882 = vmatpush1.msra.mxu0 0.0
    %1883 = vmatprep.subr.mxu0 0.0
    %1884 = vmatpush1.msra.mxu0 0.0
    %1885 = vmatprep.subr.mxu0 0.0
    %1886 = vmatpush1.msra.mxu0 0.0
    %1887 = vmatprep.subr.mxu0 0.0
    %1888 = vmatpush1.msra.mxu0 0.0
    %1889 = vmatprep.subr.mxu0 0.0
    %1890 = vmatpush1.msra.mxu0 0.0
    %1891 = vmatprep.subr.mxu0 0.0
    %1892 = vmatpush1.msra.mxu0 0.0
    %1893 = vmatprep.subr.mxu0 0.0
    %1894 = vmatpush1.msra.mxu0 0.0
    %1895 = vmatprep.subr.mxu0 0.0
    %1896 = vmatpush1.msra.mxu0 0.0
    %1897 = vmatprep.subr.mxu0 0.0
    %1898 = vmatpush1.msra.mxu0 0.0
    %1899 = vmatprep.subr.mxu0 0.0
    %1900 = vmatpush1.msra.mxu0 0.0
    %1901 = vmatprep.subr.mxu0 0.0
    %1902 = vmatpush1.msra.mxu0 0.0
    %1903 = vmatprep.mubr.f32.mxu0 0.0
    %1904 = vmatmul.mubr.f32.gmra.mrb[0].mxu0 %v1837
    %v1905 = vpop.f32.mrb[0].mxu0
    %v1906 = vadd.f32 %v1833, %v1905
    %v1907 = vpop.f32.mrb[0].mxu0
    %1908 = vdwg.mxu0
    %v1909 = vadd.f32 %v1906, %v432
    %v1910 = vmax.f32 %v1909, 0.0
    %s1911 = scalar_lea.vmem [#allocation2], 12
    %v1912 = vld [vmem:[%s1911] sm:$0x3]
    %1913 = vmatprep.subr.mxu0 0.0
    %1914 = vmatpush1.msra.mxu0 %v103
    %1915 = vmatprep.subr.mxu0 0.0
    %1916 = vmatpush1.msra.mxu0 %v104
    %1917 = vmatprep.subr.mxu0 0.0
    %1918 = vmatpush1.msra.mxu0 %v105
    %1919 = vmatprep.subr.mxu0 0.0
    %1920 = vmatpush1.msra.mxu0 %v106
    %1921 = vmatprep.subr.mxu0 0.0
    %1922 = vmatpush1.msra.mxu0 %v107
    %1923 = vmatprep.subr.mxu0 0.0
    %1924 = vmatpush1.msra.mxu0 %v108
    %1925 = vmatprep.subr.mxu0 0.0
    %1926 = vmatpush1.msra.mxu0 %v109
    %1927 = vmatprep.subr.mxu0 0.0
    %1928 = vmatpush1.msra.mxu0 %v110
    %1929 = vmatprep.subr.mxu0 0.0
    %1930 = vmatpush1.msra.mxu0 0.0
    %1931 = vmatprep.subr.mxu0 0.0
    %1932 = vmatpush1.msra.mxu0 0.0
    %1933 = vmatprep.subr.mxu0 0.0
    %1934 = vmatpush1.msra.mxu0 0.0
    %1935 = vmatprep.subr.mxu0 0.0
    %1936 = vmatpush1.msra.mxu0 0.0
    %1937 = vmatprep.subr.mxu0 0.0
    %1938 = vmatpush1.msra.mxu0 0.0
    %1939 = vmatprep.subr.mxu0 0.0
    %1940 = vmatpush1.msra.mxu0 0.0
    %1941 = vmatprep.subr.mxu0 0.0
    %1942 = vmatpush1.msra.mxu0 0.0
    %1943 = vmatprep.subr.mxu0 0.0
    %1944 = vmatpush1.msra.mxu0 0.0
    %1945 = vmatprep.subr.mxu0 0.0
    %1946 = vmatpush1.msra.mxu0 0.0
    %1947 = vmatprep.subr.mxu0 0.0
    %1948 = vmatpush1.msra.mxu0 0.0
    %1949 = vmatprep.subr.mxu0 0.0
    %1950 = vmatpush1.msra.mxu0 0.0
    %1951 = vmatprep.subr.mxu0 0.0
    %1952 = vmatpush1.msra.mxu0 0.0
    %1953 = vmatprep.subr.mxu0 0.0
    %1954 = vmatpush1.msra.mxu0 0.0
    %1955 = vmatprep.subr.mxu0 0.0
    %1956 = vmatpush1.msra.mxu0 0.0
    %1957 = vmatprep.subr.mxu0 0.0
    %1958 = vmatpush1.msra.mxu0 0.0
    %1959 = vmatprep.subr.mxu0 0.0
    %1960 = vmatpush1.msra.mxu0 0.0
    %1961 = vmatprep.subr.mxu0 0.0
    %1962 = vmatpush1.msra.mxu0 0.0
    %1963 = vmatprep.subr.mxu0 0.0
    %1964 = vmatpush1.msra.mxu0 0.0
    %1965 = vmatprep.subr.mxu0 0.0
    %1966 = vmatpush1.msra.mxu0 0.0
    %1967 = vmatprep.subr.mxu0 0.0
    %1968 = vmatpush1.msra.mxu0 0.0
    %1969 = vmatprep.subr.mxu0 0.0
    %1970 = vmatpush1.msra.mxu0 0.0
    %1971 = vmatprep.subr.mxu0 0.0
    %1972 = vmatpush1.msra.mxu0 0.0
    %1973 = vmatprep.subr.mxu0 0.0
    %1974 = vmatpush1.msra.mxu0 0.0
    %1975 = vmatprep.subr.mxu0 0.0
    %1976 = vmatpush1.msra.mxu0 0.0
    %1977 = vmatprep.mubr.f32.mxu0 0.0
    %1978 = vmatmul.mubr.f32.gmra.mrb[0].mxu0 %v1837
    %v1979 = vpop.f32.mrb[0].mxu0
    %v1980 = vadd.f32 0.0, %v1979
    %v1981 = vpop.f32.mrb[0].mxu0
    %1982 = vdwg.mxu0
    %v1984 = vsel %vm127, %v1912, 0
    %1986 = vmatprep.subr.mxu0 0.0
    %1987 = vmatpush1.msra.mxu0 %v86
    %1988 = vmatprep.subr.mxu0 0.0
    %1989 = vmatpush1.msra.mxu0 %v87
    %1990 = vmatprep.subr.mxu0 0.0
    %1991 = vmatpush1.msra.mxu0 %v88
    %1992 = vmatprep.subr.mxu0 0.0
    %1993 = vmatpush1.msra.mxu0 %v89
    %1994 = vmatprep.subr.mxu0 0.0
    %1995 = vmatpush1.msra.mxu0 %v90
    %1996 = vmatprep.subr.mxu0 0.0
    %1997 = vmatpush1.msra.mxu0 %v91
    %1998 = vmatprep.subr.mxu0 0.0
    %1999 = vmatpush1.msra.mxu0 %v92
    %2000 = vmatprep.subr.mxu0 0.0
    %2001 = vmatpush1.msra.mxu0 %v93
    %2002 = vmatprep.subr.mxu0 0.0
    %2003 = vmatpush1.msra.mxu0 0.0
    %2004 = vmatprep.subr.mxu0 0.0
    %2005 = vmatpush1.msra.mxu0 0.0
    %2006 = vmatprep.subr.mxu0 0.0
    %2007 = vmatpush1.msra.mxu0 0.0
    %2008 = vmatprep.subr.mxu0 0.0
    %2009 = vmatpush1.msra.mxu0 0.0
    %2010 = vmatprep.subr.mxu0 0.0
    %2011 = vmatpush1.msra.mxu0 0.0
    %2012 = vmatprep.subr.mxu0 0.0
    %2013 = vmatpush1.msra.mxu0 0.0
    %2014 = vmatprep.subr.mxu0 0.0
    %2015 = vmatpush1.msra.mxu0 0.0
    %2016 = vmatprep.subr.mxu0 0.0
    %2017 = vmatpush1.msra.mxu0 0.0
    %2018 = vmatprep.subr.mxu0 0.0
    %2019 = vmatpush1.msra.mxu0 0.0
    %2020 = vmatprep.subr.mxu0 0.0
    %2021 = vmatpush1.msra.mxu0 0.0
    %2022 = vmatprep.subr.mxu0 0.0
    %2023 = vmatpush1.msra.mxu0 0.0
    %2024 = vmatprep.subr.mxu0 0.0
    %2025 = vmatpush1.msra.mxu0 0.0
    %2026 = vmatprep.subr.mxu0 0.0
    %2027 = vmatpush1.msra.mxu0 0.0
    %2028 = vmatprep.subr.mxu0 0.0
    %2029 = vmatpush1.msra.mxu0 0.0
    %2030 = vmatprep.subr.mxu0 0.0
    %2031 = vmatpush1.msra.mxu0 0.0
    %2032 = vmatprep.subr.mxu0 0.0
    %2033 = vmatpush1.msra.mxu0 0.0
    %2034 = vmatprep.subr.mxu0 0.0
    %2035 = vmatpush1.msra.mxu0 0.0
    %2036 = vmatprep.subr.mxu0 0.0
    %2037 = vmatpush1.msra.mxu0 0.0
    %2038 = vmatprep.subr.mxu0 0.0
    %2039 = vmatpush1.msra.mxu0 0.0
    %2040 = vmatprep.subr.mxu0 0.0
    %2041 = vmatpush1.msra.mxu0 0.0
    %2042 = vmatprep.subr.mxu0 0.0
    %2043 = vmatpush1.msra.mxu0 0.0
    %2044 = vmatprep.subr.mxu0 0.0
    %2045 = vmatpush1.msra.mxu0 0.0
    %2046 = vmatprep.subr.mxu0 0.0
    %2047 = vmatpush1.msra.mxu0 0.0
    %2048 = vmatprep.subr.mxu0 0.0
    %2049 = vmatpush1.msra.mxu0 0.0
    %2050 = vmatprep.mubr.f32.mxu0 0.0
    %2051 = vmatmul.mubr.f32.gmra.mrb[0].mxu0 %v1984
    %v2052 = vpop.f32.mrb[0].mxu0
    %v2053 = vadd.f32 %v1980, %v2052
    %v2054 = vpop.f32.mrb[0].mxu0
    %2055 = vdwg.mxu0
    %v2056 = vadd.f32 %v2053, %v278
    %v2057 = vmax.f32 %v2056, 0.0
    %v2059 = vsel %vm127, %v1910, 0
    %2061 = vmatprep.subr.mxu0 0.0
    %2062 = vmatpush1.msra.mxu0 %v112
    %2063 = vmatprep.subr.mxu0 0.0
    %2064 = vmatpush1.msra.mxu0 %v113
    %2065 = vmatprep.subr.mxu0 0.0
    %2066 = vmatpush1.msra.mxu0 %v114
    %2067 = vmatprep.subr.mxu0 0.0
    %2068 = vmatpush1.msra.mxu0 %v115
    %2069 = vmatprep.subr.mxu0 0.0
    %2070 = vmatpush1.msra.mxu0 %v116
    %2071 = vmatprep.subr.mxu0 0.0
    %2072 = vmatpush1.msra.mxu0 %v117
    %2073 = vmatprep.subr.mxu0 0.0
    %2074 = vmatpush1.msra.mxu0 %v118
    %2075 = vmatprep.subr.mxu0 0.0
    %2076 = vmatpush1.msra.mxu0 %v119
    %2077 = vmatprep.subr.mxu0 0.0
    %2078 = vmatpush1.msra.mxu0 0.0
    %2079 = vmatprep.subr.mxu0 0.0
    %2080 = vmatpush1.msra.mxu0 0.0
    %2081 = vmatprep.subr.mxu0 0.0
    %2082 = vmatpush1.msra.mxu0 0.0
    %2083 = vmatprep.subr.mxu0 0.0
    %2084 = vmatpush1.msra.mxu0 0.0
    %2085 = vmatprep.subr.mxu0 0.0
    %2086 = vmatpush1.msra.mxu0 0.0
    %2087 = vmatprep.subr.mxu0 0.0
    %2088 = vmatpush1.msra.mxu0 0.0
    %2089 = vmatprep.subr.mxu0 0.0
    %2090 = vmatpush1.msra.mxu0 0.0
    %2091 = vmatprep.subr.mxu0 0.0
    %2092 = vmatpush1.msra.mxu0 0.0
    %2093 = vmatprep.subr.mxu0 0.0
    %2094 = vmatpush1.msra.mxu0 0.0
    %2095 = vmatprep.subr.mxu0 0.0
    %2096 = vmatpush1.msra.mxu0 0.0
    %2097 = vmatprep.subr.mxu0 0.0
    %2098 = vmatpush1.msra.mxu0 0.0
    %2099 = vmatprep.subr.mxu0 0.0
    %2100 = vmatpush1.msra.mxu0 0.0
    %2101 = vmatprep.subr.mxu0 0.0
    %2102 = vmatpush1.msra.mxu0 0.0
    %2103 = vmatprep.subr.mxu0 0.0
    %2104 = vmatpush1.msra.mxu0 0.0
    %2105 = vmatprep.subr.mxu0 0.0
    %2106 = vmatpush1.msra.mxu0 0.0
    %2107 = vmatprep.subr.mxu0 0.0
    %2108 = vmatpush1.msra.mxu0 0.0
    %2109 = vmatprep.subr.mxu0 0.0
    %2110 = vmatpush1.msra.mxu0 0.0
    %2111 = vmatprep.subr.mxu0 0.0
    %2112 = vmatpush1.msra.mxu0 0.0
    %2113 = vmatprep.subr.mxu0 0.0
    %2114 = vmatpush1.msra.mxu0 0.0
    %2115 = vmatprep.subr.mxu0 0.0
    %2116 = vmatpush1.msra.mxu0 0.0
    %2117 = vmatprep.subr.mxu0 0.0
    %2118 = vmatpush1.msra.mxu0 0.0
    %2119 = vmatprep.subr.mxu0 0.0
    %2120 = vmatpush1.msra.mxu0 0.0
    %2121 = vmatprep.subr.mxu0 0.0
    %2122 = vmatpush1.msra.mxu0 0.0
    %2123 = vmatprep.subr.mxu0 0.0
    %2124 = vmatpush1.msra.mxu0 0.0
    %2125 = vmatprep.mubr.f32.mxu0 0.0
    %2126 = vmatmul.mubr.f32.gmra.mrb[0].mxu0 %v2059
    %v2127 = vpop.f32.mrb[0].mxu0
    %v2128 = vadd.f32 0.0, %v2127
    %v2129 = vpop.f32.mrb[0].mxu0
    %2130 = vdwg.mxu0
    %v2132 = vsel %vm127, %v2057, 0
    %2134 = vmatprep.subr.mxu0 0.0
    %2135 = vmatpush1.msra.mxu0 %v95
    %2136 = vmatprep.subr.mxu0 0.0
    %2137 = vmatpush1.msra.mxu0 %v96
    %2138 = vmatprep.subr.mxu0 0.0
    %2139 = vmatpush1.msra.mxu0 %v97
    %2140 = vmatprep.subr.mxu0 0.0
    %2141 = vmatpush1.msra.mxu0 %v98
    %2142 = vmatprep.subr.mxu0 0.0
    %2143 = vmatpush1.msra.mxu0 %v99
    %2144 = vmatprep.subr.mxu0 0.0
    %2145 = vmatpush1.msra.mxu0 %v100
    %2146 = vmatprep.subr.mxu0 0.0
    %2147 = vmatpush1.msra.mxu0 %v101
    %2148 = vmatprep.subr.mxu0 0.0
    %2149 = vmatpush1.msra.mxu0 %v102
    %2150 = vmatprep.subr.mxu0 0.0
    %2151 = vmatpush1.msra.mxu0 0.0
    %2152 = vmatprep.subr.mxu0 0.0
    %2153 = vmatpush1.msra.mxu0 0.0
    %2154 = vmatprep.subr.mxu0 0.0
    %2155 = vmatpush1.msra.mxu0 0.0
    %2156 = vmatprep.subr.mxu0 0.0
    %2157 = vmatpush1.msra.mxu0 0.0
    %2158 = vmatprep.subr.mxu0 0.0
    %2159 = vmatpush1.msra.mxu0 0.0
    %2160 = vmatprep.subr.mxu0 0.0
    %2161 = vmatpush1.msra.mxu0 0.0
    %2162 = vmatprep.subr.mxu0 0.0
    %2163 = vmatpush1.msra.mxu0 0.0
    %2164 = vmatprep.subr.mxu0 0.0
    %2165 = vmatpush1.msra.mxu0 0.0
    %2166 = vmatprep.subr.mxu0 0.0
    %2167 = vmatpush1.msra.mxu0 0.0
    %2168 = vmatprep.subr.mxu0 0.0
    %2169 = vmatpush1.msra.mxu0 0.0
    %2170 = vmatprep.subr.mxu0 0.0
    %2171 = vmatpush1.msra.mxu0 0.0
    %2172 = vmatprep.subr.mxu0 0.0
    %2173 = vmatpush1.msra.mxu0 0.0
    %2174 = vmatprep.subr.mxu0 0.0
    %2175 = vmatpush1.msra.mxu0 0.0
    %2176 = vmatprep.subr.mxu0 0.0
    %2177 = vmatpush1.msra.mxu0 0.0
    %2178 = vmatprep.subr.mxu0 0.0
    %2179 = vmatpush1.msra.mxu0 0.0
    %2180 = vmatprep.subr.mxu0 0.0
    %2181 = vmatpush1.msra.mxu0 0.0
    %2182 = vmatprep.subr.mxu0 0.0
    %2183 = vmatpush1.msra.mxu0 0.0
    %2184 = vmatprep.subr.mxu0 0.0
    %2185 = vmatpush1.msra.mxu0 0.0
    %2186 = vmatprep.subr.mxu0 0.0
    %2187 = vmatpush1.msra.mxu0 0.0
    %2188 = vmatprep.subr.mxu0 0.0
    %2189 = vmatpush1.msra.mxu0 0.0
    %2190 = vmatprep.subr.mxu0 0.0
    %2191 = vmatpush1.msra.mxu0 0.0
    %2192 = vmatprep.subr.mxu0 0.0
    %2193 = vmatpush1.msra.mxu0 0.0
    %2194 = vmatprep.subr.mxu0 0.0
    %2195 = vmatpush1.msra.mxu0 0.0
    %2196 = vmatprep.subr.mxu0 0.0
    %2197 = vmatpush1.msra.mxu0 0.0
    %2198 = vmatprep.mubr.f32.mxu0 0.0
    %2199 = vmatmul.mubr.f32.gmra.mrb[0].mxu0 %v2132
    %v2200 = vpop.f32.mrb[0].mxu0
    %v2201 = vadd.f32 %v2128, %v2200
    %v2202 = vpop.f32.mrb[0].mxu0
    %2203 = vdwg.mxu0
    %v2204 = vadd.f32 %v2201, %v432
    %v2205 = vmax.f32 %v2204, 0.0
    %s2206 = scalar_lea.vmem [#allocation2], 14
    %v2207 = vld [vmem:[%s2206] sm:$0x3]
    %2208 = vmatprep.subr.mxu0 0.0
    %2209 = vmatpush1.msra.mxu0 %v103
    %2210 = vmatprep.subr.mxu0 0.0
    %2211 = vmatpush1.msra.mxu0 %v104
    %2212 = vmatprep.subr.mxu0 0.0
    %2213 = vmatpush1.msra.mxu0 %v105
    %2214 = vmatprep.subr.mxu0 0.0
    %2215 = vmatpush1.msra.mxu0 %v106
    %2216 = vmatprep.subr.mxu0 0.0
    %2217 = vmatpush1.msra.mxu0 %v107
    %2218 = vmatprep.subr.mxu0 0.0
    %2219 = vmatpush1.msra.mxu0 %v108
    %2220 = vmatprep.subr.mxu0 0.0
    %2221 = vmatpush1.msra.mxu0 %v109
    %2222 = vmatprep.subr.mxu0 0.0
    %2223 = vmatpush1.msra.mxu0 %v110
    %2224 = vmatprep.subr.mxu0 0.0
    %2225 = vmatpush1.msra.mxu0 0.0
    %2226 = vmatprep.subr.mxu0 0.0
    %2227 = vmatpush1.msra.mxu0 0.0
    %2228 = vmatprep.subr.mxu0 0.0
    %2229 = vmatpush1.msra.mxu0 0.0
    %2230 = vmatprep.subr.mxu0 0.0
    %2231 = vmatpush1.msra.mxu0 0.0
    %2232 = vmatprep.subr.mxu0 0.0
    %2233 = vmatpush1.msra.mxu0 0.0
    %2234 = vmatprep.subr.mxu0 0.0
    %2235 = vmatpush1.msra.mxu0 0.0
    %2236 = vmatprep.subr.mxu0 0.0
    %2237 = vmatpush1.msra.mxu0 0.0
    %2238 = vmatprep.subr.mxu0 0.0
    %2239 = vmatpush1.msra.mxu0 0.0
    %2240 = vmatprep.subr.mxu0 0.0
    %2241 = vmatpush1.msra.mxu0 0.0
    %2242 = vmatprep.subr.mxu0 0.0
    %2243 = vmatpush1.msra.mxu0 0.0
    %2244 = vmatprep.subr.mxu0 0.0
    %2245 = vmatpush1.msra.mxu0 0.0
    %2246 = vmatprep.subr.mxu0 0.0
    %2247 = vmatpush1.msra.mxu0 0.0
    %2248 = vmatprep.subr.mxu0 0.0
    %2249 = vmatpush1.msra.mxu0 0.0
    %2250 = vmatprep.subr.mxu0 0.0
    %2251 = vmatpush1.msra.mxu0 0.0
    %2252 = vmatprep.subr.mxu0 0.0
    %2253 = vmatpush1.msra.mxu0 0.0
    %2254 = vmatprep.subr.mxu0 0.0
    %2255 = vmatpush1.msra.mxu0 0.0
    %2256 = vmatprep.subr.mxu0 0.0
    %2257 = vmatpush1.msra.mxu0 0.0
    %2258 = vmatprep.subr.mxu0 0.0
    %2259 = vmatpush1.msra.mxu0 0.0
    %2260 = vmatprep.subr.mxu0 0.0
    %2261 = vmatpush1.msra.mxu0 0.0
    %2262 = vmatprep.subr.mxu0 0.0
    %2263 = vmatpush1.msra.mxu0 0.0
    %2264 = vmatprep.subr.mxu0 0.0
    %2265 = vmatpush1.msra.mxu0 0.0
    %2266 = vmatprep.subr.mxu0 0.0
    %2267 = vmatpush1.msra.mxu0 0.0
    %2268 = vmatprep.subr.mxu0 0.0
    %2269 = vmatpush1.msra.mxu0 0.0
    %2270 = vmatprep.subr.mxu0 0.0
    %2271 = vmatpush1.msra.mxu0 0.0
    %2272 = vmatprep.mubr.f32.mxu0 0.0
    %2273 = vmatmul.mubr.f32.gmra.mrb[0].mxu0 %v2132
    %v2274 = vpop.f32.mrb[0].mxu0
    %v2275 = vadd.f32 0.0, %v2274
    %v2276 = vpop.f32.mrb[0].mxu0
    %2277 = vdwg.mxu0
    %v2279 = vsel %vm127, %v2207, 0
    %2281 = vmatprep.subr.mxu0 0.0
    %2282 = vmatpush1.msra.mxu0 %v86
    %2283 = vmatprep.subr.mxu0 0.0
    %2284 = vmatpush1.msra.mxu0 %v87
    %2285 = vmatprep.subr.mxu0 0.0
    %2286 = vmatpush1.msra.mxu0 %v88
    %2287 = vmatprep.subr.mxu0 0.0
    %2288 = vmatpush1.msra.mxu0 %v89
    %2289 = vmatprep.subr.mxu0 0.0
    %2290 = vmatpush1.msra.mxu0 %v90
    %2291 = vmatprep.subr.mxu0 0.0
    %2292 = vmatpush1.msra.mxu0 %v91
    %2293 = vmatprep.subr.mxu0 0.0
    %2294 = vmatpush1.msra.mxu0 %v92
    %2295 = vmatprep.subr.mxu0 0.0
    %2296 = vmatpush1.msra.mxu0 %v93
    %2297 = vmatprep.subr.mxu0 0.0
    %2298 = vmatpush1.msra.mxu0 0.0
    %2299 = vmatprep.subr.mxu0 0.0
    %2300 = vmatpush1.msra.mxu0 0.0
    %2301 = vmatprep.subr.mxu0 0.0
    %2302 = vmatpush1.msra.mxu0 0.0
    %2303 = vmatprep.subr.mxu0 0.0
    %2304 = vmatpush1.msra.mxu0 0.0
    %2305 = vmatprep.subr.mxu0 0.0
    %2306 = vmatpush1.msra.mxu0 0.0
    %2307 = vmatprep.subr.mxu0 0.0
    %2308 = vmatpush1.msra.mxu0 0.0
    %2309 = vmatprep.subr.mxu0 0.0
    %2310 = vmatpush1.msra.mxu0 0.0
    %2311 = vmatprep.subr.mxu0 0.0
    %2312 = vmatpush1.msra.mxu0 0.0
    %2313 = vmatprep.subr.mxu0 0.0
    %2314 = vmatpush1.msra.mxu0 0.0
    %2315 = vmatprep.subr.mxu0 0.0
    %2316 = vmatpush1.msra.mxu0 0.0
    %2317 = vmatprep.subr.mxu0 0.0
    %2318 = vmatpush1.msra.mxu0 0.0
    %2319 = vmatprep.subr.mxu0 0.0
    %2320 = vmatpush1.msra.mxu0 0.0
    %2321 = vmatprep.subr.mxu0 0.0
    %2322 = vmatpush1.msra.mxu0 0.0
    %2323 = vmatprep.subr.mxu0 0.0
    %2324 = vmatpush1.msra.mxu0 0.0
    %2325 = vmatprep.subr.mxu0 0.0
    %2326 = vmatpush1.msra.mxu0 0.0
    %2327 = vmatprep.subr.mxu0 0.0
    %2328 = vmatpush1.msra.mxu0 0.0
    %2329 = vmatprep.subr.mxu0 0.0
    %2330 = vmatpush1.msra.mxu0 0.0
    %2331 = vmatprep.subr.mxu0 0.0
    %2332 = vmatpush1.msra.mxu0 0.0
    %2333 = vmatprep.subr.mxu0 0.0
    %2334 = vmatpush1.msra.mxu0 0.0
    %2335 = vmatprep.subr.mxu0 0.0
    %2336 = vmatpush1.msra.mxu0 0.0
    %2337 = vmatprep.subr.mxu0 0.0
    %2338 = vmatpush1.msra.mxu0 0.0
    %2339 = vmatprep.subr.mxu0 0.0
    %2340 = vmatpush1.msra.mxu0 0.0
    %2341 = vmatprep.subr.mxu0 0.0
    %2342 = vmatpush1.msra.mxu0 0.0
    %2343 = vmatprep.subr.mxu0 0.0
    %2344 = vmatpush1.msra.mxu0 0.0
    %2345 = vmatprep.mubr.f32.mxu0 0.0
    %2346 = vmatmul.mubr.f32.gmra.mrb[0].mxu0 %v2279
    %v2347 = vpop.f32.mrb[0].mxu0
    %v2348 = vadd.f32 %v2275, %v2347
    %v2349 = vpop.f32.mrb[0].mxu0
    %2350 = vdwg.mxu0
    %v2351 = vadd.f32 %v2348, %v278
    %v2352 = vmax.f32 %v2351, 0.0
    %v2354 = vsel %vm127, %v2205, 0
    %2356 = vmatprep.subr.mxu0 0.0
    %2357 = vmatpush1.msra.mxu0 %v112
    %2358 = vmatprep.subr.mxu0 0.0
    %2359 = vmatpush1.msra.mxu0 %v113
    %2360 = vmatprep.subr.mxu0 0.0
    %2361 = vmatpush1.msra.mxu0 %v114
    %2362 = vmatprep.subr.mxu0 0.0
    %2363 = vmatpush1.msra.mxu0 %v115
    %2364 = vmatprep.subr.mxu0 0.0
    %2365 = vmatpush1.msra.mxu0 %v116
    %2366 = vmatprep.subr.mxu0 0.0
    %2367 = vmatpush1.msra.mxu0 %v117
    %2368 = vmatprep.subr.mxu0 0.0
    %2369 = vmatpush1.msra.mxu0 %v118
    %2370 = vmatprep.subr.mxu0 0.0
    %2371 = vmatpush1.msra.mxu0 %v119
    %2372 = vmatprep.subr.mxu0 0.0
    %2373 = vmatpush1.msra.mxu0 0.0
    %2374 = vmatprep.subr.mxu0 0.0
    %2375 = vmatpush1.msra.mxu0 0.0
    %2376 = vmatprep.subr.mxu0 0.0
    %2377 = vmatpush1.msra.mxu0 0.0
    %2378 = vmatprep.subr.mxu0 0.0
    %2379 = vmatpush1.msra.mxu0 0.0
    %2380 = vmatprep.subr.mxu0 0.0
    %2381 = vmatpush1.msra.mxu0 0.0
    %2382 = vmatprep.subr.mxu0 0.0
    %2383 = vmatpush1.msra.mxu0 0.0
    %2384 = vmatprep.subr.mxu0 0.0
    %2385 = vmatpush1.msra.mxu0 0.0
    %2386 = vmatprep.subr.mxu0 0.0
    %2387 = vmatpush1.msra.mxu0 0.0
    %2388 = vmatprep.subr.mxu0 0.0
    %2389 = vmatpush1.msra.mxu0 0.0
    %2390 = vmatprep.subr.mxu0 0.0
    %2391 = vmatpush1.msra.mxu0 0.0
    %2392 = vmatprep.subr.mxu0 0.0
    %2393 = vmatpush1.msra.mxu0 0.0
    %2394 = vmatprep.subr.mxu0 0.0
    %2395 = vmatpush1.msra.mxu0 0.0
    %2396 = vmatprep.subr.mxu0 0.0
    %2397 = vmatpush1.msra.mxu0 0.0
    %2398 = vmatprep.subr.mxu0 0.0
    %2399 = vmatpush1.msra.mxu0 0.0
    %2400 = vmatprep.subr.mxu0 0.0
    %2401 = vmatpush1.msra.mxu0 0.0
    %2402 = vmatprep.subr.mxu0 0.0
    %2403 = vmatpush1.msra.mxu0 0.0
    %2404 = vmatprep.subr.mxu0 0.0
    %2405 = vmatpush1.msra.mxu0 0.0
    %2406 = vmatprep.subr.mxu0 0.0
    %2407 = vmatpush1.msra.mxu0 0.0
    %2408 = vmatprep.subr.mxu0 0.0
    %2409 = vmatpush1.msra.mxu0 0.0
    %2410 = vmatprep.subr.mxu0 0.0
    %2411 = vmatpush1.msra.mxu0 0.0
    %2412 = vmatprep.subr.mxu0 0.0
    %2413 = vmatpush1.msra.mxu0 0.0
    %2414 = vmatprep.subr.mxu0 0.0
    %2415 = vmatpush1.msra.mxu0 0.0
    %2416 = vmatprep.subr.mxu0 0.0
    %2417 = vmatpush1.msra.mxu0 0.0
    %2418 = vmatprep.subr.mxu0 0.0
    %2419 = vmatpush1.msra.mxu0 0.0
    %2420 = vmatprep.mubr.f32.mxu0 0.0
    %2421 = vmatmul.mubr.f32.gmra.mrb[0].mxu0 %v2354
    %v2422 = vpop.f32.mrb[0].mxu0
    %v2423 = vadd.f32 0.0, %v2422
    %v2424 = vpop.f32.mrb[0].mxu0
    %2425 = vdwg.mxu0
    %v2427 = vsel %vm127, %v2352, 0
    %2429 = vmatprep.subr.mxu0 0.0
    %2430 = vmatpush1.msra.mxu0 %v95
    %2431 = vmatprep.subr.mxu0 0.0
    %2432 = vmatpush1.msra.mxu0 %v96
    %2433 = vmatprep.subr.mxu0 0.0
    %2434 = vmatpush1.msra.mxu0 %v97
    %2435 = vmatprep.subr.mxu0 0.0
    %2436 = vmatpush1.msra.mxu0 %v98
    %2437 = vmatprep.subr.mxu0 0.0
    %2438 = vmatpush1.msra.mxu0 %v99
    %2439 = vmatprep.subr.mxu0 0.0
    %2440 = vmatpush1.msra.mxu0 %v100
    %2441 = vmatprep.subr.mxu0 0.0
    %2442 = vmatpush1.msra.mxu0 %v101
    %2443 = vmatprep.subr.mxu0 0.0
    %2444 = vmatpush1.msra.mxu0 %v102
    %2445 = vmatprep.subr.mxu0 0.0
    %2446 = vmatpush1.msra.mxu0 0.0
    %2447 = vmatprep.subr.mxu0 0.0
    %2448 = vmatpush1.msra.mxu0 0.0
    %2449 = vmatprep.subr.mxu0 0.0
    %2450 = vmatpush1.msra.mxu0 0.0
    %2451 = vmatprep.subr.mxu0 0.0
    %2452 = vmatpush1.msra.mxu0 0.0
    %2453 = vmatprep.subr.mxu0 0.0
    %2454 = vmatpush1.msra.mxu0 0.0
    %2455 = vmatprep.subr.mxu0 0.0
    %2456 = vmatpush1.msra.mxu0 0.0
    %2457 = vmatprep.subr.mxu0 0.0
    %2458 = vmatpush1.msra.mxu0 0.0
    %2459 = vmatprep.subr.mxu0 0.0
    %2460 = vmatpush1.msra.mxu0 0.0
    %2461 = vmatprep.subr.mxu0 0.0
    %2462 = vmatpush1.msra.mxu0 0.0
    %2463 = vmatprep.subr.mxu0 0.0
    %2464 = vmatpush1.msra.mxu0 0.0
    %2465 = vmatprep.subr.mxu0 0.0
    %2466 = vmatpush1.msra.mxu0 0.0
    %2467 = vmatprep.subr.mxu0 0.0
    %2468 = vmatpush1.msra.mxu0 0.0
    %2469 = vmatprep.subr.mxu0 0.0
    %2470 = vmatpush1.msra.mxu0 0.0
    %2471 = vmatprep.subr.mxu0 0.0
    %2472 = vmatpush1.msra.mxu0 0.0
    %2473 = vmatprep.subr.mxu0 0.0
    %2474 = vmatpush1.msra.mxu0 0.0
    %2475 = vmatprep.subr.mxu0 0.0
    %2476 = vmatpush1.msra.mxu0 0.0
    %2477 = vmatprep.subr.mxu0 0.0
    %2478 = vmatpush1.msra.mxu0 0.0
    %2479 = vmatprep.subr.mxu0 0.0
    %2480 = vmatpush1.msra.mxu0 0.0
    %2481 = vmatprep.subr.mxu0 0.0
    %2482 = vmatpush1.msra.mxu0 0.0
    %2483 = vmatprep.subr.mxu0 0.0
    %2484 = vmatpush1.msra.mxu0 0.0
    %2485 = vmatprep.subr.mxu0 0.0
    %2486 = vmatpush1.msra.mxu0 0.0
    %2487 = vmatprep.subr.mxu0 0.0
    %2488 = vmatpush1.msra.mxu0 0.0
    %2489 = vmatprep.subr.mxu0 0.0
    %2490 = vmatpush1.msra.mxu0 0.0
    %2491 = vmatprep.subr.mxu0 0.0
    %2492 = vmatpush1.msra.mxu0 0.0
    %2493 = vmatprep.mubr.f32.mxu0 0.0
    %2494 = vmatmul.mubr.f32.gmra.mrb[0].mxu0 %v2427
    %v2495 = vpop.f32.mrb[0].mxu0
    %v2496 = vadd.f32 %v2423, %v2495
    %v2497 = vpop.f32.mrb[0].mxu0
    %2498 = vdwg.mxu0
    %v2499 = vadd.f32 %v2496, %v432
    %v2500 = vmax.f32 %v2499, 0.0
    %vm2501 = vcmask 517120
    %v2502 = vsel %vm2501, %v2500, 0.0
    %v2503 = vrot.slane %v2502, 4
    %v2504 = vadd.f32 %v2502, %v2503
    %v2505 = vrot.slane %v2504, 2
    %v2506 = vadd.f32 %v2504, %v2505
    %v2507 = vrot.slane %v2506, 1
    %v2508 = vadd.f32 %v2506, %v2507
    %v2509 = vrcp.pop 2.0
    %v2510 = vmul.f32 %v2508, %v2509
    %v2511 = vsub.f32 %v2500, %v2510
    %v2512 = vmul.f32 %v2511, %v2511
    %v2513 = vsel %vm2501, %v2512, 0.0
    %v2514 = vrot.slane %v2513, 4
    %v2515 = vadd.f32 %v2513, %v2514
    %v2516 = vrot.slane %v2515, 2
    %v2517 = vadd.f32 %v2515, %v2516
    %v2518 = vrot.slane %v2517, 1
    %v2519 = vadd.f32 %v2517, %v2518
    %v2520 = vmul.f32 %v2519, %v2509
    %v2521 = vadd.f32 %v2520, 1e-05
    %v2522 = vrsqrt.pop %v2521
    %v2523 = vmul.f32 %v2511, %v2522
    %v2524 = vld [vmem:[%s5] sm:$0x1]
    %v2526 = vlaneseq
    %v2527 = vshrl.u32 %v2526, 7
    %v2528 = vsub.s32 0, %v2527
    %v2529 = vrot.slane %v2524, %v2528
    %v2531 = vmul.f32 %v2523, %v2529
    %v2532 = vld [vmem:[%s6] sm:$0x1]
    %v2534 = vlaneseq
    %v2535 = vshrl.u32 %v2534, 7
    %v2536 = vsub.s32 0, %v2535
    %v2537 = vrot.slane %v2532, %v2536
    %v2539 = vadd.f32 %v2531, %v2537
    %v2540 = vmax.f32 %v2539, 0.0
    %v2541 = vld [vmem:[#allocation7] sm:$0xff]
    %v2542 = vld [vmem:[#allocation7 + $0x8] sm:$0xff]
    %v2543 = vld [vmem:[#allocation7 + $0x10] sm:$0xff]
    %v2544 = vld [vmem:[#allocation7 + $0x18] sm:$0xff]
    %v2545 = vld [vmem:[#allocation7 + $0x20] sm:$0xff]
    %v2546 = vld [vmem:[#allocation7 + $0x28] sm:$0xff]
    %v2547 = vld [vmem:[#allocation7 + $0x30] sm:$0xff]
    %v2548 = vld [vmem:[#allocation7 + $0x38] sm:$0xff]
    %v2549 = vld [vmem:[%s8] sm:$0x1]
    %v2551 = vlaneseq
    %v2552 = vshrl.u32 %v2551, 7
    %v2553 = vsub.s32 0, %v2552
    %v2554 = vrot.slane %v2549, %v2553
    %v2557 = vsel %vm127, %v2540, 0
    %2559 = vmatprep.subr.mxu0 0.0
    %2560 = vmatpush1.msra.mxu0 %v2541
    %2561 = vmatprep.subr.mxu0 0.0
    %2562 = vmatpush1.msra.mxu0 %v2542
    %2563 = vmatprep.subr.mxu0 0.0
    %2564 = vmatpush1.msra.mxu0 %v2543
    %2565 = vmatprep.subr.mxu0 0.0
    %2566 = vmatpush1.msra.mxu0 %v2544
    %2567 = vmatprep.subr.mxu0 0.0
    %2568 = vmatpush1.msra.mxu0 %v2545
    %2569 = vmatprep.subr.mxu0 0.0
    %2570 = vmatpush1.msra.mxu0 %v2546
    %2571 = vmatprep.subr.mxu0 0.0
    %2572 = vmatpush1.msra.mxu0 %v2547
    %2573 = vmatprep.subr.mxu0 0.0
    %2574 = vmatpush1.msra.mxu0 %v2548
    %2575 = vmatprep.subr.mxu0 0.0
    %2576 = vmatpush1.msra.mxu0 0.0
    %2577 = vmatprep.subr.mxu0 0.0
    %2578 = vmatpush1.msra.mxu0 0.0
    %2579 = vmatprep.subr.mxu0 0.0
    %2580 = vmatpush1.msra.mxu0 0.0
    %2581 = vmatprep.subr.mxu0 0.0
    %2582 = vmatpush1.msra.mxu0 0.0
    %2583 = vmatprep.subr.mxu0 0.0
    %2584 = vmatpush1.msra.mxu0 0.0
    %2585 = vmatprep.subr.mxu0 0.0
    %2586 = vmatpush1.msra.mxu0 0.0
    %2587 = vmatprep.subr.mxu0 0.0
    %2588 = vmatpush1.msra.mxu0 0.0
    %2589 = vmatprep.subr.mxu0 0.0
    %2590 = vmatpush1.msra.mxu0 0.0
    %2591 = vmatprep.subr.mxu0 0.0
    %2592 = vmatpush1.msra.mxu0 0.0
    %2593 = vmatprep.subr.mxu0 0.0
    %2594 = vmatpush1.msra.mxu0 0.0
    %2595 = vmatprep.subr.mxu0 0.0
    %2596 = vmatpush1.msra.mxu0 0.0
    %2597 = vmatprep.subr.mxu0 0.0
    %2598 = vmatpush1.msra.mxu0 0.0
    %2599 = vmatprep.subr.mxu0 0.0
    %2600 = vmatpush1.msra.mxu0 0.0
    %2601 = vmatprep.subr.mxu0 0.0
    %2602 = vmatpush1.msra.mxu0 0.0
    %2603 = vmatprep.subr.mxu0 0.0
    %2604 = vmatpush1.msra.mxu0 0.0
    %2605 = vmatprep.subr.mxu0 0.0
    %2606 = vmatpush1.msra.mxu0 0.0
    %2607 = vmatprep.subr.mxu0 0.0
    %2608 = vmatpush1.msra.mxu0 0.0
    %2609 = vmatprep.subr.mxu0 0.0
    %2610 = vmatpush1.msra.mxu0 0.0
    %2611 = vmatprep.subr.mxu0 0.0
    %2612 = vmatpush1.msra.mxu0 0.0
    %2613 = vmatprep.subr.mxu0 0.0
    %2614 = vmatpush1.msra.mxu0 0.0
    %2615 = vmatprep.subr.mxu0 0.0
    %2616 = vmatpush1.msra.mxu0 0.0
    %2617 = vmatprep.subr.mxu0 0.0
    %2618 = vmatpush1.msra.mxu0 0.0
    %2619 = vmatprep.subr.mxu0 0.0
    %2620 = vmatpush1.msra.mxu0 0.0
    %2621 = vmatprep.subr.mxu0 0.0
    %2622 = vmatpush1.msra.mxu0 0.0
    %2623 = vmatprep.mubr.f32.mxu0 0.0
    %2624 = vmatmul.mubr.f32.gmra.mrb[0].mxu0 %v2557
    %v2625 = vpop.f32.mrb[0].mxu0
    %v2626 = vadd.f32 %v2554, %v2625
    %v2627 = vpop.f32.mrb[0].mxu0
    %2628 = vdwg.mxu0
    %vm2629 = vcmask 1041408
    %v2630 = vsel %vm2629, %v2626, 0.0
    %v2631 = vrot.slane %v2630, 4
    %v2632 = vadd.f32 %v2630, %v2631
    %v2633 = vrot.slane %v2632, 2
    %v2634 = vadd.f32 %v2632, %v2633
    %v2635 = vrot.slane %v2634, 1
    %v2636 = vadd.f32 %v2634, %v2635
    %v2637 = vmul.f32 %v2636, %v2509
    %v2638 = vsub.f32 %v2626, %v2637
    %v2639 = vmul.f32 %v2638, %v2638
    %v2640 = vsel %vm2629, %v2639, 0.0
    %v2641 = vrot.slane %v2640, 4
    %v2642 = vadd.f32 %v2640, %v2641
    %v2643 = vrot.slane %v2642, 2
    %v2644 = vadd.f32 %v2642, %v2643
    %v2645 = vrot.slane %v2644, 1
    %v2646 = vadd.f32 %v2644, %v2645
    %v2647 = vmul.f32 %v2646, %v2509
    %v2648 = vadd.f32 %v2647, 1e-05
    %v2649 = vrsqrt.pop %v2648
    %v2650 = vmul.f32 %v2638, %v2649
    %v2651 = vld [vmem:[%s9] sm:$0x1]
    %v2653 = vlaneseq
    %v2654 = vshrl.u32 %v2653, 7
    %v2655 = vsub.s32 0, %v2654
    %v2656 = vrot.slane %v2651, %v2655
    %v2658 = vmul.f32 %v2650, %v2656
    %v2659 = vld [vmem:[%s10] sm:$0x1]
    %v2661 = vlaneseq
    %v2662 = vshrl.u32 %v2661, 7
    %v2663 = vsub.s32 0, %v2662
    %v2664 = vrot.slane %v2659, %v2663
    %v2666 = vadd.f32 %v2658, %v2664
    %v2667 = vmax.f32 %v2666, 0.0
    %v2668 = vld [vmem:[%s11] sm:$0xff]
    %v2669 = vld [vmem:[%s11 + $0x8] sm:$0xff]
    %v2670 = vld [vmem:[%s11 + $0x10] sm:$0xff]
    %v2671 = vld [vmem:[%s11 + $0x18] sm:$0xff]
    %v2672 = vld [vmem:[%s11 + $0x20] sm:$0xff]
    %v2673 = vld [vmem:[%s11 + $0x28] sm:$0xff]
    %v2674 = vld [vmem:[%s11 + $0x30] sm:$0xff]
    %v2675 = vld [vmem:[%s11 + $0x38] sm:$0xff]
    %v2676 = vld [vmem:[%s11 + $0x40] sm:$0xff]
    %v2677 = vld [vmem:[%s11 + $0x48] sm:$0xff]
    %v2678 = vld [vmem:[%s11 + $0x50] sm:$0xff]
    %v2679 = vld [vmem:[%s11 + $0x58] sm:$0xff]
    %v2680 = vld [vmem:[%s11 + $0x60] sm:$0xff]
    %v2681 = vld [vmem:[%s11 + $0x68] sm:$0xff]
    %v2682 = vld [vmem:[%s11 + $0x70] sm:$0xff]
    %v2683 = vld [vmem:[%s11 + $0x78] sm:$0xff]
    %v2684 = vld [vmem:[%s12] sm:$0x1]
    %v2686 = vlaneseq
    %v2687 = vshrl.u32 %v2686, 7
    %v2688 = vsub.s32 0, %v2687
    %v2689 = vrot.slane %v2684, %v2688
    %2691 = vmatprep.subr.mxu0 0.0
    %2692 = vmatpush1.msra.mxu0 %v2668
    %2693 = vmatprep.subr.mxu0 0.0
    %2694 = vmatpush1.msra.mxu0 %v2669
    %2695 = vmatprep.subr.mxu0 0.0
    %2696 = vmatpush1.msra.mxu0 %v2670
    %2697 = vmatprep.subr.mxu0 0.0
    %2698 = vmatpush1.msra.mxu0 %v2671
    %2699 = vmatprep.subr.mxu0 0.0
    %2700 = vmatpush1.msra.mxu0 %v2672
    %2701 = vmatprep.subr.mxu0 0.0
    %2702 = vmatpush1.msra.mxu0 %v2673
    %2703 = vmatprep.subr.mxu0 0.0
    %2704 = vmatpush1.msra.mxu0 %v2674
    %2705 = vmatprep.subr.mxu0 0.0
    %2706 = vmatpush1.msra.mxu0 %v2675
    %2707 = vmatprep.subr.mxu0 0.0
    %2708 = vmatpush1.msra.mxu0 %v2676
    %2709 = vmatprep.subr.mxu0 0.0
    %2710 = vmatpush1.msra.mxu0 %v2677
    %2711 = vmatprep.subr.mxu0 0.0
    %2712 = vmatpush1.msra.mxu0 %v2678
    %2713 = vmatprep.subr.mxu0 0.0
    %2714 = vmatpush1.msra.mxu0 %v2679
    %2715 = vmatprep.subr.mxu0 0.0
    %2716 = vmatpush1.msra.mxu0 %v2680
    %2717 = vmatprep.subr.mxu0 0.0
    %2718 = vmatpush1.msra.mxu0 %v2681
    %2719 = vmatprep.subr.mxu0 0.0
    %2720 = vmatpush1.msra.mxu0 %v2682
    %2721 = vmatprep.subr.mxu0 0.0
    %2722 = vmatpush1.msra.mxu0 %v2683
    %2723 = vmatprep.subr.mxu0 0.0
    %2724 = vmatpush1.msra.mxu0 0.0
    %2725 = vmatprep.subr.mxu0 0.0
    %2726 = vmatpush1.msra.mxu0 0.0
    %2727 = vmatprep.subr.mxu0 0.0
    %2728 = vmatpush1.msra.mxu0 0.0
    %2729 = vmatprep.subr.mxu0 0.0
    %2730 = vmatpush1.msra.mxu0 0.0
    %2731 = vmatprep.subr.mxu0 0.0
    %2732 = vmatpush1.msra.mxu0 0.0
    %2733 = vmatprep.subr.mxu0 0.0
    %2734 = vmatpush1.msra.mxu0 0.0
    %2735 = vmatprep.subr.mxu0 0.0
    %2736 = vmatpush1.msra.mxu0 0.0
    %2737 = vmatprep.subr.mxu0 0.0
    %2738 = vmatpush1.msra.mxu0 0.0
    %2739 = vmatprep.subr.mxu0 0.0
    %2740 = vmatpush1.msra.mxu0 0.0
    %2741 = vmatprep.subr.mxu0 0.0
    %2742 = vmatpush1.msra.mxu0 0.0
    %2743 = vmatprep.subr.mxu0 0.0
    %2744 = vmatpush1.msra.mxu0 0.0
    %2745 = vmatprep.subr.mxu0 0.0
    %2746 = vmatpush1.msra.mxu0 0.0
    %2747 = vmatprep.subr.mxu0 0.0
    %2748 = vmatpush1.msra.mxu0 0.0
    %2749 = vmatprep.subr.mxu0 0.0
    %2750 = vmatpush1.msra.mxu0 0.0
    %2751 = vmatprep.subr.mxu0 0.0
    %2752 = vmatpush1.msra.mxu0 0.0
    %2753 = vmatprep.subr.mxu0 0.0
    %2754 = vmatpush1.msra.mxu0 0.0
    %2755 = vmatprep.mubr.f32.mxu0 0.0
    %2756 = vmatmul.mubr.f32.gmra.mrb[0].mxu0 %v2667
    %v2757 = vpop.f32.mrb[0].mxu0
    %v2758 = vadd.f32 %v2689, %v2757
    %v2759 = vpop.f32.mrb[0].mxu0
    %2760 = vdwg.mxu0
    %v2761 = vsub.f32 0.0, %v2758
    %v2762 = vmul.f32 %v2761, 1.442695
    %v2763 = vpow.pop %v2762
    %v2764 = vadd.f32 %v2763, 1.0
    %v2765 = vrcp.pop %v2764
    %vm2766 = vcmask 58368
    %2767 = vst.msk [vmem:[#allocation8] sm:$0x3] %vm2766, %v2765
    // Predicated region
    $region66: #{tpu_custom_call.1} parent=1 // pred_check
      _
    $region67: #{tpu_custom_call.1} parent=1 // pred_check_branch
      %2769 = sbr.rel (0) target = $region69
    $region68: #{tpu_custom_call.1} parent=1 // pred_region
      %s2771 = ssub.s32 32, 32
      %2772 = vsyncadd [#allocation4], %s2771
      %s2774 = sshll.u32 [#allocation8], 4
      %s2775 = int_to_ptr.vmem [resolvable:$true] %s2774
      %2777 = dma.vmem_to_hbm [thread:$0]  %s2775, 32, %s13, [#allocation4]
    $region69: #{tpu_custom_call.1} parent=1 // pred_fallthru
      _
    // Predicated region
    $region70: #{tpu_custom_call.1} parent=1 // pred_check
      _
    $region71: #{tpu_custom_call.1} parent=1 // pred_check_branch
      %2779 = sbr.rel (0) target = $region73
    $region72: #{tpu_custom_call.1} parent=1 // pred_region
      %2780 = dma.done [#allocation4], 32
    $region73: #{tpu_custom_call.1} parent=1 // pred_fallthru
      _
    %2781 = vsyncpa [#allocation3], 1
    %2782 = vsyncpa [#allocation6], 1
    %2783 = vsyncpa [#allocation4], 1

</llo_original>
